<compile_context>
chip_gen: v7x
topology: tpu7x:2x2x1
jax: 0.10.0
libtpu: 0.0.40
codegen_flags: <defaults>
</compile_context>

<pallas_src>
import jax
import jax.numpy as jnp
from jax.experimental import pallas as pl
from jax.experimental.pallas import tpu as pltpu

# Logical (PyTorch module) sizes.
INPUT_SIZE = 1000
HIDDEN = 400
LATENT = 20

# Lane/MXU-aligned padded sizes used inside the kernel.
IN_PAD = 1024   # 1000 -> 8 * 128
HID_PAD = 512   # 400  -> 4 * 128
LAT_PAD = 128   # 20   -> 1 * 128   (fused head width = 2 * LAT_PAD = 256)


def _vae_kernel(x_ref, eps_ref,
                w1_ref, b1_ref,
                wh_ref, bh_ref,
                w3_ref, b3_ref,
                w4_ref, b4_ref,
                sample_ref, mulv_ref):
    # ---- encode ----
    x = x_ref[...]                                                    # (TB, 1024) f32
    h1 = jnp.dot(x.astype(jnp.bfloat16), w1_ref[...],
                 preferred_element_type=jnp.float32) + b1_ref[...]
    h1 = jnp.maximum(h1, 0.0)                                         # (TB, 512)

    # Fused mu/logvar head: one lane-dense (TB, 256) matmul.
    head = jnp.dot(h1, wh_ref[...],
                   preferred_element_type=jnp.float32) + bh_ref[...]  # (TB, 256)
    mulv_ref[...] = head                                              # packed output

    mu = head[:, :LAT_PAD]                                            # (TB, 128)
    logvar = head[:, LAT_PAD:]                                        # (TB, 128)

    # ---- reparameterize ----
    # Padded lanes: mu = 0, logvar = 0 (std = 1), eps = 0  ->  z = 0 there.
    z = mu + eps_ref[...] * jnp.exp(0.5 * logvar)                     # (TB, 128)

    # ---- decode ----
    h3 = jnp.dot(z, w3_ref[...],
                 preferred_element_type=jnp.float32) + b3_ref[...]
    h3 = jnp.maximum(h3, 0.0)                                         # (TB, 512)

    logits = jnp.dot(h3.astype(jnp.bfloat16), w4_ref[...],
                     preferred_element_type=jnp.float32) + b4_ref[...]
    # sigmoid: exp on EUP, approx reciprocal on EUP -> off the VALU slots.
    sample_ref[...] = pl.reciprocal(1.0 + jnp.exp(-logits), approx=True)


def init_params(key):
    """Deterministic PyTorch-style Linear init: U(-1/sqrt(fan_in), +1/sqrt(fan_in)).
    Weights stored transposed as (in_features, out_features), biases as (1, out)."""
    def linear(k, fan_in, fan_out):
        kw, kb = jax.random.split(k)
        bound = 1.0 / jnp.sqrt(fan_in)
        w = jax.random.uniform(kw, (fan_in, fan_out), jnp.float32, -bound, bound)
        b = jax.random.uniform(kb, (1, fan_out), jnp.float32, -bound, bound)
        return w, b

    k1, k21, k22, k3, k4 = jax.random.split(key, 5)
    w1, b1 = linear(k1, INPUT_SIZE, HIDDEN)
    w21, b21 = linear(k21, HIDDEN, LATENT)
    w22, b22 = linear(k22, HIDDEN, LATENT)
    w3, b3 = linear(k3, LATENT, HIDDEN)
    w4, b4 = linear(k4, HIDDEN, INPUT_SIZE)
    return dict(w1=w1, b1=b1, w21=w21, b21=b21, w22=w22, b22=b22,
                w3=w3, b3=b3, w4=w4, b4=b4)


def pack_params(raw):
    """Pad to lane-aligned shapes, fuse the mu/logvar heads, and store the two
    large weights in bf16 (the HBM-traffic-dominant tensors at small batch)."""
    w1 = jnp.zeros((IN_PAD, HID_PAD), jnp.float32).at[:INPUT_SIZE, :HIDDEN].set(raw["w1"])
    b1 = jnp.zeros((1, HID_PAD), jnp.float32).at[:, :HIDDEN].set(raw["b1"])

    wh = jnp.zeros((HID_PAD, 2 * LAT_PAD), jnp.float32)
    wh = wh.at[:HIDDEN, :LATENT].set(raw["w21"])
    wh = wh.at[:HIDDEN, LAT_PAD:LAT_PAD + LATENT].set(raw["w22"])
    bh = jnp.zeros((1, 2 * LAT_PAD), jnp.float32)
    bh = bh.at[:, :LATENT].set(raw["b21"])
    bh = bh.at[:, LAT_PAD:LAT_PAD + LATENT].set(raw["b22"])

    w3 = jnp.zeros((LAT_PAD, HID_PAD), jnp.float32).at[:LATENT, :HIDDEN].set(raw["w3"])
    b3 = jnp.zeros((1, HID_PAD), jnp.float32).at[:, :HIDDEN].set(raw["b3"])

    w4 = jnp.zeros((HID_PAD, IN_PAD), jnp.float32).at[:HIDDEN, :INPUT_SIZE].set(raw["w4"])
    b4 = jnp.zeros((1, IN_PAD), jnp.float32).at[:, :INPUT_SIZE].set(raw["b4"])

    return dict(w1=w1.astype(jnp.bfloat16), b1=b1,
                wh=wh, bh=bh,
                w3=w3, b3=b3,
                w4=w4.astype(jnp.bfloat16), b4=b4)


def vae_mlp_forward(x, eps, packed, tile_b=None):
    """x: (B, D1, D2) with D1*D2 == 1000.  eps: (B, 20) standard-normal noise."""
    B = x.shape[0]
    x_flat = x.reshape(B, x.shape[1] * x.shape[2]).astype(jnp.float32)
    assert x_flat.shape[1] == INPUT_SIZE

    if tile_b is None:
        # Tiny batches: one sublane-aligned tile. Large batches: match the MXU
        # row tile (128 is safe everywhere; 256 also works well on v6e/v7x).
        tile_b = 8 if B <= 8 else 128
    b_pad = pl.cdiv(B, tile_b) * tile_b

    x_p = jnp.zeros((b_pad, IN_PAD), jnp.float32).at[:B, :INPUT_SIZE].set(x_flat)
    eps_p = jnp.zeros((b_pad, LAT_PAD), jnp.float32).at[:B, :LATENT].set(
        eps.astype(jnp.float32))

    def row_spec(shape):      # batch-tiled arrays
        return pl.BlockSpec(shape, lambda i: (i, 0))

    def resident_spec(shape):  # weights/biases: same block every step -> stay in VMEM
        return pl.BlockSpec(shape, lambda i: (0, 0))

    sample_p, mulv_p = pl.pallas_call(
        _vae_kernel,
        out_shape=(
            jax.ShapeDtypeStruct((b_pad, IN_PAD), jnp.float32),
            jax.ShapeDtypeStruct((b_pad, 2 * LAT_PAD), jnp.float32),
        ),
        grid_spec=pltpu.PrefetchScalarGridSpec(
            num_scalar_prefetch=0,
            grid=(b_pad // tile_b,),
            in_specs=[
                row_spec((tile_b, IN_PAD)),          # x
                row_spec((tile_b, LAT_PAD)),         # eps
                resident_spec((IN_PAD, HID_PAD)),    # w1 (bf16)
                resident_spec((1, HID_PAD)),         # b1
                resident_spec((HID_PAD, 2 * LAT_PAD)),  # fused mu/logvar weight
                resident_spec((1, 2 * LAT_PAD)),        # fused mu/logvar bias
                resident_spec((LAT_PAD, HID_PAD)),   # w3
                resident_spec((1, HID_PAD)),         # b3
                resident_spec((HID_PAD, IN_PAD)),    # w4 (bf16)
                resident_spec((1, IN_PAD)),          # b4
            ],
            out_specs=(
                row_spec((tile_b, IN_PAD)),          # sample
                row_spec((tile_b, 2 * LAT_PAD)),     # packed mu/logvar
            ),
        ),
        compiler_params=pltpu.CompilerParams(
            dimension_semantics=("parallel",),  # batch tiles shard across TCs on v7x
        ),
    )(x_p, eps_p,
      packed["w1"], packed["b1"], packed["wh"], packed["bh"],
      packed["w3"], packed["b3"], packed["w4"], packed["b4"])

    sample = sample_p[:B, :INPUT_SIZE]
    mu = mulv_p[:B, :LATENT]
    logvar = mulv_p[:B, LAT_PAD:LAT_PAD + LATENT]
    return sample, mu, logvar


if __name__ == "__main__":
    key = jax.random.PRNGKey(0)
    k_params, k_x, k_eps = jax.random.split(key, 3)

    raw = init_params(k_params)
    packed = pack_params(raw)

    # Small batch; spatial dims (25, 40) flatten to the module's 1000 features.
    B = 2
    x = jax.random.normal(k_x, (B, 25, 40), jnp.float32)
    eps = jax.random.normal(k_eps, (B, LATENT), jnp.float32)  # torch.randn_like(std)

    sample, mu, logvar = vae_mlp_forward(x, eps, packed)
    jax.block_until_ready((sample, mu, logvar))

    assert sample.shape == (B, INPUT_SIZE)
    assert mu.shape == (B, LATENT) and logvar.shape == (B, LATENT)

    # Pure-JAX f32 reference (kernel uses bf16 storage for w1/w4 -> loose tol).
    xf = x.reshape(B, -1)
    h1 = jnp.maximum(xf @ raw["w1"] + raw["b1"], 0.0)
    mu_r = h1 @ raw["w21"] + raw["b21"]
    lv_r = h1 @ raw["w22"] + raw["b22"]
    z_r = mu_r + eps * jnp.exp(0.5 * lv_r)
    h3 = jnp.maximum(z_r @ raw["w3"] + raw["b3"], 0.0)
    s_r = jax.nn.sigmoid(h3 @ raw["w4"] + raw["b4"])

    assert jnp.allclose(mu, mu_r, atol=2e-2), float(jnp.max(jnp.abs(mu - mu_r)))
    assert jnp.allclose(logvar, lv_r, atol=2e-2), float(jnp.max(jnp.abs(logvar - lv_r)))
    assert jnp.allclose(sample, s_r, atol=2e-2), float(jnp.max(jnp.abs(sample - s_r)))

    print("KERNEL_OK")
</pallas_src>

<mosaic_0001>
module attributes {stable_mosaic.version = 11 : i64} {
  func.func @_vae_kernel(%arg0: i32, %arg1: memref<8x1024xf32, #tpu.memory_space<vmem>>, %arg2: memref<8x128xf32, #tpu.memory_space<vmem>>, %arg3: memref<1024x512xbf16, #tpu.memory_space<vmem>>, %arg4: memref<1x512xf32, #tpu.memory_space<vmem>>, %arg5: memref<512x256xf32, #tpu.memory_space<vmem>>, %arg6: memref<1x256xf32, #tpu.memory_space<vmem>>, %arg7: memref<128x512xf32, #tpu.memory_space<vmem>>, %arg8: memref<1x512xf32, #tpu.memory_space<vmem>>, %arg9: memref<512x1024xbf16, #tpu.memory_space<vmem>>, %arg10: memref<1x1024xf32, #tpu.memory_space<vmem>>, %arg11: memref<8x1024xf32, #tpu.memory_space<vmem>>, %arg12: memref<8x256xf32, #tpu.memory_space<vmem>>) attributes {dimension_semantics = [#tpu.dimension_semantics<parallel>], iteration_bounds = array<i64: 1>, scalar_prefetch = 0 : i64, scratch_operands = 0 : i64, tpu.core_type = #tpu.core_type<tc>, window_params = [{transform_indices = @transform_0, window_bounds = array<i64: 8, 1024>}, {transform_indices = @transform_1, window_bounds = array<i64: 8, 128>}, {pipeline_mode = #tpu.pipeline_mode<synchronous>, transform_indices = @transform_2, window_bounds = array<i64: 1024, 512>}, {pipeline_mode = #tpu.pipeline_mode<synchronous>, transform_indices = @transform_3, window_bounds = array<i64: 1, 512>}, {pipeline_mode = #tpu.pipeline_mode<synchronous>, transform_indices = @transform_4, window_bounds = array<i64: 512, 256>}, {pipeline_mode = #tpu.pipeline_mode<synchronous>, transform_indices = @transform_5, window_bounds = array<i64: 1, 256>}, {pipeline_mode = #tpu.pipeline_mode<synchronous>, transform_indices = @transform_6, window_bounds = array<i64: 128, 512>}, {pipeline_mode = #tpu.pipeline_mode<synchronous>, transform_indices = @transform_7, window_bounds = array<i64: 1, 512>}, {pipeline_mode = #tpu.pipeline_mode<synchronous>, transform_indices = @transform_8, window_bounds = array<i64: 512, 1024>}, {pipeline_mode = #tpu.pipeline_mode<synchronous>, transform_indices = @transform_9, window_bounds = array<i64: 1, 1024>}, {transform_indices = @transform_10, window_bounds = array<i64: 8, 1024>}, {transform_indices = @transform_11, window_bounds = array<i64: 8, 256>}]} {
    %c0 = arith.constant 0 : index
    %c0_0 = arith.constant 0 : index
    %0 = vector.load %arg1[%c0, %c0_0] : memref<8x1024xf32, #tpu.memory_space<vmem>>, vector<8x1024xf32>
    %1 = arith.truncf %0 : vector<8x1024xf32> to vector<8x1024xbf16>
    %c0_1 = arith.constant 0 : index
    %c0_2 = arith.constant 0 : index
    %2 = vector.load %arg3[%c0_1, %c0_2] : memref<1024x512xbf16, #tpu.memory_space<vmem>>, vector<1024x512xbf16>
    %cst = arith.constant dense<0.000000e+00> : vector<8x512xf32>
    %3 = tpu.matmul %1, %2, %cst {dimension_numbers = #tpu.dot_dimension_numbers<[1], [0], [0], [1], [0, 0, 1, 1], [], []>} : vector<8x1024xbf16>, vector<1024x512xbf16>, vector<8x512xf32> -> vector<8x512xf32>
    %c0_3 = arith.constant 0 : index
    %c0_4 = arith.constant 0 : index
    %4 = vector.load %arg4[%c0_3, %c0_4] : memref<1x512xf32, #tpu.memory_space<vmem>>, vector<1x512xf32>
    %5 = vector.broadcast %4 : vector<1x512xf32> to vector<8x512xf32>
    %6 = arith.addf %3, %5 : vector<8x512xf32>
    %cst_5 = arith.constant 0.000000e+00 : f32
    %7 = vector.broadcast %cst_5 : f32 to vector<8x512xf32>
    %8 = arith.maximumf %6, %7 : vector<8x512xf32>
    %c0_6 = arith.constant 0 : index
    %c0_7 = arith.constant 0 : index
    %9 = vector.load %arg5[%c0_6, %c0_7] : memref<512x256xf32, #tpu.memory_space<vmem>>, vector<512x256xf32>
    %cst_8 = arith.constant dense<0.000000e+00> : vector<8x256xf32>
    %10 = tpu.matmul %8, %9, %cst_8 {dimension_numbers = #tpu.dot_dimension_numbers<[1], [0], [0], [1], [0, 0, 1, 1], [], []>} : vector<8x512xf32>, vector<512x256xf32>, vector<8x256xf32> -> vector<8x256xf32>
    %c0_9 = arith.constant 0 : index
    %c0_10 = arith.constant 0 : index
    %11 = vector.load %arg6[%c0_9, %c0_10] : memref<1x256xf32, #tpu.memory_space<vmem>>, vector<1x256xf32>
    %12 = vector.broadcast %11 : vector<1x256xf32> to vector<8x256xf32>
    %13 = arith.addf %10, %12 : vector<8x256xf32>
    %c0_11 = arith.constant 0 : index
    %c0_12 = arith.constant 0 : index
    %14 = vector.load %arg12[%c0_11, %c0_12] : memref<8x256xf32, #tpu.memory_space<vmem>>, vector<8x256xf32>
    tpu.vector_store %arg12[%c0_11, %c0_12], %13 {strides = array<i32>} : memref<8x256xf32, #tpu.memory_space<vmem>>, vector<8x256xf32>,
    %15 = vector.extract_strided_slice %13 {offsets = [0, 0], sizes = [8, 128], strides = [1, 1]} : vector<8x256xf32> to vector<8x128xf32>
    %16 = vector.extract_strided_slice %13 {offsets = [0, 128], sizes = [8, 128], strides = [1, 1]} : vector<8x256xf32> to vector<8x128xf32>
    %c0_13 = arith.constant 0 : index
    %c0_14 = arith.constant 0 : index
    %17 = vector.load %arg2[%c0_13, %c0_14] : memref<8x128xf32, #tpu.memory_space<vmem>>, vector<8x128xf32>
    %cst_15 = arith.constant 5.000000e-01 : f32
    %18 = vector.broadcast %cst_15 : f32 to vector<8x128xf32>
    %19 = arith.mulf %18, %16 : vector<8x128xf32>
    %20 = math.exp %19 : vector<8x128xf32>
    %21 = arith.mulf %17, %20 : vector<8x128xf32>
    %22 = arith.addf %15, %21 : vector<8x128xf32>
    %c0_16 = arith.constant 0 : index
    %c0_17 = arith.constant 0 : index
    %23 = vector.load %arg7[%c0_16, %c0_17] : memref<128x512xf32, #tpu.memory_space<vmem>>, vector<128x512xf32>
    %cst_18 = arith.constant dense<0.000000e+00> : vector<8x512xf32>
    %24 = tpu.matmul %22, %23, %cst_18 {dimension_numbers = #tpu.dot_dimension_numbers<[1], [0], [0], [1], [0, 0, 1, 1], [], []>} : vector<8x128xf32>, vector<128x512xf32>, vector<8x512xf32> -> vector<8x512xf32>
    %c0_19 = arith.constant 0 : index
    %c0_20 = arith.constant 0 : index
    %25 = vector.load %arg8[%c0_19, %c0_20] : memref<1x512xf32, #tpu.memory_space<vmem>>, vector<1x512xf32>
    %26 = vector.broadcast %25 : vector<1x512xf32> to vector<8x512xf32>
    %27 = arith.addf %24, %26 : vector<8x512xf32>
    %cst_21 = arith.constant 0.000000e+00 : f32
    %28 = vector.broadcast %cst_21 : f32 to vector<8x512xf32>
    %29 = arith.maximumf %27, %28 : vector<8x512xf32>
    %30 = arith.truncf %29 : vector<8x512xf32> to vector<8x512xbf16>
    %c0_22 = arith.constant 0 : index
    %c0_23 = arith.constant 0 : index
    %31 = vector.load %arg9[%c0_22, %c0_23] : memref<512x1024xbf16, #tpu.memory_space<vmem>>, vector<512x1024xbf16>
    %cst_24 = arith.constant dense<0.000000e+00> : vector<8x1024xf32>
    %32 = tpu.matmul %30, %31, %cst_24 {dimension_numbers = #tpu.dot_dimension_numbers<[1], [0], [0], [1], [0, 0, 1, 1], [], []>} : vector<8x512xbf16>, vector<512x1024xbf16>, vector<8x1024xf32> -> vector<8x1024xf32>
    %c0_25 = arith.constant 0 : index
    %c0_26 = arith.constant 0 : index
    %33 = vector.load %arg10[%c0_25, %c0_26] : memref<1x1024xf32, #tpu.memory_space<vmem>>, vector<1x1024xf32>
    %34 = vector.broadcast %33 : vector<1x1024xf32> to vector<8x1024xf32>
    %35 = arith.addf %32, %34 : vector<8x1024xf32>
    %cst_27 = arith.constant 0.000000e+00 : f32
    %36 = vector.broadcast %cst_27 : f32 to vector<8x1024xf32>
    %37 = arith.subf %36, %35 : vector<8x1024xf32>
    %38 = math.exp %37 : vector<8x1024xf32>
    %cst_28 = arith.constant 1.000000e+00 : f32
    %39 = vector.broadcast %cst_28 : f32 to vector<8x1024xf32>
    %40 = arith.addf %39, %38 : vector<8x1024xf32>
    %41 = tpu.reciprocal %40 {approx = true} : vector<8x1024xf32> -> vector<8x1024xf32>
    %c0_29 = arith.constant 0 : index
    %c0_30 = arith.constant 0 : index
    %42 = vector.load %arg11[%c0_29, %c0_30] : memref<8x1024xf32, #tpu.memory_space<vmem>>, vector<8x1024xf32>
    tpu.vector_store %arg11[%c0_29, %c0_30], %41 {strides = array<i32>} : memref<8x1024xf32, #tpu.memory_space<vmem>>, vector<8x1024xf32>,
    return
  }
  func.func @transform_0(%arg0: i32) -> (i32, i32) {
    %c0_i32 = arith.constant 0 : i32
    %c0_i32_0 = arith.constant 0 : i32
    return %arg0, %c0_i32 : i32, i32
  }
  func.func @transform_1(%arg0: i32) -> (i32, i32) {
    %c0_i32 = arith.constant 0 : i32
    %c0_i32_0 = arith.constant 0 : i32
    return %arg0, %c0_i32 : i32, i32
  }
  func.func @transform_2(%arg0: i32) -> (i32, i32) {
    %c0_i32 = arith.constant 0 : i32
    %c0_i32_0 = arith.constant 0 : i32
    %c0_i32_1 = arith.constant 0 : i32
    return %c0_i32, %c0_i32_0 : i32, i32
  }
  func.func @transform_3(%arg0: i32) -> (i32, i32) {
    %c0_i32 = arith.constant 0 : i32
    %c0_i32_0 = arith.constant 0 : i32
    %c0_i32_1 = arith.constant 0 : i32
    return %c0_i32, %c0_i32_0 : i32, i32
  }
  func.func @transform_4(%arg0: i32) -> (i32, i32) {
    %c0_i32 = arith.constant 0 : i32
    %c0_i32_0 = arith.constant 0 : i32
    %c0_i32_1 = arith.constant 0 : i32
    return %c0_i32, %c0_i32_0 : i32, i32
  }
  func.func @transform_5(%arg0: i32) -> (i32, i32) {
    %c0_i32 = arith.constant 0 : i32
    %c0_i32_0 = arith.constant 0 : i32
    %c0_i32_1 = arith.constant 0 : i32
    return %c0_i32, %c0_i32_0 : i32, i32
  }
  func.func @transform_6(%arg0: i32) -> (i32, i32) {
    %c0_i32 = arith.constant 0 : i32
    %c0_i32_0 = arith.constant 0 : i32
    %c0_i32_1 = arith.constant 0 : i32
    return %c0_i32, %c0_i32_0 : i32, i32
  }
  func.func @transform_7(%arg0: i32) -> (i32, i32) {
    %c0_i32 = arith.constant 0 : i32
    %c0_i32_0 = arith.constant 0 : i32
    %c0_i32_1 = arith.constant 0 : i32
    return %c0_i32, %c0_i32_0 : i32, i32
  }
  func.func @transform_8(%arg0: i32) -> (i32, i32) {
    %c0_i32 = arith.constant 0 : i32
    %c0_i32_0 = arith.constant 0 : i32
    %c0_i32_1 = arith.constant 0 : i32
    return %c0_i32, %c0_i32_0 : i32, i32
  }
  func.func @transform_9(%arg0: i32) -> (i32, i32) {
    %c0_i32 = arith.constant 0 : i32
    %c0_i32_0 = arith.constant 0 : i32
    %c0_i32_1 = arith.constant 0 : i32
    return %c0_i32, %c0_i32_0 : i32, i32
  }
  func.func @transform_10(%arg0: i32) -> (i32, i32) {
    %c0_i32 = arith.constant 0 : i32
    %c0_i32_0 = arith.constant 0 : i32
    return %arg0, %c0_i32 : i32, i32
  }
  func.func @transform_11(%arg0: i32) -> (i32, i32) {
    %c0_i32 = arith.constant 0 : i32
    %c0_i32_0 = arith.constant 0 : i32
    return %arg0, %c0_i32 : i32, i32
  }
}

</mosaic_0001>

<llo_original>
// kernel: tpu_custom_call.1
$region0: #{tpu_custom_call.1}
  #allocation0 [shape = 'u32[]', space=smem, size = 0x4, offset = 0x4, fixed_abs, tag = 'smem constant byte address 0x4 - core index']
  #allocation1 [shape = 'u32[144,128]{1,0:T(1,128)}', space=vmem, size = 0x12000, scoped, tag = 'internal scratch']
  %s0 = inlined_call_operand.hbm [shape: f32[8,1024], index: 0, kind: input, shape index: {}]
  %s1 = inlined_call_operand.hbm [shape: f32[8,128], index: 1, kind: input, shape index: {}]
  %s2 = inlined_call_operand.hbm [shape: bf16[1024,512], index: 2, kind: input, shape index: {}]
  %s3 = inlined_call_operand.vmem [shape: f32[1,512], index: 3, kind: input, shape index: {}]
  %s4 = inlined_call_operand.hbm [shape: f32[512,256], index: 4, kind: input, shape index: {}]
  %s5 = inlined_call_operand.vmem [shape: f32[1,256], index: 5, kind: input, shape index: {}]
  %s6 = inlined_call_operand.hbm [shape: f32[128,512], index: 6, kind: input, shape index: {}]
  %s7 = inlined_call_operand.vmem [shape: f32[1,512], index: 7, kind: input, shape index: {}]
  %s8 = inlined_call_operand.hbm [shape: bf16[512,1024], index: 8, kind: input, shape index: {}]
  %s9 = inlined_call_operand.vmem [shape: f32[1,1024], index: 9, kind: input, shape index: {}]
  %s10 = inlined_call_operand.hbm [shape: f32[8,1024], index: 10, kind: output, shape index: {0}]
  %s11 = inlined_call_operand.hbm [shape: f32[8,256], index: 11, kind: output, shape index: {1}]
  %12 = xla_tuple %s10, %s11
  %s13 = sld [smem:[#allocation0]]
  $region82: #{tpu_custom_call.1} parent=0
    _
  %s15 = ssub.s32 1, %s13
  %s16 = scalar_select 0, %s15, %s13
  $region1: #{tpu_custom_call.1} parent=0
    #allocation2 [shape = 'u8[32768]{0}', space=vmem, size = 0x8000, scoped, tag = 'input window, operand 0, single buffered']
    #allocation3 [shape = 's32[1]{0}', space=sflag, size = 0x4, scoped, tag = 'scoped memory for tpu_custom_call.1']
    #allocation4 [shape = 's32[1]{0}', space=sflag, size = 0x4, scoped, tag = 'scoped memory for tpu_custom_call.1']
    #allocation5 [shape = 'u8[4096]{0}', space=vmem, size = 0x1000, scoped, tag = 'input window, operand 1, single buffered']
    #allocation6 [shape = 's32[1]{0}', space=sflag, size = 0x4, scoped, tag = 'scoped memory for tpu_custom_call.1']
    #allocation7 [shape = 'u8[1048576]{0}', space=vmem, size = 0x100000, scoped, tag = 'input window, operand 2, single buffered']
    #allocation8 [shape = 'u8[524288]{0}', space=vmem, size = 0x80000, scoped, tag = 'input window, operand 4, single buffered']
    #allocation9 [shape = 's32[1]{0}', space=sflag, size = 0x4, scoped, tag = 'scoped memory for tpu_custom_call.1']
    #allocation10 [shape = 'u8[262144]{0}', space=vmem, size = 0x40000, scoped, tag = 'input window, operand 6, single buffered']
    #allocation11 [shape = 'u8[1048576]{0}', space=vmem, size = 0x100000, scoped, tag = 'input window, operand 8, single buffered']
    #allocation12 [shape = 's32[1]{0}', space=sflag, size = 0x4, scoped, tag = 'scoped memory for tpu_custom_call.1']
    #allocation13 [shape = 'u8[32768]{0}', space=vmem, size = 0x8000, scoped, tag = 'output window, operand 0, single buffered']
    #allocation14 [shape = 'u8[8192]{0}', space=vmem, size = 0x2000, scoped, tag = 'output window, operand 1, single buffered']
    #allocation15 [shape = 's32[1]{0}', space=sflag, size = 0x4, scoped, tag = 'scoped memory for tpu_custom_call.1']
    %17 = vsyncpa [#allocation3], 0
    %18 = vsyncpa [#allocation6], 0
    %19 = vsyncpa [#allocation9], 0
    %20 = vsyncpa [#allocation12], 0
    %21 = vsyncpa [#allocation4], 0
    %22 = vsyncpa [#allocation15], 0
    // Predicated region
    $region2: #{tpu_custom_call.1} parent=1 // pred_check
      _
    $region3: #{tpu_custom_call.1} parent=1 // pred_check_branch
      %24 = sbr.rel (0) target = $region5
    $region4: #{tpu_custom_call.1} parent=1 // pred_region
      %s26 = ssub.s32 1024, 1024
      %27 = vsyncadd [#allocation3], %s26
      %s29 = sshll.u32 [#allocation2], 4
      %s30 = int_to_ptr.vmem [resolvable:$true] %s29
      %32 = dma.hbm_to_vmem [thread:$0]  %s0, 1024, %s30, [#allocation3]
    $region5: #{tpu_custom_call.1} parent=1 // pred_fallthru
      _
    // Predicated region
    $region6: #{tpu_custom_call.1} parent=1 // pred_check
      _
    $region7: #{tpu_custom_call.1} parent=1 // pred_check_branch
      %34 = sbr.rel (0) target = $region9
    $region8: #{tpu_custom_call.1} parent=1 // pred_region
      %s36 = ssub.s32 128, 128
      %37 = vsyncadd [#allocation6], %s36
      %s39 = sshll.u32 [#allocation5], 4
      %s40 = int_to_ptr.vmem [resolvable:$true] %s39
      %42 = dma.hbm_to_vmem [thread:$0]  %s1, 128, %s40, [#allocation6]
    $region9: #{tpu_custom_call.1} parent=1 // pred_fallthru
      _
    // Predicated region
    $region10: #{tpu_custom_call.1} parent=1 // pred_check
      _
    $region11: #{tpu_custom_call.1} parent=1 // pred_check_branch
      %44 = sbr.rel (0) target = $region13
    $region12: #{tpu_custom_call.1} parent=1 // pred_region
      %s46 = ssub.s32 32768, 32768
      %47 = vsyncadd [#allocation6], %s46
      %s48 = sshll.u32 [#allocation7], 4
      %s49 = int_to_ptr.vmem [resolvable:$true] %s48
      %54 = dma.hbm_to_vmem [thread:$0]  %s2, 32768, %s49, [#allocation6], 256, 256, 16
    $region13: #{tpu_custom_call.1} parent=1 // pred_fallthru
      _
    // Predicated region
    $region14: #{tpu_custom_call.1} parent=1 // pred_check
      _
    $region15: #{tpu_custom_call.1} parent=1 // pred_check_branch
      %56 = sbr.rel (0) target = $region17
    $region16: #{tpu_custom_call.1} parent=1 // pred_region
      _
    $region17: #{tpu_custom_call.1} parent=1 // pred_fallthru
      _
    // Predicated region
    $region18: #{tpu_custom_call.1} parent=1 // pred_check
      _
    $region19: #{tpu_custom_call.1} parent=1 // pred_check_branch
      %58 = sbr.rel (0) target = $region21
    $region20: #{tpu_custom_call.1} parent=1 // pred_region
      %s60 = ssub.s32 16384, 16384
      %61 = vsyncadd [#allocation9], %s60
      %s62 = sshll.u32 [#allocation8], 4
      %s63 = int_to_ptr.vmem [resolvable:$true] %s62
      %68 = dma.hbm_to_vmem [thread:$0]  %s4, 16384, %s63, [#allocation9], 256, 256, 16
    $region21: #{tpu_custom_call.1} parent=1 // pred_fallthru
      _
    // Predicated region
    $region22: #{tpu_custom_call.1} parent=1 // pred_check
      _
    $region23: #{tpu_custom_call.1} parent=1 // pred_check_branch
      %70 = sbr.rel (0) target = $region25
    $region24: #{tpu_custom_call.1} parent=1 // pred_region
      _
    $region25: #{tpu_custom_call.1} parent=1 // pred_fallthru
      _
    // Predicated region
    $region26: #{tpu_custom_call.1} parent=1 // pred_check
      _
    $region27: #{tpu_custom_call.1} parent=1 // pred_check_branch
      %72 = sbr.rel (0) target = $region29
    $region28: #{tpu_custom_call.1} parent=1 // pred_region
      %s74 = ssub.s32 8192, 8192
      %75 = vsyncadd [#allocation9], %s74
      %s76 = sshll.u32 [#allocation10], 4
      %s77 = int_to_ptr.vmem [resolvable:$true] %s76
      %82 = dma.hbm_to_vmem [thread:$0]  %s6, 8192, %s77, [#allocation9], 512, 512, 32
    $region29: #{tpu_custom_call.1} parent=1 // pred_fallthru
      _
    // Predicated region
    $region30: #{tpu_custom_call.1} parent=1 // pred_check
      _
    $region31: #{tpu_custom_call.1} parent=1 // pred_check_branch
      %84 = sbr.rel (0) target = $region33
    $region32: #{tpu_custom_call.1} parent=1 // pred_region
      _
    $region33: #{tpu_custom_call.1} parent=1 // pred_fallthru
      _
    // Predicated region
    $region34: #{tpu_custom_call.1} parent=1 // pred_check
      _
    $region35: #{tpu_custom_call.1} parent=1 // pred_check_branch
      %86 = sbr.rel (0) target = $region37
    $region36: #{tpu_custom_call.1} parent=1 // pred_region
      %s88 = ssub.s32 32768, 32768
      %89 = vsyncadd [#allocation12], %s88
      %s90 = sshll.u32 [#allocation11], 4
      %s91 = int_to_ptr.vmem [resolvable:$true] %s90
      %96 = dma.hbm_to_vmem [thread:$0]  %s8, 32768, %s91, [#allocation12], 512, 512, 32
    $region37: #{tpu_custom_call.1} parent=1 // pred_fallthru
      _
    // Predicated region
    $region38: #{tpu_custom_call.1} parent=1 // pred_check
      _
    $region39: #{tpu_custom_call.1} parent=1 // pred_check_branch
      %98 = sbr.rel (0) target = $region41
    $region40: #{tpu_custom_call.1} parent=1 // pred_region
      _
    $region41: #{tpu_custom_call.1} parent=1 // pred_fallthru
      _
    // Predicated region
    $region42: #{tpu_custom_call.1} parent=1 // pred_check
      _
    $region43: #{tpu_custom_call.1} parent=1 // pred_check_branch
      %100 = sbr.rel (0) target = $region45
    $region44: #{tpu_custom_call.1} parent=1 // pred_region
      %101 = dma.done [#allocation3], 1024
    $region45: #{tpu_custom_call.1} parent=1 // pred_fallthru
      _
    // Predicated region
    $region46: #{tpu_custom_call.1} parent=1 // pred_check
      _
    $region47: #{tpu_custom_call.1} parent=1 // pred_check_branch
      %103 = sbr.rel (0) target = $region49
    $region48: #{tpu_custom_call.1} parent=1 // pred_region
      %104 = dma.done [#allocation6], 128
    $region49: #{tpu_custom_call.1} parent=1 // pred_fallthru
      _
    // Predicated region
    $region50: #{tpu_custom_call.1} parent=1 // pred_check
      _
    $region51: #{tpu_custom_call.1} parent=1 // pred_check_branch
      %106 = sbr.rel (0) target = $region53
    $region52: #{tpu_custom_call.1} parent=1 // pred_region
      %107 = dma.done [#allocation6], 32768
    $region53: #{tpu_custom_call.1} parent=1 // pred_fallthru
      _
    // Predicated region
    $region54: #{tpu_custom_call.1} parent=1 // pred_check
      _
    $region55: #{tpu_custom_call.1} parent=1 // pred_check_branch
      %109 = sbr.rel (0) target = $region57
    $region56: #{tpu_custom_call.1} parent=1 // pred_region
      %110 = dma.done [#allocation9], 16384
    $region57: #{tpu_custom_call.1} parent=1 // pred_fallthru
      _
    // Predicated region
    $region58: #{tpu_custom_call.1} parent=1 // pred_check
      _
    $region59: #{tpu_custom_call.1} parent=1 // pred_check_branch
      %112 = sbr.rel (0) target = $region61
    $region60: #{tpu_custom_call.1} parent=1 // pred_region
      %113 = dma.done [#allocation9], 8192
    $region61: #{tpu_custom_call.1} parent=1 // pred_fallthru
      _
    // Predicated region
    $region62: #{tpu_custom_call.1} parent=1 // pred_check
      _
    $region63: #{tpu_custom_call.1} parent=1 // pred_check_branch
      %115 = sbr.rel (0) target = $region65
    $region64: #{tpu_custom_call.1} parent=1 // pred_region
      %116 = dma.done [#allocation12], 32768
    $region65: #{tpu_custom_call.1} parent=1 // pred_fallthru
      _
    %v117 = vld [vmem:[#allocation2] sm:$0xff]
    %v118 = vld [vmem:[#allocation2 + $0x8] sm:$0xff]
    %v119 = vld [vmem:[#allocation2 + $0x10] sm:$0xff]
    %v120 = vld [vmem:[#allocation2 + $0x18] sm:$0xff]
    %v121 = vld [vmem:[#allocation2 + $0x20] sm:$0xff]
    %v122 = vld [vmem:[#allocation2 + $0x28] sm:$0xff]
    %v123 = vld [vmem:[#allocation2 + $0x30] sm:$0xff]
    %v124 = vld [vmem:[#allocation2 + $0x38] sm:$0xff]
    %v125 = vpack.c.bf16 %v117, %v117
    %v126 = vpack.c.bf16 %v118, %v118
    %v127 = vpack.c.bf16 %v119, %v119
    %v128 = vpack.c.bf16 %v120, %v120
    %v129 = vpack.c.bf16 %v121, %v121
    %v130 = vpack.c.bf16 %v122, %v122
    %v131 = vpack.c.bf16 %v123, %v123
    %v132 = vpack.c.bf16 %v124, %v124
    %v133 = vld [vmem:[#allocation7] sm:$0xff]
    %v134 = vld [vmem:[#allocation7 + $0x8] sm:$0xff]
    %v135 = vld [vmem:[#allocation7 + $0x10] sm:$0xff]
    %v136 = vld [vmem:[#allocation7 + $0x18] sm:$0xff]
    %v137 = vld [vmem:[#allocation7 + $0x20] sm:$0xff]
    %v138 = vld [vmem:[#allocation7 + $0x28] sm:$0xff]
    %v139 = vld [vmem:[#allocation7 + $0x30] sm:$0xff]
    %v140 = vld [vmem:[#allocation7 + $0x38] sm:$0xff]
    %v141 = vld [vmem:[#allocation7 + $0x40] sm:$0xff]
    %v142 = vld [vmem:[#allocation7 + $0x48] sm:$0xff]
    %v143 = vld [vmem:[#allocation7 + $0x50] sm:$0xff]
    %v144 = vld [vmem:[#allocation7 + $0x58] sm:$0xff]
    %v145 = vld [vmem:[#allocation7 + $0x60] sm:$0xff]
    %v146 = vld [vmem:[#allocation7 + $0x68] sm:$0xff]
    %v147 = vld [vmem:[#allocation7 + $0x70] sm:$0xff]
    %v148 = vld [vmem:[#allocation7 + $0x78] sm:$0xff]
    %v149 = vld [vmem:[#allocation7 + $0x80] sm:$0xff]
    %v150 = vld [vmem:[#allocation7 + $0x88] sm:$0xff]
    %v151 = vld [vmem:[#allocation7 + $0x90] sm:$0xff]
    %v152 = vld [vmem:[#allocation7 + $0x98] sm:$0xff]
    %v153 = vld [vmem:[#allocation7 + $0xa0] sm:$0xff]
    %v154 = vld [vmem:[#allocation7 + $0xa8] sm:$0xff]
    %v155 = vld [vmem:[#allocation7 + $0xb0] sm:$0xff]
    %v156 = vld [vmem:[#allocation7 + $0xb8] sm:$0xff]
    %v157 = vld [vmem:[#allocation7 + $0xc0] sm:$0xff]
    %v158 = vld [vmem:[#allocation7 + $0xc8] sm:$0xff]
    %v159 = vld [vmem:[#allocation7 + $0xd0] sm:$0xff]
    %v160 = vld [vmem:[#allocation7 + $0xd8] sm:$0xff]
    %v161 = vld [vmem:[#allocation7 + $0xe0] sm:$0xff]
    %v162 = vld [vmem:[#allocation7 + $0xe8] sm:$0xff]
    %v163 = vld [vmem:[#allocation7 + $0xf0] sm:$0xff]
    %v164 = vld [vmem:[#allocation7 + $0xf8] sm:$0xff]
    %v165 = vld [vmem:[#allocation7 + $0x100] sm:$0xff]
    %v166 = vld [vmem:[#allocation7 + $0x108] sm:$0xff]
    %v167 = vld [vmem:[#allocation7 + $0x110] sm:$0xff]
    %v168 = vld [vmem:[#allocation7 + $0x118] sm:$0xff]
    %v169 = vld [vmem:[#allocation7 + $0x120] sm:$0xff]
    %v170 = vld [vmem:[#allocation7 + $0x128] sm:$0xff]
    %v171 = vld [vmem:[#allocation7 + $0x130] sm:$0xff]
    %v172 = vld [vmem:[#allocation7 + $0x138] sm:$0xff]
    %v173 = vld [vmem:[#allocation7 + $0x140] sm:$0xff]
    %v174 = vld [vmem:[#allocation7 + $0x148] sm:$0xff]
    %v175 = vld [vmem:[#allocation7 + $0x150] sm:$0xff]
    %v176 = vld [vmem:[#allocation7 + $0x158] sm:$0xff]
    %v177 = vld [vmem:[#allocation7 + $0x160] sm:$0xff]
    %v178 = vld [vmem:[#allocation7 + $0x168] sm:$0xff]
    %v179 = vld [vmem:[#allocation7 + $0x170] sm:$0xff]
    %v180 = vld [vmem:[#allocation7 + $0x178] sm:$0xff]
    %v181 = vld [vmem:[#allocation7 + $0x180] sm:$0xff]
    %v182 = vld [vmem:[#allocation7 + $0x188] sm:$0xff]
    %v183 = vld [vmem:[#allocation7 + $0x190] sm:$0xff]
    %v184 = vld [vmem:[#allocation7 + $0x198] sm:$0xff]
    %v185 = vld [vmem:[#allocation7 + $0x1a0] sm:$0xff]
    %v186 = vld [vmem:[#allocation7 + $0x1a8] sm:$0xff]
    %v187 = vld [vmem:[#allocation7 + $0x1b0] sm:$0xff]
    %v188 = vld [vmem:[#allocation7 + $0x1b8] sm:$0xff]
    %v189 = vld [vmem:[#allocation7 + $0x1c0] sm:$0xff]
    %v190 = vld [vmem:[#allocation7 + $0x1c8] sm:$0xff]
    %v191 = vld [vmem:[#allocation7 + $0x1d0] sm:$0xff]
    %v192 = vld [vmem:[#allocation7 + $0x1d8] sm:$0xff]
    %v193 = vld [vmem:[#allocation7 + $0x1e0] sm:$0xff]
    %v194 = vld [vmem:[#allocation7 + $0x1e8] sm:$0xff]
    %v195 = vld [vmem:[#allocation7 + $0x1f0] sm:$0xff]
    %v196 = vld [vmem:[#allocation7 + $0x1f8] sm:$0xff]
    %v197 = vld [vmem:[#allocation7 + $0x200] sm:$0xff]
    %v198 = vld [vmem:[#allocation7 + $0x208] sm:$0xff]
    %v199 = vld [vmem:[#allocation7 + $0x210] sm:$0xff]
    %v200 = vld [vmem:[#allocation7 + $0x218] sm:$0xff]
    %v201 = vld [vmem:[#allocation7 + $0x220] sm:$0xff]
    %v202 = vld [vmem:[#allocation7 + $0x228] sm:$0xff]
    %v203 = vld [vmem:[#allocation7 + $0x230] sm:$0xff]
    %v204 = vld [vmem:[#allocation7 + $0x238] sm:$0xff]
    %v205 = vld [vmem:[#allocation7 + $0x240] sm:$0xff]
    %v206 = vld [vmem:[#allocation7 + $0x248] sm:$0xff]
    %v207 = vld [vmem:[#allocation7 + $0x250] sm:$0xff]
    %v208 = vld [vmem:[#allocation7 + $0x258] sm:$0xff]
    %v209 = vld [vmem:[#allocation7 + $0x260] sm:$0xff]
    %v210 = vld [vmem:[#allocation7 + $0x268] sm:$0xff]
    %v211 = vld [vmem:[#allocation7 + $0x270] sm:$0xff]
    %v212 = vld [vmem:[#allocation7 + $0x278] sm:$0xff]
    %v213 = vld [vmem:[#allocation7 + $0x280] sm:$0xff]
    %v214 = vld [vmem:[#allocation7 + $0x288] sm:$0xff]
    %v215 = vld [vmem:[#allocation7 + $0x290] sm:$0xff]
    %v216 = vld [vmem:[#allocation7 + $0x298] sm:$0xff]
    %v217 = vld [vmem:[#allocation7 + $0x2a0] sm:$0xff]
    %v218 = vld [vmem:[#allocation7 + $0x2a8] sm:$0xff]
    %v219 = vld [vmem:[#allocation7 + $0x2b0] sm:$0xff]
    %v220 = vld [vmem:[#allocation7 + $0x2b8] sm:$0xff]
    %v221 = vld [vmem:[#allocation7 + $0x2c0] sm:$0xff]
    %v222 = vld [vmem:[#allocation7 + $0x2c8] sm:$0xff]
    %v223 = vld [vmem:[#allocation7 + $0x2d0] sm:$0xff]
    %v224 = vld [vmem:[#allocation7 + $0x2d8] sm:$0xff]
    %v225 = vld [vmem:[#allocation7 + $0x2e0] sm:$0xff]
    %v226 = vld [vmem:[#allocation7 + $0x2e8] sm:$0xff]
    %v227 = vld [vmem:[#allocation7 + $0x2f0] sm:$0xff]
    %v228 = vld [vmem:[#allocation7 + $0x2f8] sm:$0xff]
    %v229 = vld [vmem:[#allocation7 + $0x300] sm:$0xff]
    %v230 = vld [vmem:[#allocation7 + $0x308] sm:$0xff]
    %v231 = vld [vmem:[#allocation7 + $0x310] sm:$0xff]
    %v232 = vld [vmem:[#allocation7 + $0x318] sm:$0xff]
    %v233 = vld [vmem:[#allocation7 + $0x320] sm:$0xff]
    %v234 = vld [vmem:[#allocation7 + $0x328] sm:$0xff]
    %v235 = vld [vmem:[#allocation7 + $0x330] sm:$0xff]
    %v236 = vld [vmem:[#allocation7 + $0x338] sm:$0xff]
    %v237 = vld [vmem:[#allocation7 + $0x340] sm:$0xff]
    %v238 = vld [vmem:[#allocation7 + $0x348] sm:$0xff]
    %v239 = vld [vmem:[#allocation7 + $0x350] sm:$0xff]
    %v240 = vld [vmem:[#allocation7 + $0x358] sm:$0xff]
    %v241 = vld [vmem:[#allocation7 + $0x360] sm:$0xff]
    %v242 = vld [vmem:[#allocation7 + $0x368] sm:$0xff]
    %v243 = vld [vmem:[#allocation7 + $0x370] sm:$0xff]
    %v244 = vld [vmem:[#allocation7 + $0x378] sm:$0xff]
    %v245 = vld [vmem:[#allocation7 + $0x380] sm:$0xff]
    %v246 = vld [vmem:[#allocation7 + $0x388] sm:$0xff]
    %v247 = vld [vmem:[#allocation7 + $0x390] sm:$0xff]
    %v248 = vld [vmem:[#allocation7 + $0x398] sm:$0xff]
    %v249 = vld [vmem:[#allocation7 + $0x3a0] sm:$0xff]
    %v250 = vld [vmem:[#allocation7 + $0x3a8] sm:$0xff]
    %v251 = vld [vmem:[#allocation7 + $0x3b0] sm:$0xff]
    %v252 = vld [vmem:[#allocation7 + $0x3b8] sm:$0xff]
    %v253 = vld [vmem:[#allocation7 + $0x3c0] sm:$0xff]
    %v254 = vld [vmem:[#allocation7 + $0x3c8] sm:$0xff]
    %v255 = vld [vmem:[#allocation7 + $0x3d0] sm:$0xff]
    %v256 = vld [vmem:[#allocation7 + $0x3d8] sm:$0xff]
    %v257 = vld [vmem:[#allocation7 + $0x3e0] sm:$0xff]
    %v258 = vld [vmem:[#allocation7 + $0x3e8] sm:$0xff]
    %v259 = vld [vmem:[#allocation7 + $0x3f0] sm:$0xff]
    %v260 = vld [vmem:[#allocation7 + $0x3f8] sm:$0xff]
    %v261 = vld [vmem:[#allocation7 + $0x400] sm:$0xff]
    %v262 = vld [vmem:[#allocation7 + $0x408] sm:$0xff]
    %v263 = vld [vmem:[#allocation7 + $0x410] sm:$0xff]
    %v264 = vld [vmem:[#allocation7 + $0x418] sm:$0xff]
    %v265 = vld [vmem:[#allocation7 + $0x420] sm:$0xff]
    %v266 = vld [vmem:[#allocation7 + $0x428] sm:$0xff]
    %v267 = vld [vmem:[#allocation7 + $0x430] sm:$0xff]
    %v268 = vld [vmem:[#allocation7 + $0x438] sm:$0xff]
    %v269 = vld [vmem:[#allocation7 + $0x440] sm:$0xff]
    %v270 = vld [vmem:[#allocation7 + $0x448] sm:$0xff]
    %v271 = vld [vmem:[#allocation7 + $0x450] sm:$0xff]
    %v272 = vld [vmem:[#allocation7 + $0x458] sm:$0xff]
    %v273 = vld [vmem:[#allocation7 + $0x460] sm:$0xff]
    %v274 = vld [vmem:[#allocation7 + $0x468] sm:$0xff]
    %v275 = vld [vmem:[#allocation7 + $0x470] sm:$0xff]
    %v276 = vld [vmem:[#allocation7 + $0x478] sm:$0xff]
    %v277 = vld [vmem:[#allocation7 + $0x480] sm:$0xff]
    %v278 = vld [vmem:[#allocation7 + $0x488] sm:$0xff]
    %v279 = vld [vmem:[#allocation7 + $0x490] sm:$0xff]
    %v280 = vld [vmem:[#allocation7 + $0x498] sm:$0xff]
    %v281 = vld [vmem:[#allocation7 + $0x4a0] sm:$0xff]
    %v282 = vld [vmem:[#allocation7 + $0x4a8] sm:$0xff]
    %v283 = vld [vmem:[#allocation7 + $0x4b0] sm:$0xff]
    %v284 = vld [vmem:[#allocation7 + $0x4b8] sm:$0xff]
    %v285 = vld [vmem:[#allocation7 + $0x4c0] sm:$0xff]
    %v286 = vld [vmem:[#allocation7 + $0x4c8] sm:$0xff]
    %v287 = vld [vmem:[#allocation7 + $0x4d0] sm:$0xff]
    %v288 = vld [vmem:[#allocation7 + $0x4d8] sm:$0xff]
    %v289 = vld [vmem:[#allocation7 + $0x4e0] sm:$0xff]
    %v290 = vld [vmem:[#allocation7 + $0x4e8] sm:$0xff]
    %v291 = vld [vmem:[#allocation7 + $0x4f0] sm:$0xff]
    %v292 = vld [vmem:[#allocation7 + $0x4f8] sm:$0xff]
    %v293 = vld [vmem:[#allocation7 + $0x500] sm:$0xff]
    %v294 = vld [vmem:[#allocation7 + $0x508] sm:$0xff]
    %v295 = vld [vmem:[#allocation7 + $0x510] sm:$0xff]
    %v296 = vld [vmem:[#allocation7 + $0x518] sm:$0xff]
    %v297 = vld [vmem:[#allocation7 + $0x520] sm:$0xff]
    %v298 = vld [vmem:[#allocation7 + $0x528] sm:$0xff]
    %v299 = vld [vmem:[#allocation7 + $0x530] sm:$0xff]
    %v300 = vld [vmem:[#allocation7 + $0x538] sm:$0xff]
    %v301 = vld [vmem:[#allocation7 + $0x540] sm:$0xff]
    %v302 = vld [vmem:[#allocation7 + $0x548] sm:$0xff]
    %v303 = vld [vmem:[#allocation7 + $0x550] sm:$0xff]
    %v304 = vld [vmem:[#allocation7 + $0x558] sm:$0xff]
    %v305 = vld [vmem:[#allocation7 + $0x560] sm:$0xff]
    %v306 = vld [vmem:[#allocation7 + $0x568] sm:$0xff]
    %v307 = vld [vmem:[#allocation7 + $0x570] sm:$0xff]
    %v308 = vld [vmem:[#allocation7 + $0x578] sm:$0xff]
    %v309 = vld [vmem:[#allocation7 + $0x580] sm:$0xff]
    %v310 = vld [vmem:[#allocation7 + $0x588] sm:$0xff]
    %v311 = vld [vmem:[#allocation7 + $0x590] sm:$0xff]
    %v312 = vld [vmem:[#allocation7 + $0x598] sm:$0xff]
    %v313 = vld [vmem:[#allocation7 + $0x5a0] sm:$0xff]
    %v314 = vld [vmem:[#allocation7 + $0x5a8] sm:$0xff]
    %v315 = vld [vmem:[#allocation7 + $0x5b0] sm:$0xff]
    %v316 = vld [vmem:[#allocation7 + $0x5b8] sm:$0xff]
    %v317 = vld [vmem:[#allocation7 + $0x5c0] sm:$0xff]
    %v318 = vld [vmem:[#allocation7 + $0x5c8] sm:$0xff]
    %v319 = vld [vmem:[#allocation7 + $0x5d0] sm:$0xff]
    %v320 = vld [vmem:[#allocation7 + $0x5d8] sm:$0xff]
    %v321 = vld [vmem:[#allocation7 + $0x5e0] sm:$0xff]
    %v322 = vld [vmem:[#allocation7 + $0x5e8] sm:$0xff]
    %v323 = vld [vmem:[#allocation7 + $0x5f0] sm:$0xff]
    %v324 = vld [vmem:[#allocation7 + $0x5f8] sm:$0xff]
    %v325 = vld [vmem:[#allocation7 + $0x600] sm:$0xff]
    %v326 = vld [vmem:[#allocation7 + $0x608] sm:$0xff]
    %v327 = vld [vmem:[#allocation7 + $0x610] sm:$0xff]
    %v328 = vld [vmem:[#allocation7 + $0x618] sm:$0xff]
    %v329 = vld [vmem:[#allocation7 + $0x620] sm:$0xff]
    %v330 = vld [vmem:[#allocation7 + $0x628] sm:$0xff]
    %v331 = vld [vmem:[#allocation7 + $0x630] sm:$0xff]
    %v332 = vld [vmem:[#allocation7 + $0x638] sm:$0xff]
    %v333 = vld [vmem:[#allocation7 + $0x640] sm:$0xff]
    %v334 = vld [vmem:[#allocation7 + $0x648] sm:$0xff]
    %v335 = vld [vmem:[#allocation7 + $0x650] sm:$0xff]
    %v336 = vld [vmem:[#allocation7 + $0x658] sm:$0xff]
    %v337 = vld [vmem:[#allocation7 + $0x660] sm:$0xff]
    %v338 = vld [vmem:[#allocation7 + $0x668] sm:$0xff]
    %v339 = vld [vmem:[#allocation7 + $0x670] sm:$0xff]
    %v340 = vld [vmem:[#allocation7 + $0x678] sm:$0xff]
    %v341 = vld [vmem:[#allocation7 + $0x680] sm:$0xff]
    %v342 = vld [vmem:[#allocation7 + $0x688] sm:$0xff]
    %v343 = vld [vmem:[#allocation7 + $0x690] sm:$0xff]
    %v344 = vld [vmem:[#allocation7 + $0x698] sm:$0xff]
    %v345 = vld [vmem:[#allocation7 + $0x6a0] sm:$0xff]
    %v346 = vld [vmem:[#allocation7 + $0x6a8] sm:$0xff]
    %v347 = vld [vmem:[#allocation7 + $0x6b0] sm:$0xff]
    %v348 = vld [vmem:[#allocation7 + $0x6b8] sm:$0xff]
    %v349 = vld [vmem:[#allocation7 + $0x6c0] sm:$0xff]
    %v350 = vld [vmem:[#allocation7 + $0x6c8] sm:$0xff]
    %v351 = vld [vmem:[#allocation7 + $0x6d0] sm:$0xff]
    %v352 = vld [vmem:[#allocation7 + $0x6d8] sm:$0xff]
    %v353 = vld [vmem:[#allocation7 + $0x6e0] sm:$0xff]
    %v354 = vld [vmem:[#allocation7 + $0x6e8] sm:$0xff]
    %v355 = vld [vmem:[#allocation7 + $0x6f0] sm:$0xff]
    %v356 = vld [vmem:[#allocation7 + $0x6f8] sm:$0xff]
    %v357 = vld [vmem:[#allocation7 + $0x700] sm:$0xff]
    %v358 = vld [vmem:[#allocation7 + $0x708] sm:$0xff]
    %v359 = vld [vmem:[#allocation7 + $0x710] sm:$0xff]
    %v360 = vld [vmem:[#allocation7 + $0x718] sm:$0xff]
    %v361 = vld [vmem:[#allocation7 + $0x720] sm:$0xff]
    %v362 = vld [vmem:[#allocation7 + $0x728] sm:$0xff]
    %v363 = vld [vmem:[#allocation7 + $0x730] sm:$0xff]
    %v364 = vld [vmem:[#allocation7 + $0x738] sm:$0xff]
    %v365 = vld [vmem:[#allocation7 + $0x740] sm:$0xff]
    %v366 = vld [vmem:[#allocation7 + $0x748] sm:$0xff]
    %v367 = vld [vmem:[#allocation7 + $0x750] sm:$0xff]
    %v368 = vld [vmem:[#allocation7 + $0x758] sm:$0xff]
    %v369 = vld [vmem:[#allocation7 + $0x760] sm:$0xff]
    %v370 = vld [vmem:[#allocation7 + $0x768] sm:$0xff]
    %v371 = vld [vmem:[#allocation7 + $0x770] sm:$0xff]
    %v372 = vld [vmem:[#allocation7 + $0x778] sm:$0xff]
    %v373 = vld [vmem:[#allocation7 + $0x780] sm:$0xff]
    %v374 = vld [vmem:[#allocation7 + $0x788] sm:$0xff]
    %v375 = vld [vmem:[#allocation7 + $0x790] sm:$0xff]
    %v376 = vld [vmem:[#allocation7 + $0x798] sm:$0xff]
    %v377 = vld [vmem:[#allocation7 + $0x7a0] sm:$0xff]
    %v378 = vld [vmem:[#allocation7 + $0x7a8] sm:$0xff]
    %v379 = vld [vmem:[#allocation7 + $0x7b0] sm:$0xff]
    %v380 = vld [vmem:[#allocation7 + $0x7b8] sm:$0xff]
    %v381 = vld [vmem:[#allocation7 + $0x7c0] sm:$0xff]
    %v382 = vld [vmem:[#allocation7 + $0x7c8] sm:$0xff]
    %v383 = vld [vmem:[#allocation7 + $0x7d0] sm:$0xff]
    %v384 = vld [vmem:[#allocation7 + $0x7d8] sm:$0xff]
    %v385 = vld [vmem:[#allocation7 + $0x7e0] sm:$0xff]
    %v386 = vld [vmem:[#allocation7 + $0x7e8] sm:$0xff]
    %v387 = vld [vmem:[#allocation7 + $0x7f0] sm:$0xff]
    %v388 = vld [vmem:[#allocation7 + $0x7f8] sm:$0xff]
    %v389 = vld [vmem:[%s3] sm:$0xf]
    %v391 = vlaneseq
    %v392 = vshrl.u32 %v391, 7
    %v393 = vsub.s32 0, %v392
    %v394 = vrot.slane %v389, %v393
    %v395 = vlaneseq
    %v396 = vshrl.u32 %v395, 7
    %v397 = vsub.s32 1, %v396
    %v398 = vrot.slane %v389, %v397
    %v399 = vlaneseq
    %v400 = vshrl.u32 %v399, 7
    %v401 = vsub.s32 2, %v400
    %v402 = vrot.slane %v389, %v401
    %v403 = vlaneseq
    %v404 = vshrl.u32 %v403, 7
    %v405 = vsub.s32 3, %v404
    %v406 = vrot.slane %v389, %v405
    %v667 = vunpack.c.l.b16 %v133
    %v668 = vunpack.c.h.b16 %v133
    %v669 = vunpack.c.l.b16 %v134
    %v670 = vunpack.c.h.b16 %v134
    %v671 = vunpack.c.l.b16 %v135
    %v672 = vunpack.c.h.b16 %v135
    %v673 = vunpack.c.l.b16 %v136
    %v674 = vunpack.c.h.b16 %v136
    %v675 = vunpack.c.l.b16 %v137
    %v676 = vunpack.c.h.b16 %v137
    %v677 = vunpack.c.l.b16 %v138
    %v678 = vunpack.c.h.b16 %v138
    %v679 = vunpack.c.l.b16 %v139
    %v680 = vunpack.c.h.b16 %v139
    %v681 = vunpack.c.l.b16 %v140
    %v682 = vunpack.c.h.b16 %v140
    %v683 = vunpack.c.l.b16 %v141
    %v684 = vunpack.c.h.b16 %v141
    %v685 = vunpack.c.l.b16 %v142
    %v686 = vunpack.c.h.b16 %v142
    %v687 = vunpack.c.l.b16 %v143
    %v688 = vunpack.c.h.b16 %v143
    %v689 = vunpack.c.l.b16 %v144
    %v690 = vunpack.c.h.b16 %v144
    %v691 = vunpack.c.l.b16 %v145
    %v692 = vunpack.c.h.b16 %v145
    %v693 = vunpack.c.l.b16 %v146
    %v694 = vunpack.c.h.b16 %v146
    %v695 = vunpack.c.l.b16 %v147
    %v696 = vunpack.c.h.b16 %v147
    %v697 = vunpack.c.l.b16 %v148
    %v698 = vunpack.c.h.b16 %v148
    %v699 = vunpack.c.l.b16 %v149
    %v700 = vunpack.c.h.b16 %v149
    %v701 = vunpack.c.l.b16 %v150
    %v702 = vunpack.c.h.b16 %v150
    %v703 = vunpack.c.l.b16 %v151
    %v704 = vunpack.c.h.b16 %v151
    %v705 = vunpack.c.l.b16 %v152
    %v706 = vunpack.c.h.b16 %v152
    %v707 = vunpack.c.l.b16 %v153
    %v708 = vunpack.c.h.b16 %v153
    %v709 = vunpack.c.l.b16 %v154
    %v710 = vunpack.c.h.b16 %v154
    %v711 = vunpack.c.l.b16 %v155
    %v712 = vunpack.c.h.b16 %v155
    %v713 = vunpack.c.l.b16 %v156
    %v714 = vunpack.c.h.b16 %v156
    %v715 = vunpack.c.l.b16 %v157
    %v716 = vunpack.c.h.b16 %v157
    %v717 = vunpack.c.l.b16 %v158
    %v718 = vunpack.c.h.b16 %v158
    %v719 = vunpack.c.l.b16 %v159
    %v720 = vunpack.c.h.b16 %v159
    %v721 = vunpack.c.l.b16 %v160
    %v722 = vunpack.c.h.b16 %v160
    %v723 = vunpack.c.l.b16 %v161
    %v724 = vunpack.c.h.b16 %v161
    %v725 = vunpack.c.l.b16 %v162
    %v726 = vunpack.c.h.b16 %v162
    %v727 = vunpack.c.l.b16 %v163
    %v728 = vunpack.c.h.b16 %v163
    %v729 = vunpack.c.l.b16 %v164
    %v730 = vunpack.c.h.b16 %v164
    %v731 = vunpack.c.l.b16 %v165
    %v732 = vunpack.c.h.b16 %v165
    %v733 = vunpack.c.l.b16 %v166
    %v734 = vunpack.c.h.b16 %v166
    %v735 = vunpack.c.l.b16 %v167
    %v736 = vunpack.c.h.b16 %v167
    %v737 = vunpack.c.l.b16 %v168
    %v738 = vunpack.c.h.b16 %v168
    %v739 = vunpack.c.l.b16 %v169
    %v740 = vunpack.c.h.b16 %v169
    %v741 = vunpack.c.l.b16 %v170
    %v742 = vunpack.c.h.b16 %v170
    %v743 = vunpack.c.l.b16 %v171
    %v744 = vunpack.c.h.b16 %v171
    %v745 = vunpack.c.l.b16 %v172
    %v746 = vunpack.c.h.b16 %v172
    %v747 = vunpack.c.l.b16 %v173
    %v748 = vunpack.c.h.b16 %v173
    %v749 = vunpack.c.l.b16 %v174
    %v750 = vunpack.c.h.b16 %v174
    %v751 = vunpack.c.l.b16 %v175
    %v752 = vunpack.c.h.b16 %v175
    %v753 = vunpack.c.l.b16 %v176
    %v754 = vunpack.c.h.b16 %v176
    %v755 = vunpack.c.l.b16 %v177
    %v756 = vunpack.c.h.b16 %v177
    %v757 = vunpack.c.l.b16 %v178
    %v758 = vunpack.c.h.b16 %v178
    %v759 = vunpack.c.l.b16 %v179
    %v760 = vunpack.c.h.b16 %v179
    %v761 = vunpack.c.l.b16 %v180
    %v762 = vunpack.c.h.b16 %v180
    %v763 = vunpack.c.l.b16 %v181
    %v764 = vunpack.c.h.b16 %v181
    %v765 = vunpack.c.l.b16 %v182
    %v766 = vunpack.c.h.b16 %v182
    %v767 = vunpack.c.l.b16 %v183
    %v768 = vunpack.c.h.b16 %v183
    %v769 = vunpack.c.l.b16 %v184
    %v770 = vunpack.c.h.b16 %v184
    %v771 = vunpack.c.l.b16 %v185
    %v772 = vunpack.c.h.b16 %v185
    %v773 = vunpack.c.l.b16 %v186
    %v774 = vunpack.c.h.b16 %v186
    %v775 = vunpack.c.l.b16 %v187
    %v776 = vunpack.c.h.b16 %v187
    %v777 = vunpack.c.l.b16 %v188
    %v778 = vunpack.c.h.b16 %v188
    %v779 = vunpack.c.l.b16 %v189
    %v780 = vunpack.c.h.b16 %v189
    %v781 = vunpack.c.l.b16 %v190
    %v782 = vunpack.c.h.b16 %v190
    %v783 = vunpack.c.l.b16 %v191
    %v784 = vunpack.c.h.b16 %v191
    %v785 = vunpack.c.l.b16 %v192
    %v786 = vunpack.c.h.b16 %v192
    %v787 = vunpack.c.l.b16 %v193
    %v788 = vunpack.c.h.b16 %v193
    %v789 = vunpack.c.l.b16 %v194
    %v790 = vunpack.c.h.b16 %v194
    %v791 = vunpack.c.l.b16 %v195
    %v792 = vunpack.c.h.b16 %v195
    %v793 = vunpack.c.l.b16 %v196
    %v794 = vunpack.c.h.b16 %v196
    %v795 = vunpack.c.l.b16 %v197
    %v796 = vunpack.c.h.b16 %v197
    %v797 = vunpack.c.l.b16 %v198
    %v798 = vunpack.c.h.b16 %v198
    %v799 = vunpack.c.l.b16 %v199
    %v800 = vunpack.c.h.b16 %v199
    %v801 = vunpack.c.l.b16 %v200
    %v802 = vunpack.c.h.b16 %v200
    %v803 = vunpack.c.l.b16 %v201
    %v804 = vunpack.c.h.b16 %v201
    %v805 = vunpack.c.l.b16 %v202
    %v806 = vunpack.c.h.b16 %v202
    %v807 = vunpack.c.l.b16 %v203
    %v808 = vunpack.c.h.b16 %v203
    %v809 = vunpack.c.l.b16 %v204
    %v810 = vunpack.c.h.b16 %v204
    %v811 = vunpack.c.l.b16 %v205
    %v812 = vunpack.c.h.b16 %v205
    %v813 = vunpack.c.l.b16 %v206
    %v814 = vunpack.c.h.b16 %v206
    %v815 = vunpack.c.l.b16 %v207
    %v816 = vunpack.c.h.b16 %v207
    %v817 = vunpack.c.l.b16 %v208
    %v818 = vunpack.c.h.b16 %v208
    %v819 = vunpack.c.l.b16 %v209
    %v820 = vunpack.c.h.b16 %v209
    %v821 = vunpack.c.l.b16 %v210
    %v822 = vunpack.c.h.b16 %v210
    %v823 = vunpack.c.l.b16 %v211
    %v824 = vunpack.c.h.b16 %v211
    %v825 = vunpack.c.l.b16 %v212
    %v826 = vunpack.c.h.b16 %v212
    %v827 = vunpack.c.l.b16 %v213
    %v828 = vunpack.c.h.b16 %v213
    %v829 = vunpack.c.l.b16 %v214
    %v830 = vunpack.c.h.b16 %v214
    %v831 = vunpack.c.l.b16 %v215
    %v832 = vunpack.c.h.b16 %v215
    %v833 = vunpack.c.l.b16 %v216
    %v834 = vunpack.c.h.b16 %v216
    %v835 = vunpack.c.l.b16 %v217
    %v836 = vunpack.c.h.b16 %v217
    %v837 = vunpack.c.l.b16 %v218
    %v838 = vunpack.c.h.b16 %v218
    %v839 = vunpack.c.l.b16 %v219
    %v840 = vunpack.c.h.b16 %v219
    %v841 = vunpack.c.l.b16 %v220
    %v842 = vunpack.c.h.b16 %v220
    %v843 = vunpack.c.l.b16 %v221
    %v844 = vunpack.c.h.b16 %v221
    %v845 = vunpack.c.l.b16 %v222
    %v846 = vunpack.c.h.b16 %v222
    %v847 = vunpack.c.l.b16 %v223
    %v848 = vunpack.c.h.b16 %v223
    %v849 = vunpack.c.l.b16 %v224
    %v850 = vunpack.c.h.b16 %v224
    %v851 = vunpack.c.l.b16 %v225
    %v852 = vunpack.c.h.b16 %v225
    %v853 = vunpack.c.l.b16 %v226
    %v854 = vunpack.c.h.b16 %v226
    %v855 = vunpack.c.l.b16 %v227
    %v856 = vunpack.c.h.b16 %v227
    %v857 = vunpack.c.l.b16 %v228
    %v858 = vunpack.c.h.b16 %v228
    %v859 = vunpack.c.l.b16 %v229
    %v860 = vunpack.c.h.b16 %v229
    %v861 = vunpack.c.l.b16 %v230
    %v862 = vunpack.c.h.b16 %v230
    %v863 = vunpack.c.l.b16 %v231
    %v864 = vunpack.c.h.b16 %v231
    %v865 = vunpack.c.l.b16 %v232
    %v866 = vunpack.c.h.b16 %v232
    %v867 = vunpack.c.l.b16 %v233
    %v868 = vunpack.c.h.b16 %v233
    %v869 = vunpack.c.l.b16 %v234
    %v870 = vunpack.c.h.b16 %v234
    %v871 = vunpack.c.l.b16 %v235
    %v872 = vunpack.c.h.b16 %v235
    %v873 = vunpack.c.l.b16 %v236
    %v874 = vunpack.c.h.b16 %v236
    %v875 = vunpack.c.l.b16 %v237
    %v876 = vunpack.c.h.b16 %v237
    %v877 = vunpack.c.l.b16 %v238
    %v878 = vunpack.c.h.b16 %v238
    %v879 = vunpack.c.l.b16 %v239
    %v880 = vunpack.c.h.b16 %v239
    %v881 = vunpack.c.l.b16 %v240
    %v882 = vunpack.c.h.b16 %v240
    %v883 = vunpack.c.l.b16 %v241
    %v884 = vunpack.c.h.b16 %v241
    %v885 = vunpack.c.l.b16 %v242
    %v886 = vunpack.c.h.b16 %v242
    %v887 = vunpack.c.l.b16 %v243
    %v888 = vunpack.c.h.b16 %v243
    %v889 = vunpack.c.l.b16 %v244
    %v890 = vunpack.c.h.b16 %v244
    %v891 = vunpack.c.l.b16 %v245
    %v892 = vunpack.c.h.b16 %v245
    %v893 = vunpack.c.l.b16 %v246
    %v894 = vunpack.c.h.b16 %v246
    %v895 = vunpack.c.l.b16 %v247
    %v896 = vunpack.c.h.b16 %v247
    %v897 = vunpack.c.l.b16 %v248
    %v898 = vunpack.c.h.b16 %v248
    %v899 = vunpack.c.l.b16 %v249
    %v900 = vunpack.c.h.b16 %v249
    %v901 = vunpack.c.l.b16 %v250
    %v902 = vunpack.c.h.b16 %v250
    %v903 = vunpack.c.l.b16 %v251
    %v904 = vunpack.c.h.b16 %v251
    %v905 = vunpack.c.l.b16 %v252
    %v906 = vunpack.c.h.b16 %v252
    %v907 = vunpack.c.l.b16 %v253
    %v908 = vunpack.c.h.b16 %v253
    %v909 = vunpack.c.l.b16 %v254
    %v910 = vunpack.c.h.b16 %v254
    %v911 = vunpack.c.l.b16 %v255
    %v912 = vunpack.c.h.b16 %v255
    %v913 = vunpack.c.l.b16 %v256
    %v914 = vunpack.c.h.b16 %v256
    %v915 = vunpack.c.l.b16 %v257
    %v916 = vunpack.c.h.b16 %v257
    %v917 = vunpack.c.l.b16 %v258
    %v918 = vunpack.c.h.b16 %v258
    %v919 = vunpack.c.l.b16 %v259
    %v920 = vunpack.c.h.b16 %v259
    %v921 = vunpack.c.l.b16 %v260
    %v922 = vunpack.c.h.b16 %v260
    %v923 = vunpack.c.l.b16 %v261
    %v924 = vunpack.c.h.b16 %v261
    %v925 = vunpack.c.l.b16 %v262
    %v926 = vunpack.c.h.b16 %v262
    %v927 = vunpack.c.l.b16 %v263
    %v928 = vunpack.c.h.b16 %v263
    %v929 = vunpack.c.l.b16 %v264
    %v930 = vunpack.c.h.b16 %v264
    %v931 = vunpack.c.l.b16 %v265
    %v932 = vunpack.c.h.b16 %v265
    %v933 = vunpack.c.l.b16 %v266
    %v934 = vunpack.c.h.b16 %v266
    %v935 = vunpack.c.l.b16 %v267
    %v936 = vunpack.c.h.b16 %v267
    %v937 = vunpack.c.l.b16 %v268
    %v938 = vunpack.c.h.b16 %v268
    %v939 = vunpack.c.l.b16 %v269
    %v940 = vunpack.c.h.b16 %v269
    %v941 = vunpack.c.l.b16 %v270
    %v942 = vunpack.c.h.b16 %v270
    %v943 = vunpack.c.l.b16 %v271
    %v944 = vunpack.c.h.b16 %v271
    %v945 = vunpack.c.l.b16 %v272
    %v946 = vunpack.c.h.b16 %v272
    %v947 = vunpack.c.l.b16 %v273
    %v948 = vunpack.c.h.b16 %v273
    %v949 = vunpack.c.l.b16 %v274
    %v950 = vunpack.c.h.b16 %v274
    %v951 = vunpack.c.l.b16 %v275
    %v952 = vunpack.c.h.b16 %v275
    %v953 = vunpack.c.l.b16 %v276
    %v954 = vunpack.c.h.b16 %v276
    %v955 = vunpack.c.l.b16 %v277
    %v956 = vunpack.c.h.b16 %v277
    %v957 = vunpack.c.l.b16 %v278
    %v958 = vunpack.c.h.b16 %v278
    %v959 = vunpack.c.l.b16 %v279
    %v960 = vunpack.c.h.b16 %v279
    %v961 = vunpack.c.l.b16 %v280
    %v962 = vunpack.c.h.b16 %v280
    %v963 = vunpack.c.l.b16 %v281
    %v964 = vunpack.c.h.b16 %v281
    %v965 = vunpack.c.l.b16 %v282
    %v966 = vunpack.c.h.b16 %v282
    %v967 = vunpack.c.l.b16 %v283
    %v968 = vunpack.c.h.b16 %v283
    %v969 = vunpack.c.l.b16 %v284
    %v970 = vunpack.c.h.b16 %v284
    %v971 = vunpack.c.l.b16 %v285
    %v972 = vunpack.c.h.b16 %v285
    %v973 = vunpack.c.l.b16 %v286
    %v974 = vunpack.c.h.b16 %v286
    %v975 = vunpack.c.l.b16 %v287
    %v976 = vunpack.c.h.b16 %v287
    %v977 = vunpack.c.l.b16 %v288
    %v978 = vunpack.c.h.b16 %v288
    %v979 = vunpack.c.l.b16 %v289
    %v980 = vunpack.c.h.b16 %v289
    %v981 = vunpack.c.l.b16 %v290
    %v982 = vunpack.c.h.b16 %v290
    %v983 = vunpack.c.l.b16 %v291
    %v984 = vunpack.c.h.b16 %v291
    %v985 = vunpack.c.l.b16 %v292
    %v986 = vunpack.c.h.b16 %v292
    %v987 = vunpack.c.l.b16 %v293
    %v988 = vunpack.c.h.b16 %v293
    %v989 = vunpack.c.l.b16 %v294
    %v990 = vunpack.c.h.b16 %v294
    %v991 = vunpack.c.l.b16 %v295
    %v992 = vunpack.c.h.b16 %v295
    %v993 = vunpack.c.l.b16 %v296
    %v994 = vunpack.c.h.b16 %v296
    %v995 = vunpack.c.l.b16 %v297
    %v996 = vunpack.c.h.b16 %v297
    %v997 = vunpack.c.l.b16 %v298
    %v998 = vunpack.c.h.b16 %v298
    %v999 = vunpack.c.l.b16 %v299
    %v1000 = vunpack.c.h.b16 %v299
    %v1001 = vunpack.c.l.b16 %v300
    %v1002 = vunpack.c.h.b16 %v300
    %v1003 = vunpack.c.l.b16 %v301
    %v1004 = vunpack.c.h.b16 %v301
    %v1005 = vunpack.c.l.b16 %v302
    %v1006 = vunpack.c.h.b16 %v302
    %v1007 = vunpack.c.l.b16 %v303
    %v1008 = vunpack.c.h.b16 %v303
    %v1009 = vunpack.c.l.b16 %v304
    %v1010 = vunpack.c.h.b16 %v304
    %v1011 = vunpack.c.l.b16 %v305
    %v1012 = vunpack.c.h.b16 %v305
    %v1013 = vunpack.c.l.b16 %v306
    %v1014 = vunpack.c.h.b16 %v306
    %v1015 = vunpack.c.l.b16 %v307
    %v1016 = vunpack.c.h.b16 %v307
    %v1017 = vunpack.c.l.b16 %v308
    %v1018 = vunpack.c.h.b16 %v308
    %v1019 = vunpack.c.l.b16 %v309
    %v1020 = vunpack.c.h.b16 %v309
    %v1021 = vunpack.c.l.b16 %v310
    %v1022 = vunpack.c.h.b16 %v310
    %v1023 = vunpack.c.l.b16 %v311
    %v1024 = vunpack.c.h.b16 %v311
    %v1025 = vunpack.c.l.b16 %v312
    %v1026 = vunpack.c.h.b16 %v312
    %v1027 = vunpack.c.l.b16 %v313
    %v1028 = vunpack.c.h.b16 %v313
    %v1029 = vunpack.c.l.b16 %v314
    %v1030 = vunpack.c.h.b16 %v314
    %v1031 = vunpack.c.l.b16 %v315
    %v1032 = vunpack.c.h.b16 %v315
    %v1033 = vunpack.c.l.b16 %v316
    %v1034 = vunpack.c.h.b16 %v316
    %v1035 = vunpack.c.l.b16 %v317
    %v1036 = vunpack.c.h.b16 %v317
    %v1037 = vunpack.c.l.b16 %v318
    %v1038 = vunpack.c.h.b16 %v318
    %v1039 = vunpack.c.l.b16 %v319
    %v1040 = vunpack.c.h.b16 %v319
    %v1041 = vunpack.c.l.b16 %v320
    %v1042 = vunpack.c.h.b16 %v320
    %v1043 = vunpack.c.l.b16 %v321
    %v1044 = vunpack.c.h.b16 %v321
    %v1045 = vunpack.c.l.b16 %v322
    %v1046 = vunpack.c.h.b16 %v322
    %v1047 = vunpack.c.l.b16 %v323
    %v1048 = vunpack.c.h.b16 %v323
    %v1049 = vunpack.c.l.b16 %v324
    %v1050 = vunpack.c.h.b16 %v324
    %v1051 = vunpack.c.l.b16 %v325
    %v1052 = vunpack.c.h.b16 %v325
    %v1053 = vunpack.c.l.b16 %v326
    %v1054 = vunpack.c.h.b16 %v326
    %v1055 = vunpack.c.l.b16 %v327
    %v1056 = vunpack.c.h.b16 %v327
    %v1057 = vunpack.c.l.b16 %v328
    %v1058 = vunpack.c.h.b16 %v328
    %v1059 = vunpack.c.l.b16 %v329
    %v1060 = vunpack.c.h.b16 %v329
    %v1061 = vunpack.c.l.b16 %v330
    %v1062 = vunpack.c.h.b16 %v330
    %v1063 = vunpack.c.l.b16 %v331
    %v1064 = vunpack.c.h.b16 %v331
    %v1065 = vunpack.c.l.b16 %v332
    %v1066 = vunpack.c.h.b16 %v332
    %v1067 = vunpack.c.l.b16 %v333
    %v1068 = vunpack.c.h.b16 %v333
    %v1069 = vunpack.c.l.b16 %v334
    %v1070 = vunpack.c.h.b16 %v334
    %v1071 = vunpack.c.l.b16 %v335
    %v1072 = vunpack.c.h.b16 %v335
    %v1073 = vunpack.c.l.b16 %v336
    %v1074 = vunpack.c.h.b16 %v336
    %v1075 = vunpack.c.l.b16 %v337
    %v1076 = vunpack.c.h.b16 %v337
    %v1077 = vunpack.c.l.b16 %v338
    %v1078 = vunpack.c.h.b16 %v338
    %v1079 = vunpack.c.l.b16 %v339
    %v1080 = vunpack.c.h.b16 %v339
    %v1081 = vunpack.c.l.b16 %v340
    %v1082 = vunpack.c.h.b16 %v340
    %v1083 = vunpack.c.l.b16 %v341
    %v1084 = vunpack.c.h.b16 %v341
    %v1085 = vunpack.c.l.b16 %v342
    %v1086 = vunpack.c.h.b16 %v342
    %v1087 = vunpack.c.l.b16 %v343
    %v1088 = vunpack.c.h.b16 %v343
    %v1089 = vunpack.c.l.b16 %v344
    %v1090 = vunpack.c.h.b16 %v344
    %v1091 = vunpack.c.l.b16 %v345
    %v1092 = vunpack.c.h.b16 %v345
    %v1093 = vunpack.c.l.b16 %v346
    %v1094 = vunpack.c.h.b16 %v346
    %v1095 = vunpack.c.l.b16 %v347
    %v1096 = vunpack.c.h.b16 %v347
    %v1097 = vunpack.c.l.b16 %v348
    %v1098 = vunpack.c.h.b16 %v348
    %v1099 = vunpack.c.l.b16 %v349
    %v1100 = vunpack.c.h.b16 %v349
    %v1101 = vunpack.c.l.b16 %v350
    %v1102 = vunpack.c.h.b16 %v350
    %v1103 = vunpack.c.l.b16 %v351
    %v1104 = vunpack.c.h.b16 %v351
    %v1105 = vunpack.c.l.b16 %v352
    %v1106 = vunpack.c.h.b16 %v352
    %v1107 = vunpack.c.l.b16 %v353
    %v1108 = vunpack.c.h.b16 %v353
    %v1109 = vunpack.c.l.b16 %v354
    %v1110 = vunpack.c.h.b16 %v354
    %v1111 = vunpack.c.l.b16 %v355
    %v1112 = vunpack.c.h.b16 %v355
    %v1113 = vunpack.c.l.b16 %v356
    %v1114 = vunpack.c.h.b16 %v356
    %v1115 = vunpack.c.l.b16 %v357
    %v1116 = vunpack.c.h.b16 %v357
    %v1117 = vunpack.c.l.b16 %v358
    %v1118 = vunpack.c.h.b16 %v358
    %v1119 = vunpack.c.l.b16 %v359
    %v1120 = vunpack.c.h.b16 %v359
    %v1121 = vunpack.c.l.b16 %v360
    %v1122 = vunpack.c.h.b16 %v360
    %v1123 = vunpack.c.l.b16 %v361
    %v1124 = vunpack.c.h.b16 %v361
    %v1125 = vunpack.c.l.b16 %v362
    %v1126 = vunpack.c.h.b16 %v362
    %v1127 = vunpack.c.l.b16 %v363
    %v1128 = vunpack.c.h.b16 %v363
    %v1129 = vunpack.c.l.b16 %v364
    %v1130 = vunpack.c.h.b16 %v364
    %v1131 = vunpack.c.l.b16 %v365
    %v1132 = vunpack.c.h.b16 %v365
    %v1133 = vunpack.c.l.b16 %v366
    %v1134 = vunpack.c.h.b16 %v366
    %v1135 = vunpack.c.l.b16 %v367
    %v1136 = vunpack.c.h.b16 %v367
    %v1137 = vunpack.c.l.b16 %v368
    %v1138 = vunpack.c.h.b16 %v368
    %v1139 = vunpack.c.l.b16 %v369
    %v1140 = vunpack.c.h.b16 %v369
    %v1141 = vunpack.c.l.b16 %v370
    %v1142 = vunpack.c.h.b16 %v370
    %v1143 = vunpack.c.l.b16 %v371
    %v1144 = vunpack.c.h.b16 %v371
    %v1145 = vunpack.c.l.b16 %v372
    %v1146 = vunpack.c.h.b16 %v372
    %v1147 = vunpack.c.l.b16 %v373
    %v1148 = vunpack.c.h.b16 %v373
    %v1149 = vunpack.c.l.b16 %v374
    %v1150 = vunpack.c.h.b16 %v374
    %v1151 = vunpack.c.l.b16 %v375
    %v1152 = vunpack.c.h.b16 %v375
    %v1153 = vunpack.c.l.b16 %v376
    %v1154 = vunpack.c.h.b16 %v376
    %v1155 = vunpack.c.l.b16 %v377
    %v1156 = vunpack.c.h.b16 %v377
    %v1157 = vunpack.c.l.b16 %v378
    %v1158 = vunpack.c.h.b16 %v378
    %v1159 = vunpack.c.l.b16 %v379
    %v1160 = vunpack.c.h.b16 %v379
    %v1161 = vunpack.c.l.b16 %v380
    %v1162 = vunpack.c.h.b16 %v380
    %v1163 = vunpack.c.l.b16 %v381
    %v1164 = vunpack.c.h.b16 %v381
    %v1165 = vunpack.c.l.b16 %v382
    %v1166 = vunpack.c.h.b16 %v382
    %v1167 = vunpack.c.l.b16 %v383
    %v1168 = vunpack.c.h.b16 %v383
    %v1169 = vunpack.c.l.b16 %v384
    %v1170 = vunpack.c.h.b16 %v384
    %v1171 = vunpack.c.l.b16 %v385
    %v1172 = vunpack.c.h.b16 %v385
    %v1173 = vunpack.c.l.b16 %v386
    %v1174 = vunpack.c.h.b16 %v386
    %v1175 = vunpack.c.l.b16 %v387
    %v1176 = vunpack.c.h.b16 %v387
    %v1177 = vunpack.c.l.b16 %v388
    %v1178 = vunpack.c.h.b16 %v388
    %v1179 = vpack.c.b16 %v671, %v667
    %v1180 = vpack.c.b16 %v672, %v668
    %v1181 = vpack.c.b16 %v673, %v669
    %v1182 = vpack.c.b16 %v674, %v670
    %v1183 = vpack.c.b16 %v679, %v675
    %v1184 = vpack.c.b16 %v680, %v676
    %v1185 = vpack.c.b16 %v681, %v677
    %v1186 = vpack.c.b16 %v682, %v678
    %v1187 = vpack.c.b16 %v687, %v683
    %v1188 = vpack.c.b16 %v688, %v684
    %v1189 = vpack.c.b16 %v689, %v685
    %v1190 = vpack.c.b16 %v690, %v686
    %v1191 = vpack.c.b16 %v695, %v691
    %v1192 = vpack.c.b16 %v696, %v692
    %v1193 = vpack.c.b16 %v697, %v693
    %v1194 = vpack.c.b16 %v698, %v694
    %v1195 = vpack.c.b16 %v703, %v699
    %v1196 = vpack.c.b16 %v704, %v700
    %v1197 = vpack.c.b16 %v705, %v701
    %v1198 = vpack.c.b16 %v706, %v702
    %v1199 = vpack.c.b16 %v711, %v707
    %v1200 = vpack.c.b16 %v712, %v708
    %v1201 = vpack.c.b16 %v713, %v709
    %v1202 = vpack.c.b16 %v714, %v710
    %v1203 = vpack.c.b16 %v719, %v715
    %v1204 = vpack.c.b16 %v720, %v716
    %v1205 = vpack.c.b16 %v721, %v717
    %v1206 = vpack.c.b16 %v722, %v718
    %v1207 = vpack.c.b16 %v727, %v723
    %v1208 = vpack.c.b16 %v728, %v724
    %v1209 = vpack.c.b16 %v729, %v725
    %v1210 = vpack.c.b16 %v730, %v726
    %v1211 = vpack.c.b16 %v735, %v731
    %v1212 = vpack.c.b16 %v736, %v732
    %v1213 = vpack.c.b16 %v737, %v733
    %v1214 = vpack.c.b16 %v738, %v734
    %v1215 = vpack.c.b16 %v743, %v739
    %v1216 = vpack.c.b16 %v744, %v740
    %v1217 = vpack.c.b16 %v745, %v741
    %v1218 = vpack.c.b16 %v746, %v742
    %v1219 = vpack.c.b16 %v751, %v747
    %v1220 = vpack.c.b16 %v752, %v748
    %v1221 = vpack.c.b16 %v753, %v749
    %v1222 = vpack.c.b16 %v754, %v750
    %v1223 = vpack.c.b16 %v759, %v755
    %v1224 = vpack.c.b16 %v760, %v756
    %v1225 = vpack.c.b16 %v761, %v757
    %v1226 = vpack.c.b16 %v762, %v758
    %v1227 = vpack.c.b16 %v767, %v763
    %v1228 = vpack.c.b16 %v768, %v764
    %v1229 = vpack.c.b16 %v769, %v765
    %v1230 = vpack.c.b16 %v770, %v766
    %v1231 = vpack.c.b16 %v775, %v771
    %v1232 = vpack.c.b16 %v776, %v772
    %v1233 = vpack.c.b16 %v777, %v773
    %v1234 = vpack.c.b16 %v778, %v774
    %v1235 = vpack.c.b16 %v783, %v779
    %v1236 = vpack.c.b16 %v784, %v780
    %v1237 = vpack.c.b16 %v785, %v781
    %v1238 = vpack.c.b16 %v786, %v782
    %v1239 = vpack.c.b16 %v791, %v787
    %v1240 = vpack.c.b16 %v792, %v788
    %v1241 = vpack.c.b16 %v793, %v789
    %v1242 = vpack.c.b16 %v794, %v790
    %v1243 = vpack.c.b16 %v799, %v795
    %v1244 = vpack.c.b16 %v800, %v796
    %v1245 = vpack.c.b16 %v801, %v797
    %v1246 = vpack.c.b16 %v802, %v798
    %v1247 = vpack.c.b16 %v807, %v803
    %v1248 = vpack.c.b16 %v808, %v804
    %v1249 = vpack.c.b16 %v809, %v805
    %v1250 = vpack.c.b16 %v810, %v806
    %v1251 = vpack.c.b16 %v815, %v811
    %v1252 = vpack.c.b16 %v816, %v812
    %v1253 = vpack.c.b16 %v817, %v813
    %v1254 = vpack.c.b16 %v818, %v814
    %v1255 = vpack.c.b16 %v823, %v819
    %v1256 = vpack.c.b16 %v824, %v820
    %v1257 = vpack.c.b16 %v825, %v821
    %v1258 = vpack.c.b16 %v826, %v822
    %v1259 = vpack.c.b16 %v831, %v827
    %v1260 = vpack.c.b16 %v832, %v828
    %v1261 = vpack.c.b16 %v833, %v829
    %v1262 = vpack.c.b16 %v834, %v830
    %v1263 = vpack.c.b16 %v839, %v835
    %v1264 = vpack.c.b16 %v840, %v836
    %v1265 = vpack.c.b16 %v841, %v837
    %v1266 = vpack.c.b16 %v842, %v838
    %v1267 = vpack.c.b16 %v847, %v843
    %v1268 = vpack.c.b16 %v848, %v844
    %v1269 = vpack.c.b16 %v849, %v845
    %v1270 = vpack.c.b16 %v850, %v846
    %v1271 = vpack.c.b16 %v855, %v851
    %v1272 = vpack.c.b16 %v856, %v852
    %v1273 = vpack.c.b16 %v857, %v853
    %v1274 = vpack.c.b16 %v858, %v854
    %v1275 = vpack.c.b16 %v863, %v859
    %v1276 = vpack.c.b16 %v864, %v860
    %v1277 = vpack.c.b16 %v865, %v861
    %v1278 = vpack.c.b16 %v866, %v862
    %v1279 = vpack.c.b16 %v871, %v867
    %v1280 = vpack.c.b16 %v872, %v868
    %v1281 = vpack.c.b16 %v873, %v869
    %v1282 = vpack.c.b16 %v874, %v870
    %v1283 = vpack.c.b16 %v879, %v875
    %v1284 = vpack.c.b16 %v880, %v876
    %v1285 = vpack.c.b16 %v881, %v877
    %v1286 = vpack.c.b16 %v882, %v878
    %v1287 = vpack.c.b16 %v887, %v883
    %v1288 = vpack.c.b16 %v888, %v884
    %v1289 = vpack.c.b16 %v889, %v885
    %v1290 = vpack.c.b16 %v890, %v886
    %v1291 = vpack.c.b16 %v895, %v891
    %v1292 = vpack.c.b16 %v896, %v892
    %v1293 = vpack.c.b16 %v897, %v893
    %v1294 = vpack.c.b16 %v898, %v894
    %v1295 = vpack.c.b16 %v903, %v899
    %v1296 = vpack.c.b16 %v904, %v900
    %v1297 = vpack.c.b16 %v905, %v901
    %v1298 = vpack.c.b16 %v906, %v902
    %v1299 = vpack.c.b16 %v911, %v907
    %v1300 = vpack.c.b16 %v912, %v908
    %v1301 = vpack.c.b16 %v913, %v909
    %v1302 = vpack.c.b16 %v914, %v910
    %v1303 = vpack.c.b16 %v919, %v915
    %v1304 = vpack.c.b16 %v920, %v916
    %v1305 = vpack.c.b16 %v921, %v917
    %v1306 = vpack.c.b16 %v922, %v918
    %v1307 = vpack.c.b16 %v927, %v923
    %v1308 = vpack.c.b16 %v928, %v924
    %v1309 = vpack.c.b16 %v929, %v925
    %v1310 = vpack.c.b16 %v930, %v926
    %v1311 = vpack.c.b16 %v935, %v931
    %v1312 = vpack.c.b16 %v936, %v932
    %v1313 = vpack.c.b16 %v937, %v933
    %v1314 = vpack.c.b16 %v938, %v934
    %v1315 = vpack.c.b16 %v943, %v939
    %v1316 = vpack.c.b16 %v944, %v940
    %v1317 = vpack.c.b16 %v945, %v941
    %v1318 = vpack.c.b16 %v946, %v942
    %v1319 = vpack.c.b16 %v951, %v947
    %v1320 = vpack.c.b16 %v952, %v948
    %v1321 = vpack.c.b16 %v953, %v949
    %v1322 = vpack.c.b16 %v954, %v950
    %v1323 = vpack.c.b16 %v959, %v955
    %v1324 = vpack.c.b16 %v960, %v956
    %v1325 = vpack.c.b16 %v961, %v957
    %v1326 = vpack.c.b16 %v962, %v958
    %v1327 = vpack.c.b16 %v967, %v963
    %v1328 = vpack.c.b16 %v968, %v964
    %v1329 = vpack.c.b16 %v969, %v965
    %v1330 = vpack.c.b16 %v970, %v966
    %v1331 = vpack.c.b16 %v975, %v971
    %v1332 = vpack.c.b16 %v976, %v972
    %v1333 = vpack.c.b16 %v977, %v973
    %v1334 = vpack.c.b16 %v978, %v974
    %v1335 = vpack.c.b16 %v983, %v979
    %v1336 = vpack.c.b16 %v984, %v980
    %v1337 = vpack.c.b16 %v985, %v981
    %v1338 = vpack.c.b16 %v986, %v982
    %v1339 = vpack.c.b16 %v991, %v987
    %v1340 = vpack.c.b16 %v992, %v988
    %v1341 = vpack.c.b16 %v993, %v989
    %v1342 = vpack.c.b16 %v994, %v990
    %v1343 = vpack.c.b16 %v999, %v995
    %v1344 = vpack.c.b16 %v1000, %v996
    %v1345 = vpack.c.b16 %v1001, %v997
    %v1346 = vpack.c.b16 %v1002, %v998
    %v1347 = vpack.c.b16 %v1007, %v1003
    %v1348 = vpack.c.b16 %v1008, %v1004
    %v1349 = vpack.c.b16 %v1009, %v1005
    %v1350 = vpack.c.b16 %v1010, %v1006
    %v1351 = vpack.c.b16 %v1015, %v1011
    %v1352 = vpack.c.b16 %v1016, %v1012
    %v1353 = vpack.c.b16 %v1017, %v1013
    %v1354 = vpack.c.b16 %v1018, %v1014
    %v1355 = vpack.c.b16 %v1023, %v1019
    %v1356 = vpack.c.b16 %v1024, %v1020
    %v1357 = vpack.c.b16 %v1025, %v1021
    %v1358 = vpack.c.b16 %v1026, %v1022
    %v1359 = vpack.c.b16 %v1031, %v1027
    %v1360 = vpack.c.b16 %v1032, %v1028
    %v1361 = vpack.c.b16 %v1033, %v1029
    %v1362 = vpack.c.b16 %v1034, %v1030
    %v1363 = vpack.c.b16 %v1039, %v1035
    %v1364 = vpack.c.b16 %v1040, %v1036
    %v1365 = vpack.c.b16 %v1041, %v1037
    %v1366 = vpack.c.b16 %v1042, %v1038
    %v1367 = vpack.c.b16 %v1047, %v1043
    %v1368 = vpack.c.b16 %v1048, %v1044
    %v1369 = vpack.c.b16 %v1049, %v1045
    %v1370 = vpack.c.b16 %v1050, %v1046
    %v1371 = vpack.c.b16 %v1055, %v1051
    %v1372 = vpack.c.b16 %v1056, %v1052
    %v1373 = vpack.c.b16 %v1057, %v1053
    %v1374 = vpack.c.b16 %v1058, %v1054
    %v1375 = vpack.c.b16 %v1063, %v1059
    %v1376 = vpack.c.b16 %v1064, %v1060
    %v1377 = vpack.c.b16 %v1065, %v1061
    %v1378 = vpack.c.b16 %v1066, %v1062
    %v1379 = vpack.c.b16 %v1071, %v1067
    %v1380 = vpack.c.b16 %v1072, %v1068
    %v1381 = vpack.c.b16 %v1073, %v1069
    %v1382 = vpack.c.b16 %v1074, %v1070
    %v1383 = vpack.c.b16 %v1079, %v1075
    %v1384 = vpack.c.b16 %v1080, %v1076
    %v1385 = vpack.c.b16 %v1081, %v1077
    %v1386 = vpack.c.b16 %v1082, %v1078
    %v1387 = vpack.c.b16 %v1087, %v1083
    %v1388 = vpack.c.b16 %v1088, %v1084
    %v1389 = vpack.c.b16 %v1089, %v1085
    %v1390 = vpack.c.b16 %v1090, %v1086
    %v1391 = vpack.c.b16 %v1095, %v1091
    %v1392 = vpack.c.b16 %v1096, %v1092
    %v1393 = vpack.c.b16 %v1097, %v1093
    %v1394 = vpack.c.b16 %v1098, %v1094
    %v1395 = vpack.c.b16 %v1103, %v1099
    %v1396 = vpack.c.b16 %v1104, %v1100
    %v1397 = vpack.c.b16 %v1105, %v1101
    %v1398 = vpack.c.b16 %v1106, %v1102
    %v1399 = vpack.c.b16 %v1111, %v1107
    %v1400 = vpack.c.b16 %v1112, %v1108
    %v1401 = vpack.c.b16 %v1113, %v1109
    %v1402 = vpack.c.b16 %v1114, %v1110
    %v1403 = vpack.c.b16 %v1119, %v1115
    %v1404 = vpack.c.b16 %v1120, %v1116
    %v1405 = vpack.c.b16 %v1121, %v1117
    %v1406 = vpack.c.b16 %v1122, %v1118
    %v1407 = vpack.c.b16 %v1127, %v1123
    %v1408 = vpack.c.b16 %v1128, %v1124
    %v1409 = vpack.c.b16 %v1129, %v1125
    %v1410 = vpack.c.b16 %v1130, %v1126
    %v1411 = vpack.c.b16 %v1135, %v1131
    %v1412 = vpack.c.b16 %v1136, %v1132
    %v1413 = vpack.c.b16 %v1137, %v1133
    %v1414 = vpack.c.b16 %v1138, %v1134
    %v1415 = vpack.c.b16 %v1143, %v1139
    %v1416 = vpack.c.b16 %v1144, %v1140
    %v1417 = vpack.c.b16 %v1145, %v1141
    %v1418 = vpack.c.b16 %v1146, %v1142
    %v1419 = vpack.c.b16 %v1151, %v1147
    %v1420 = vpack.c.b16 %v1152, %v1148
    %v1421 = vpack.c.b16 %v1153, %v1149
    %v1422 = vpack.c.b16 %v1154, %v1150
    %v1423 = vpack.c.b16 %v1159, %v1155
    %v1424 = vpack.c.b16 %v1160, %v1156
    %v1425 = vpack.c.b16 %v1161, %v1157
    %v1426 = vpack.c.b16 %v1162, %v1158
    %v1427 = vpack.c.b16 %v1167, %v1163
    %v1428 = vpack.c.b16 %v1168, %v1164
    %v1429 = vpack.c.b16 %v1169, %v1165
    %v1430 = vpack.c.b16 %v1170, %v1166
    %v1431 = vpack.c.b16 %v1175, %v1171
    %v1432 = vpack.c.b16 %v1176, %v1172
    %v1433 = vpack.c.b16 %v1177, %v1173
    %v1434 = vpack.c.b16 %v1178, %v1174
    %1691 = vmatprep.subr.bf16.mxu0 %v1180
    %1692 = vmatpush1.bf16.msra.mxu0 %v1179
    %1693 = vmatprep.subr.bf16.mxu0 %v1184
    %1694 = vmatpush1.bf16.msra.mxu0 %v1183
    %1695 = vmatprep.subr.bf16.mxu0 %v1188
    %1696 = vmatpush1.bf16.msra.mxu0 %v1187
    %1697 = vmatprep.subr.bf16.mxu0 %v1192
    %1698 = vmatpush1.bf16.msra.mxu0 %v1191
    %1699 = vmatprep.subr.bf16.mxu0 %v1196
    %1700 = vmatpush1.bf16.msra.mxu0 %v1195
    %1701 = vmatprep.subr.bf16.mxu0 %v1200
    %1702 = vmatpush1.bf16.msra.mxu0 %v1199
    %1703 = vmatprep.subr.bf16.mxu0 %v1204
    %1704 = vmatpush1.bf16.msra.mxu0 %v1203
    %1705 = vmatprep.subr.bf16.mxu0 %v1208
    %1706 = vmatpush1.bf16.msra.mxu0 %v1207
    %1707 = vmatprep.subr.bf16.mxu0 %v1212
    %1708 = vmatpush1.bf16.msra.mxu0 %v1211
    %1709 = vmatprep.subr.bf16.mxu0 %v1216
    %1710 = vmatpush1.bf16.msra.mxu0 %v1215
    %1711 = vmatprep.subr.bf16.mxu0 %v1220
    %1712 = vmatpush1.bf16.msra.mxu0 %v1219
    %1713 = vmatprep.subr.bf16.mxu0 %v1224
    %1714 = vmatpush1.bf16.msra.mxu0 %v1223
    %1715 = vmatprep.subr.bf16.mxu0 %v1228
    %1716 = vmatpush1.bf16.msra.mxu0 %v1227
    %1717 = vmatprep.subr.bf16.mxu0 %v1232
    %1718 = vmatpush1.bf16.msra.mxu0 %v1231
    %1719 = vmatprep.subr.bf16.mxu0 %v1236
    %1720 = vmatpush1.bf16.msra.mxu0 %v1235
    %1721 = vmatprep.subr.bf16.mxu0 %v1240
    %1722 = vmatpush1.bf16.msra.mxu0 %v1239
    %1723 = vmatprep.mubr.bf16.mxu0 %v126
    %1724 = vmatmul.mubr.bf16.gmra.mrb[0].mxu0 %v125
    %v1725 = vpop.f32.mrb[0].mxu0
    %v1726 = vadd.f32 %v394, %v1725
    %v1727 = vpop.f32.mrb[0].mxu0
    %v1728 = vadd.f32 %v398, %v1727
    %v1729 = vpop.f32.mrb[0].mxu0
    %v1730 = vpop.f32.mrb[0].mxu0
    %1731 = vdwg.mxu0
    %1732 = vmatprep.subr.bf16.mxu0 %v1244
    %1733 = vmatpush1.bf16.msra.mxu0 %v1243
    %1734 = vmatprep.subr.bf16.mxu0 %v1248
    %1735 = vmatpush1.bf16.msra.mxu0 %v1247
    %1736 = vmatprep.subr.bf16.mxu0 %v1252
    %1737 = vmatpush1.bf16.msra.mxu0 %v1251
    %1738 = vmatprep.subr.bf16.mxu0 %v1256
    %1739 = vmatpush1.bf16.msra.mxu0 %v1255
    %1740 = vmatprep.subr.bf16.mxu0 %v1260
    %1741 = vmatpush1.bf16.msra.mxu0 %v1259
    %1742 = vmatprep.subr.bf16.mxu0 %v1264
    %1743 = vmatpush1.bf16.msra.mxu0 %v1263
    %1744 = vmatprep.subr.bf16.mxu0 %v1268
    %1745 = vmatpush1.bf16.msra.mxu0 %v1267
    %1746 = vmatprep.subr.bf16.mxu0 %v1272
    %1747 = vmatpush1.bf16.msra.mxu0 %v1271
    %1748 = vmatprep.subr.bf16.mxu0 %v1276
    %1749 = vmatpush1.bf16.msra.mxu0 %v1275
    %1750 = vmatprep.subr.bf16.mxu0 %v1280
    %1751 = vmatpush1.bf16.msra.mxu0 %v1279
    %1752 = vmatprep.subr.bf16.mxu0 %v1284
    %1753 = vmatpush1.bf16.msra.mxu0 %v1283
    %1754 = vmatprep.subr.bf16.mxu0 %v1288
    %1755 = vmatpush1.bf16.msra.mxu0 %v1287
    %1756 = vmatprep.subr.bf16.mxu0 %v1292
    %1757 = vmatpush1.bf16.msra.mxu0 %v1291
    %1758 = vmatprep.subr.bf16.mxu0 %v1296
    %1759 = vmatpush1.bf16.msra.mxu0 %v1295
    %1760 = vmatprep.subr.bf16.mxu0 %v1300
    %1761 = vmatpush1.bf16.msra.mxu0 %v1299
    %1762 = vmatprep.subr.bf16.mxu0 %v1304
    %1763 = vmatpush1.bf16.msra.mxu0 %v1303
    %1764 = vmatprep.mubr.bf16.mxu0 %v128
    %1765 = vmatmul.mubr.bf16.gmra.mrb[0].mxu0 %v127
    %v1766 = vpop.f32.mrb[0].mxu0
    %v1767 = vadd.f32 %v1726, %v1766
    %v1768 = vpop.f32.mrb[0].mxu0
    %v1769 = vadd.f32 %v1728, %v1768
    %v1770 = vpop.f32.mrb[0].mxu0
    %v1771 = vpop.f32.mrb[0].mxu0
    %1772 = vdwg.mxu0
    %1773 = vmatprep.subr.bf16.mxu0 %v1308
    %1774 = vmatpush1.bf16.msra.mxu0 %v1307
    %1775 = vmatprep.subr.bf16.mxu0 %v1312
    %1776 = vmatpush1.bf16.msra.mxu0 %v1311
    %1777 = vmatprep.subr.bf16.mxu0 %v1316
    %1778 = vmatpush1.bf16.msra.mxu0 %v1315
    %1779 = vmatprep.subr.bf16.mxu0 %v1320
    %1780 = vmatpush1.bf16.msra.mxu0 %v1319
    %1781 = vmatprep.subr.bf16.mxu0 %v1324
    %1782 = vmatpush1.bf16.msra.mxu0 %v1323
    %1783 = vmatprep.subr.bf16.mxu0 %v1328
    %1784 = vmatpush1.bf16.msra.mxu0 %v1327
    %1785 = vmatprep.subr.bf16.mxu0 %v1332
    %1786 = vmatpush1.bf16.msra.mxu0 %v1331
    %1787 = vmatprep.subr.bf16.mxu0 %v1336
    %1788 = vmatpush1.bf16.msra.mxu0 %v1335
    %1789 = vmatprep.subr.bf16.mxu0 %v1340
    %1790 = vmatpush1.bf16.msra.mxu0 %v1339
    %1791 = vmatprep.subr.bf16.mxu0 %v1344
    %1792 = vmatpush1.bf16.msra.mxu0 %v1343
    %1793 = vmatprep.subr.bf16.mxu0 %v1348
    %1794 = vmatpush1.bf16.msra.mxu0 %v1347
    %1795 = vmatprep.subr.bf16.mxu0 %v1352
    %1796 = vmatpush1.bf16.msra.mxu0 %v1351
    %1797 = vmatprep.subr.bf16.mxu0 %v1356
    %1798 = vmatpush1.bf16.msra.mxu0 %v1355
    %1799 = vmatprep.subr.bf16.mxu0 %v1360
    %1800 = vmatpush1.bf16.msra.mxu0 %v1359
    %1801 = vmatprep.subr.bf16.mxu0 %v1364
    %1802 = vmatpush1.bf16.msra.mxu0 %v1363
    %1803 = vmatprep.subr.bf16.mxu0 %v1368
    %1804 = vmatpush1.bf16.msra.mxu0 %v1367
    %1805 = vmatprep.mubr.bf16.mxu0 %v130
    %1806 = vmatmul.mubr.bf16.gmra.mrb[0].mxu0 %v129
    %v1807 = vpop.f32.mrb[0].mxu0
    %v1808 = vadd.f32 %v1767, %v1807
    %v1809 = vpop.f32.mrb[0].mxu0
    %v1810 = vadd.f32 %v1769, %v1809
    %v1811 = vpop.f32.mrb[0].mxu0
    %v1812 = vpop.f32.mrb[0].mxu0
    %1813 = vdwg.mxu0
    %1814 = vmatprep.subr.bf16.mxu0 %v1372
    %1815 = vmatpush1.bf16.msra.mxu0 %v1371
    %1816 = vmatprep.subr.bf16.mxu0 %v1376
    %1817 = vmatpush1.bf16.msra.mxu0 %v1375
    %1818 = vmatprep.subr.bf16.mxu0 %v1380
    %1819 = vmatpush1.bf16.msra.mxu0 %v1379
    %1820 = vmatprep.subr.bf16.mxu0 %v1384
    %1821 = vmatpush1.bf16.msra.mxu0 %v1383
    %1822 = vmatprep.subr.bf16.mxu0 %v1388
    %1823 = vmatpush1.bf16.msra.mxu0 %v1387
    %1824 = vmatprep.subr.bf16.mxu0 %v1392
    %1825 = vmatpush1.bf16.msra.mxu0 %v1391
    %1826 = vmatprep.subr.bf16.mxu0 %v1396
    %1827 = vmatpush1.bf16.msra.mxu0 %v1395
    %1828 = vmatprep.subr.bf16.mxu0 %v1400
    %1829 = vmatpush1.bf16.msra.mxu0 %v1399
    %1830 = vmatprep.subr.bf16.mxu0 %v1404
    %1831 = vmatpush1.bf16.msra.mxu0 %v1403
    %1832 = vmatprep.subr.bf16.mxu0 %v1408
    %1833 = vmatpush1.bf16.msra.mxu0 %v1407
    %1834 = vmatprep.subr.bf16.mxu0 %v1412
    %1835 = vmatpush1.bf16.msra.mxu0 %v1411
    %1836 = vmatprep.subr.bf16.mxu0 %v1416
    %1837 = vmatpush1.bf16.msra.mxu0 %v1415
    %1838 = vmatprep.subr.bf16.mxu0 %v1420
    %1839 = vmatpush1.bf16.msra.mxu0 %v1419
    %1840 = vmatprep.subr.bf16.mxu0 %v1424
    %1841 = vmatpush1.bf16.msra.mxu0 %v1423
    %1842 = vmatprep.subr.bf16.mxu0 %v1428
    %1843 = vmatpush1.bf16.msra.mxu0 %v1427
    %1844 = vmatprep.subr.bf16.mxu0 %v1432
    %1845 = vmatpush1.bf16.msra.mxu0 %v1431
    %1846 = vmatprep.mubr.bf16.mxu0 %v132
    %1847 = vmatmul.mubr.bf16.gmra.mrb[0].mxu0 %v131
    %v1848 = vpop.f32.mrb[0].mxu0
    %v1849 = vadd.f32 %v1808, %v1848
    %v1850 = vpop.f32.mrb[0].mxu0
    %v1851 = vadd.f32 %v1810, %v1850
    %v1852 = vpop.f32.mrb[0].mxu0
    %v1853 = vpop.f32.mrb[0].mxu0
    %1854 = vdwg.mxu0
    %1855 = vmatprep.subr.bf16.mxu0 %v1182
    %1856 = vmatpush1.bf16.msra.mxu0 %v1181
    %1857 = vmatprep.subr.bf16.mxu0 %v1186
    %1858 = vmatpush1.bf16.msra.mxu0 %v1185
    %1859 = vmatprep.subr.bf16.mxu0 %v1190
    %1860 = vmatpush1.bf16.msra.mxu0 %v1189
    %1861 = vmatprep.subr.bf16.mxu0 %v1194
    %1862 = vmatpush1.bf16.msra.mxu0 %v1193
    %1863 = vmatprep.subr.bf16.mxu0 %v1198
    %1864 = vmatpush1.bf16.msra.mxu0 %v1197
    %1865 = vmatprep.subr.bf16.mxu0 %v1202
    %1866 = vmatpush1.bf16.msra.mxu0 %v1201
    %1867 = vmatprep.subr.bf16.mxu0 %v1206
    %1868 = vmatpush1.bf16.msra.mxu0 %v1205
    %1869 = vmatprep.subr.bf16.mxu0 %v1210
    %1870 = vmatpush1.bf16.msra.mxu0 %v1209
    %1871 = vmatprep.subr.bf16.mxu0 %v1214
    %1872 = vmatpush1.bf16.msra.mxu0 %v1213
    %1873 = vmatprep.subr.bf16.mxu0 %v1218
    %1874 = vmatpush1.bf16.msra.mxu0 %v1217
    %1875 = vmatprep.subr.bf16.mxu0 %v1222
    %1876 = vmatpush1.bf16.msra.mxu0 %v1221
    %1877 = vmatprep.subr.bf16.mxu0 %v1226
    %1878 = vmatpush1.bf16.msra.mxu0 %v1225
    %1879 = vmatprep.subr.bf16.mxu0 %v1230
    %1880 = vmatpush1.bf16.msra.mxu0 %v1229
    %1881 = vmatprep.subr.bf16.mxu0 %v1234
    %1882 = vmatpush1.bf16.msra.mxu0 %v1233
    %1883 = vmatprep.subr.bf16.mxu0 %v1238
    %1884 = vmatpush1.bf16.msra.mxu0 %v1237
    %1885 = vmatprep.subr.bf16.mxu0 %v1242
    %1886 = vmatpush1.bf16.msra.mxu0 %v1241
    %1887 = vmatprep.mubr.bf16.mxu0 %v126
    %1888 = vmatmul.mubr.bf16.gmra.mrb[0].mxu0 %v125
    %v1889 = vpop.f32.mrb[0].mxu0
    %v1890 = vadd.f32 %v402, %v1889
    %v1891 = vpop.f32.mrb[0].mxu0
    %v1892 = vadd.f32 %v406, %v1891
    %v1893 = vpop.f32.mrb[0].mxu0
    %v1894 = vpop.f32.mrb[0].mxu0
    %1895 = vdwg.mxu0
    %1896 = vmatprep.subr.bf16.mxu0 %v1246
    %1897 = vmatpush1.bf16.msra.mxu0 %v1245
    %1898 = vmatprep.subr.bf16.mxu0 %v1250
    %1899 = vmatpush1.bf16.msra.mxu0 %v1249
    %1900 = vmatprep.subr.bf16.mxu0 %v1254
    %1901 = vmatpush1.bf16.msra.mxu0 %v1253
    %1902 = vmatprep.subr.bf16.mxu0 %v1258
    %1903 = vmatpush1.bf16.msra.mxu0 %v1257
    %1904 = vmatprep.subr.bf16.mxu0 %v1262
    %1905 = vmatpush1.bf16.msra.mxu0 %v1261
    %1906 = vmatprep.subr.bf16.mxu0 %v1266
    %1907 = vmatpush1.bf16.msra.mxu0 %v1265
    %1908 = vmatprep.subr.bf16.mxu0 %v1270
    %1909 = vmatpush1.bf16.msra.mxu0 %v1269
    %1910 = vmatprep.subr.bf16.mxu0 %v1274
    %1911 = vmatpush1.bf16.msra.mxu0 %v1273
    %1912 = vmatprep.subr.bf16.mxu0 %v1278
    %1913 = vmatpush1.bf16.msra.mxu0 %v1277
    %1914 = vmatprep.subr.bf16.mxu0 %v1282
    %1915 = vmatpush1.bf16.msra.mxu0 %v1281
    %1916 = vmatprep.subr.bf16.mxu0 %v1286
    %1917 = vmatpush1.bf16.msra.mxu0 %v1285
    %1918 = vmatprep.subr.bf16.mxu0 %v1290
    %1919 = vmatpush1.bf16.msra.mxu0 %v1289
    %1920 = vmatprep.subr.bf16.mxu0 %v1294
    %1921 = vmatpush1.bf16.msra.mxu0 %v1293
    %1922 = vmatprep.subr.bf16.mxu0 %v1298
    %1923 = vmatpush1.bf16.msra.mxu0 %v1297
    %1924 = vmatprep.subr.bf16.mxu0 %v1302
    %1925 = vmatpush1.bf16.msra.mxu0 %v1301
    %1926 = vmatprep.subr.bf16.mxu0 %v1306
    %1927 = vmatpush1.bf16.msra.mxu0 %v1305
    %1928 = vmatprep.mubr.bf16.mxu0 %v128
    %1929 = vmatmul.mubr.bf16.gmra.mrb[0].mxu0 %v127
    %v1930 = vpop.f32.mrb[0].mxu0
    %v1931 = vadd.f32 %v1890, %v1930
    %v1932 = vpop.f32.mrb[0].mxu0
    %v1933 = vadd.f32 %v1892, %v1932
    %v1934 = vpop.f32.mrb[0].mxu0
    %v1935 = vpop.f32.mrb[0].mxu0
    %1936 = vdwg.mxu0
    %1937 = vmatprep.subr.bf16.mxu0 %v1310
    %1938 = vmatpush1.bf16.msra.mxu0 %v1309
    %1939 = vmatprep.subr.bf16.mxu0 %v1314
    %1940 = vmatpush1.bf16.msra.mxu0 %v1313
    %1941 = vmatprep.subr.bf16.mxu0 %v1318
    %1942 = vmatpush1.bf16.msra.mxu0 %v1317
    %1943 = vmatprep.subr.bf16.mxu0 %v1322
    %1944 = vmatpush1.bf16.msra.mxu0 %v1321
    %1945 = vmatprep.subr.bf16.mxu0 %v1326
    %1946 = vmatpush1.bf16.msra.mxu0 %v1325
    %1947 = vmatprep.subr.bf16.mxu0 %v1330
    %1948 = vmatpush1.bf16.msra.mxu0 %v1329
    %1949 = vmatprep.subr.bf16.mxu0 %v1334
    %1950 = vmatpush1.bf16.msra.mxu0 %v1333
    %1951 = vmatprep.subr.bf16.mxu0 %v1338
    %1952 = vmatpush1.bf16.msra.mxu0 %v1337
    %1953 = vmatprep.subr.bf16.mxu0 %v1342
    %1954 = vmatpush1.bf16.msra.mxu0 %v1341
    %1955 = vmatprep.subr.bf16.mxu0 %v1346
    %1956 = vmatpush1.bf16.msra.mxu0 %v1345
    %1957 = vmatprep.subr.bf16.mxu0 %v1350
    %1958 = vmatpush1.bf16.msra.mxu0 %v1349
    %1959 = vmatprep.subr.bf16.mxu0 %v1354
    %1960 = vmatpush1.bf16.msra.mxu0 %v1353
    %1961 = vmatprep.subr.bf16.mxu0 %v1358
    %1962 = vmatpush1.bf16.msra.mxu0 %v1357
    %1963 = vmatprep.subr.bf16.mxu0 %v1362
    %1964 = vmatpush1.bf16.msra.mxu0 %v1361
    %1965 = vmatprep.subr.bf16.mxu0 %v1366
    %1966 = vmatpush1.bf16.msra.mxu0 %v1365
    %1967 = vmatprep.subr.bf16.mxu0 %v1370
    %1968 = vmatpush1.bf16.msra.mxu0 %v1369
    %1969 = vmatprep.mubr.bf16.mxu0 %v130
    %1970 = vmatmul.mubr.bf16.gmra.mrb[0].mxu0 %v129
    %v1971 = vpop.f32.mrb[0].mxu0
    %v1972 = vadd.f32 %v1931, %v1971
    %v1973 = vpop.f32.mrb[0].mxu0
    %v1974 = vadd.f32 %v1933, %v1973
    %v1975 = vpop.f32.mrb[0].mxu0
    %v1976 = vpop.f32.mrb[0].mxu0
    %1977 = vdwg.mxu0
    %1978 = vmatprep.subr.bf16.mxu0 %v1374
    %1979 = vmatpush1.bf16.msra.mxu0 %v1373
    %1980 = vmatprep.subr.bf16.mxu0 %v1378
    %1981 = vmatpush1.bf16.msra.mxu0 %v1377
    %1982 = vmatprep.subr.bf16.mxu0 %v1382
    %1983 = vmatpush1.bf16.msra.mxu0 %v1381
    %1984 = vmatprep.subr.bf16.mxu0 %v1386
    %1985 = vmatpush1.bf16.msra.mxu0 %v1385
    %1986 = vmatprep.subr.bf16.mxu0 %v1390
    %1987 = vmatpush1.bf16.msra.mxu0 %v1389
    %1988 = vmatprep.subr.bf16.mxu0 %v1394
    %1989 = vmatpush1.bf16.msra.mxu0 %v1393
    %1990 = vmatprep.subr.bf16.mxu0 %v1398
    %1991 = vmatpush1.bf16.msra.mxu0 %v1397
    %1992 = vmatprep.subr.bf16.mxu0 %v1402
    %1993 = vmatpush1.bf16.msra.mxu0 %v1401
    %1994 = vmatprep.subr.bf16.mxu0 %v1406
    %1995 = vmatpush1.bf16.msra.mxu0 %v1405
    %1996 = vmatprep.subr.bf16.mxu0 %v1410
    %1997 = vmatpush1.bf16.msra.mxu0 %v1409
    %1998 = vmatprep.subr.bf16.mxu0 %v1414
    %1999 = vmatpush1.bf16.msra.mxu0 %v1413
    %2000 = vmatprep.subr.bf16.mxu0 %v1418
    %2001 = vmatpush1.bf16.msra.mxu0 %v1417
    %2002 = vmatprep.subr.bf16.mxu0 %v1422
    %2003 = vmatpush1.bf16.msra.mxu0 %v1421
    %2004 = vmatprep.subr.bf16.mxu0 %v1426
    %2005 = vmatpush1.bf16.msra.mxu0 %v1425
    %2006 = vmatprep.subr.bf16.mxu0 %v1430
    %2007 = vmatpush1.bf16.msra.mxu0 %v1429
    %2008 = vmatprep.subr.bf16.mxu0 %v1434
    %2009 = vmatpush1.bf16.msra.mxu0 %v1433
    %2010 = vmatprep.mubr.bf16.mxu0 %v132
    %2011 = vmatmul.mubr.bf16.gmra.mrb[0].mxu0 %v131
    %v2012 = vpop.f32.mrb[0].mxu0
    %v2013 = vadd.f32 %v1972, %v2012
    %v2014 = vpop.f32.mrb[0].mxu0
    %v2015 = vadd.f32 %v1974, %v2014
    %v2016 = vpop.f32.mrb[0].mxu0
    %v2017 = vpop.f32.mrb[0].mxu0
    %2018 = vdwg.mxu0
    %v2019 = vmax.f32 %v1849, 0.0
    %v2020 = vmax.f32 %v1851, 0.0
    %v2021 = vmax.f32 %v2013, 0.0
    %v2022 = vmax.f32 %v2015, 0.0
    %v2023 = vld [vmem:[#allocation8] sm:$0xff]
    %v2024 = vld [vmem:[#allocation8 + $0x8] sm:$0xff]
    %v2025 = vld [vmem:[#allocation8 + $0x10] sm:$0xff]
    %v2026 = vld [vmem:[#allocation8 + $0x18] sm:$0xff]
    %v2027 = vld [vmem:[#allocation8 + $0x20] sm:$0xff]
    %v2028 = vld [vmem:[#allocation8 + $0x28] sm:$0xff]
    %v2029 = vld [vmem:[#allocation8 + $0x30] sm:$0xff]
    %v2030 = vld [vmem:[#allocation8 + $0x38] sm:$0xff]
    %v2031 = vld [vmem:[#allocation8 + $0x40] sm:$0xff]
    %v2032 = vld [vmem:[#allocation8 + $0x48] sm:$0xff]
    %v2033 = vld [vmem:[#allocation8 + $0x50] sm:$0xff]
    %v2034 = vld [vmem:[#allocation8 + $0x58] sm:$0xff]
    %v2035 = vld [vmem:[#allocation8 + $0x60] sm:$0xff]
    %v2036 = vld [vmem:[#allocation8 + $0x68] sm:$0xff]
    %v2037 = vld [vmem:[#allocation8 + $0x70] sm:$0xff]
    %v2038 = vld [vmem:[#allocation8 + $0x78] sm:$0xff]
    %v2039 = vld [vmem:[#allocation8 + $0x80] sm:$0xff]
    %v2040 = vld [vmem:[#allocation8 + $0x88] sm:$0xff]
    %v2041 = vld [vmem:[#allocation8 + $0x90] sm:$0xff]
    %v2042 = vld [vmem:[#allocation8 + $0x98] sm:$0xff]
    %v2043 = vld [vmem:[#allocation8 + $0xa0] sm:$0xff]
    %v2044 = vld [vmem:[#allocation8 + $0xa8] sm:$0xff]
    %v2045 = vld [vmem:[#allocation8 + $0xb0] sm:$0xff]
    %v2046 = vld [vmem:[#allocation8 + $0xb8] sm:$0xff]
    %v2047 = vld [vmem:[#allocation8 + $0xc0] sm:$0xff]
    %v2048 = vld [vmem:[#allocation8 + $0xc8] sm:$0xff]
    %v2049 = vld [vmem:[#allocation8 + $0xd0] sm:$0xff]
    %v2050 = vld [vmem:[#allocation8 + $0xd8] sm:$0xff]
    %v2051 = vld [vmem:[#allocation8 + $0xe0] sm:$0xff]
    %v2052 = vld [vmem:[#allocation8 + $0xe8] sm:$0xff]
    %v2053 = vld [vmem:[#allocation8 + $0xf0] sm:$0xff]
    %v2054 = vld [vmem:[#allocation8 + $0xf8] sm:$0xff]
    %v2055 = vld [vmem:[#allocation8 + $0x100] sm:$0xff]
    %v2056 = vld [vmem:[#allocation8 + $0x108] sm:$0xff]
    %v2057 = vld [vmem:[#allocation8 + $0x110] sm:$0xff]
    %v2058 = vld [vmem:[#allocation8 + $0x118] sm:$0xff]
    %v2059 = vld [vmem:[#allocation8 + $0x120] sm:$0xff]
    %v2060 = vld [vmem:[#allocation8 + $0x128] sm:$0xff]
    %v2061 = vld [vmem:[#allocation8 + $0x130] sm:$0xff]
    %v2062 = vld [vmem:[#allocation8 + $0x138] sm:$0xff]
    %v2063 = vld [vmem:[#allocation8 + $0x140] sm:$0xff]
    %v2064 = vld [vmem:[#allocation8 + $0x148] sm:$0xff]
    %v2065 = vld [vmem:[#allocation8 + $0x150] sm:$0xff]
    %v2066 = vld [vmem:[#allocation8 + $0x158] sm:$0xff]
    %v2067 = vld [vmem:[#allocation8 + $0x160] sm:$0xff]
    %v2068 = vld [vmem:[#allocation8 + $0x168] sm:$0xff]
    %v2069 = vld [vmem:[#allocation8 + $0x170] sm:$0xff]
    %v2070 = vld [vmem:[#allocation8 + $0x178] sm:$0xff]
    %v2071 = vld [vmem:[#allocation8 + $0x180] sm:$0xff]
    %v2072 = vld [vmem:[#allocation8 + $0x188] sm:$0xff]
    %v2073 = vld [vmem:[#allocation8 + $0x190] sm:$0xff]
    %v2074 = vld [vmem:[#allocation8 + $0x198] sm:$0xff]
    %v2075 = vld [vmem:[#allocation8 + $0x1a0] sm:$0xff]
    %v2076 = vld [vmem:[#allocation8 + $0x1a8] sm:$0xff]
    %v2077 = vld [vmem:[#allocation8 + $0x1b0] sm:$0xff]
    %v2078 = vld [vmem:[#allocation8 + $0x1b8] sm:$0xff]
    %v2079 = vld [vmem:[#allocation8 + $0x1c0] sm:$0xff]
    %v2080 = vld [vmem:[#allocation8 + $0x1c8] sm:$0xff]
    %v2081 = vld [vmem:[#allocation8 + $0x1d0] sm:$0xff]
    %v2082 = vld [vmem:[#allocation8 + $0x1d8] sm:$0xff]
    %v2083 = vld [vmem:[#allocation8 + $0x1e0] sm:$0xff]
    %v2084 = vld [vmem:[#allocation8 + $0x1e8] sm:$0xff]
    %v2085 = vld [vmem:[#allocation8 + $0x1f0] sm:$0xff]
    %v2086 = vld [vmem:[#allocation8 + $0x1f8] sm:$0xff]
    %v2087 = vld [vmem:[#allocation8 + $0x200] sm:$0xff]
    %v2088 = vld [vmem:[#allocation8 + $0x208] sm:$0xff]
    %v2089 = vld [vmem:[#allocation8 + $0x210] sm:$0xff]
    %v2090 = vld [vmem:[#allocation8 + $0x218] sm:$0xff]
    %v2091 = vld [vmem:[#allocation8 + $0x220] sm:$0xff]
    %v2092 = vld [vmem:[#allocation8 + $0x228] sm:$0xff]
    %v2093 = vld [vmem:[#allocation8 + $0x230] sm:$0xff]
    %v2094 = vld [vmem:[#allocation8 + $0x238] sm:$0xff]
    %v2095 = vld [vmem:[#allocation8 + $0x240] sm:$0xff]
    %v2096 = vld [vmem:[#allocation8 + $0x248] sm:$0xff]
    %v2097 = vld [vmem:[#allocation8 + $0x250] sm:$0xff]
    %v2098 = vld [vmem:[#allocation8 + $0x258] sm:$0xff]
    %v2099 = vld [vmem:[#allocation8 + $0x260] sm:$0xff]
    %v2100 = vld [vmem:[#allocation8 + $0x268] sm:$0xff]
    %v2101 = vld [vmem:[#allocation8 + $0x270] sm:$0xff]
    %v2102 = vld [vmem:[#allocation8 + $0x278] sm:$0xff]
    %v2103 = vld [vmem:[#allocation8 + $0x280] sm:$0xff]
    %v2104 = vld [vmem:[#allocation8 + $0x288] sm:$0xff]
    %v2105 = vld [vmem:[#allocation8 + $0x290] sm:$0xff]
    %v2106 = vld [vmem:[#allocation8 + $0x298] sm:$0xff]
    %v2107 = vld [vmem:[#allocation8 + $0x2a0] sm:$0xff]
    %v2108 = vld [vmem:[#allocation8 + $0x2a8] sm:$0xff]
    %v2109 = vld [vmem:[#allocation8 + $0x2b0] sm:$0xff]
    %v2110 = vld [vmem:[#allocation8 + $0x2b8] sm:$0xff]
    %v2111 = vld [vmem:[#allocation8 + $0x2c0] sm:$0xff]
    %v2112 = vld [vmem:[#allocation8 + $0x2c8] sm:$0xff]
    %v2113 = vld [vmem:[#allocation8 + $0x2d0] sm:$0xff]
    %v2114 = vld [vmem:[#allocation8 + $0x2d8] sm:$0xff]
    %v2115 = vld [vmem:[#allocation8 + $0x2e0] sm:$0xff]
    %v2116 = vld [vmem:[#allocation8 + $0x2e8] sm:$0xff]
    %v2117 = vld [vmem:[#allocation8 + $0x2f0] sm:$0xff]
    %v2118 = vld [vmem:[#allocation8 + $0x2f8] sm:$0xff]
    %v2119 = vld [vmem:[#allocation8 + $0x300] sm:$0xff]
    %v2120 = vld [vmem:[#allocation8 + $0x308] sm:$0xff]
    %v2121 = vld [vmem:[#allocation8 + $0x310] sm:$0xff]
    %v2122 = vld [vmem:[#allocation8 + $0x318] sm:$0xff]
    %v2123 = vld [vmem:[#allocation8 + $0x320] sm:$0xff]
    %v2124 = vld [vmem:[#allocation8 + $0x328] sm:$0xff]
    %v2125 = vld [vmem:[#allocation8 + $0x330] sm:$0xff]
    %v2126 = vld [vmem:[#allocation8 + $0x338] sm:$0xff]
    %v2127 = vld [vmem:[#allocation8 + $0x340] sm:$0xff]
    %v2128 = vld [vmem:[#allocation8 + $0x348] sm:$0xff]
    %v2129 = vld [vmem:[#allocation8 + $0x350] sm:$0xff]
    %v2130 = vld [vmem:[#allocation8 + $0x358] sm:$0xff]
    %v2131 = vld [vmem:[#allocation8 + $0x360] sm:$0xff]
    %v2132 = vld [vmem:[#allocation8 + $0x368] sm:$0xff]
    %v2133 = vld [vmem:[#allocation8 + $0x370] sm:$0xff]
    %v2134 = vld [vmem:[#allocation8 + $0x378] sm:$0xff]
    %v2135 = vld [vmem:[#allocation8 + $0x380] sm:$0xff]
    %v2136 = vld [vmem:[#allocation8 + $0x388] sm:$0xff]
    %v2137 = vld [vmem:[#allocation8 + $0x390] sm:$0xff]
    %v2138 = vld [vmem:[#allocation8 + $0x398] sm:$0xff]
    %v2139 = vld [vmem:[#allocation8 + $0x3a0] sm:$0xff]
    %v2140 = vld [vmem:[#allocation8 + $0x3a8] sm:$0xff]
    %v2141 = vld [vmem:[#allocation8 + $0x3b0] sm:$0xff]
    %v2142 = vld [vmem:[#allocation8 + $0x3b8] sm:$0xff]
    %v2143 = vld [vmem:[#allocation8 + $0x3c0] sm:$0xff]
    %v2144 = vld [vmem:[#allocation8 + $0x3c8] sm:$0xff]
    %v2145 = vld [vmem:[#allocation8 + $0x3d0] sm:$0xff]
    %v2146 = vld [vmem:[#allocation8 + $0x3d8] sm:$0xff]
    %v2147 = vld [vmem:[#allocation8 + $0x3e0] sm:$0xff]
    %v2148 = vld [vmem:[#allocation8 + $0x3e8] sm:$0xff]
    %v2149 = vld [vmem:[#allocation8 + $0x3f0] sm:$0xff]
    %v2150 = vld [vmem:[#allocation8 + $0x3f8] sm:$0xff]
    %v2151 = vld [vmem:[%s5] sm:$0x3]
    %v2153 = vlaneseq
    %v2154 = vshrl.u32 %v2153, 7
    %v2155 = vsub.s32 0, %v2154
    %v2156 = vrot.slane %v2151, %v2155
    %v2157 = vlaneseq
    %v2158 = vshrl.u32 %v2157, 7
    %v2159 = vsub.s32 1, %v2158
    %v2160 = vrot.slane %v2151, %v2159
    %2163 = vmatprep.subr.mxu0 %v2024
    %2164 = vmatpush1.msra.mxu0 %v2023
    %2165 = vmatprep.subr.mxu0 %v2026
    %2166 = vmatpush1.msra.mxu0 %v2025
    %2167 = vmatprep.subr.mxu0 %v2028
    %2168 = vmatpush1.msra.mxu0 %v2027
    %2169 = vmatprep.subr.mxu0 %v2030
    %2170 = vmatpush1.msra.mxu0 %v2029
    %2171 = vmatprep.subr.mxu0 %v2032
    %2172 = vmatpush1.msra.mxu0 %v2031
    %2173 = vmatprep.subr.mxu0 %v2034
    %2174 = vmatpush1.msra.mxu0 %v2033
    %2175 = vmatprep.subr.mxu0 %v2036
    %2176 = vmatpush1.msra.mxu0 %v2035
    %2177 = vmatprep.subr.mxu0 %v2038
    %2178 = vmatpush1.msra.mxu0 %v2037
    %2179 = vmatprep.subr.mxu0 %v2040
    %2180 = vmatpush1.msra.mxu0 %v2039
    %2181 = vmatprep.subr.mxu0 %v2042
    %2182 = vmatpush1.msra.mxu0 %v2041
    %2183 = vmatprep.subr.mxu0 %v2044
    %2184 = vmatpush1.msra.mxu0 %v2043
    %2185 = vmatprep.subr.mxu0 %v2046
    %2186 = vmatpush1.msra.mxu0 %v2045
    %2187 = vmatprep.subr.mxu0 %v2048
    %2188 = vmatpush1.msra.mxu0 %v2047
    %2189 = vmatprep.subr.mxu0 %v2050
    %2190 = vmatpush1.msra.mxu0 %v2049
    %2191 = vmatprep.subr.mxu0 %v2052
    %2192 = vmatpush1.msra.mxu0 %v2051
    %2193 = vmatprep.subr.mxu0 %v2054
    %2194 = vmatpush1.msra.mxu0 %v2053
    %2195 = vmatprep.subr.mxu0 %v2056
    %2196 = vmatpush1.msra.mxu0 %v2055
    %2197 = vmatprep.subr.mxu0 %v2058
    %2198 = vmatpush1.msra.mxu0 %v2057
    %2199 = vmatprep.subr.mxu0 %v2060
    %2200 = vmatpush1.msra.mxu0 %v2059
    %2201 = vmatprep.subr.mxu0 %v2062
    %2202 = vmatpush1.msra.mxu0 %v2061
    %2203 = vmatprep.subr.mxu0 %v2064
    %2204 = vmatpush1.msra.mxu0 %v2063
    %2205 = vmatprep.subr.mxu0 %v2066
    %2206 = vmatpush1.msra.mxu0 %v2065
    %2207 = vmatprep.subr.mxu0 %v2068
    %2208 = vmatpush1.msra.mxu0 %v2067
    %2209 = vmatprep.subr.mxu0 %v2070
    %2210 = vmatpush1.msra.mxu0 %v2069
    %2211 = vmatprep.subr.mxu0 %v2072
    %2212 = vmatpush1.msra.mxu0 %v2071
    %2213 = vmatprep.subr.mxu0 %v2074
    %2214 = vmatpush1.msra.mxu0 %v2073
    %2215 = vmatprep.subr.mxu0 %v2076
    %2216 = vmatpush1.msra.mxu0 %v2075
    %2217 = vmatprep.subr.mxu0 %v2078
    %2218 = vmatpush1.msra.mxu0 %v2077
    %2219 = vmatprep.subr.mxu0 %v2080
    %2220 = vmatpush1.msra.mxu0 %v2079
    %2221 = vmatprep.subr.mxu0 %v2082
    %2222 = vmatpush1.msra.mxu0 %v2081
    %2223 = vmatprep.subr.mxu0 %v2084
    %2224 = vmatpush1.msra.mxu0 %v2083
    %2225 = vmatprep.subr.mxu0 %v2086
    %2226 = vmatpush1.msra.mxu0 %v2085
    %2227 = vmatprep.mubr.f32.mxu0 %v2020
    %2228 = vmatmul.mubr.f32.gmra.mrb[0].mxu0 %v2019
    %v2229 = vpop.f32.mrb[0].mxu0
    %v2230 = vadd.f32 %v2156, %v2229
    %v2231 = vpop.f32.mrb[0].mxu0
    %v2232 = vadd.f32 %v2160, %v2231
    %2233 = vdwg.mxu0
    %2234 = vmatprep.subr.mxu0 %v2088
    %2235 = vmatpush1.msra.mxu0 %v2087
    %2236 = vmatprep.subr.mxu0 %v2090
    %2237 = vmatpush1.msra.mxu0 %v2089
    %2238 = vmatprep.subr.mxu0 %v2092
    %2239 = vmatpush1.msra.mxu0 %v2091
    %2240 = vmatprep.subr.mxu0 %v2094
    %2241 = vmatpush1.msra.mxu0 %v2093
    %2242 = vmatprep.subr.mxu0 %v2096
    %2243 = vmatpush1.msra.mxu0 %v2095
    %2244 = vmatprep.subr.mxu0 %v2098
    %2245 = vmatpush1.msra.mxu0 %v2097
    %2246 = vmatprep.subr.mxu0 %v2100
    %2247 = vmatpush1.msra.mxu0 %v2099
    %2248 = vmatprep.subr.mxu0 %v2102
    %2249 = vmatpush1.msra.mxu0 %v2101
    %2250 = vmatprep.subr.mxu0 %v2104
    %2251 = vmatpush1.msra.mxu0 %v2103
    %2252 = vmatprep.subr.mxu0 %v2106
    %2253 = vmatpush1.msra.mxu0 %v2105
    %2254 = vmatprep.subr.mxu0 %v2108
    %2255 = vmatpush1.msra.mxu0 %v2107
    %2256 = vmatprep.subr.mxu0 %v2110
    %2257 = vmatpush1.msra.mxu0 %v2109
    %2258 = vmatprep.subr.mxu0 %v2112
    %2259 = vmatpush1.msra.mxu0 %v2111
    %2260 = vmatprep.subr.mxu0 %v2114
    %2261 = vmatpush1.msra.mxu0 %v2113
    %2262 = vmatprep.subr.mxu0 %v2116
    %2263 = vmatpush1.msra.mxu0 %v2115
    %2264 = vmatprep.subr.mxu0 %v2118
    %2265 = vmatpush1.msra.mxu0 %v2117
    %2266 = vmatprep.subr.mxu0 %v2120
    %2267 = vmatpush1.msra.mxu0 %v2119
    %2268 = vmatprep.subr.mxu0 %v2122
    %2269 = vmatpush1.msra.mxu0 %v2121
    %2270 = vmatprep.subr.mxu0 %v2124
    %2271 = vmatpush1.msra.mxu0 %v2123
    %2272 = vmatprep.subr.mxu0 %v2126
    %2273 = vmatpush1.msra.mxu0 %v2125
    %2274 = vmatprep.subr.mxu0 %v2128
    %2275 = vmatpush1.msra.mxu0 %v2127
    %2276 = vmatprep.subr.mxu0 %v2130
    %2277 = vmatpush1.msra.mxu0 %v2129
    %2278 = vmatprep.subr.mxu0 %v2132
    %2279 = vmatpush1.msra.mxu0 %v2131
    %2280 = vmatprep.subr.mxu0 %v2134
    %2281 = vmatpush1.msra.mxu0 %v2133
    %2282 = vmatprep.subr.mxu0 %v2136
    %2283 = vmatpush1.msra.mxu0 %v2135
    %2284 = vmatprep.subr.mxu0 %v2138
    %2285 = vmatpush1.msra.mxu0 %v2137
    %2286 = vmatprep.subr.mxu0 %v2140
    %2287 = vmatpush1.msra.mxu0 %v2139
    %2288 = vmatprep.subr.mxu0 %v2142
    %2289 = vmatpush1.msra.mxu0 %v2141
    %2290 = vmatprep.subr.mxu0 %v2144
    %2291 = vmatpush1.msra.mxu0 %v2143
    %2292 = vmatprep.subr.mxu0 %v2146
    %2293 = vmatpush1.msra.mxu0 %v2145
    %2294 = vmatprep.subr.mxu0 %v2148
    %2295 = vmatpush1.msra.mxu0 %v2147
    %2296 = vmatprep.subr.mxu0 %v2150
    %2297 = vmatpush1.msra.mxu0 %v2149
    %2298 = vmatprep.mubr.f32.mxu0 %v2022
    %2299 = vmatmul.mubr.f32.gmra.mrb[0].mxu0 %v2021
    %v2300 = vpop.f32.mrb[0].mxu0
    %v2301 = vadd.f32 %v2230, %v2300
    %v2302 = vpop.f32.mrb[0].mxu0
    %v2303 = vadd.f32 %v2232, %v2302
    %2304 = vdwg.mxu0
    %2305 = vst [vmem:[#allocation14] sm:$0xff] %v2301
    %2306 = vst [vmem:[#allocation14 + $0x8] sm:$0xff] %v2303
    %v2307 = vld [vmem:[#allocation5] sm:$0xff]
    %v2308 = vmul.f32 %v2303, 0.5
    %v2309 = vmul.f32 %v2308, 1.442695
    %v2310 = vpow.pop %v2309
    %v2311 = vmul.f32 %v2307, %v2310
    %v2312 = vadd.f32 %v2301, %v2311
    %v2313 = vld [vmem:[#allocation10] sm:$0xff]
    %v2314 = vld [vmem:[#allocation10 + $0x8] sm:$0xff]
    %v2315 = vld [vmem:[#allocation10 + $0x10] sm:$0xff]
    %v2316 = vld [vmem:[#allocation10 + $0x18] sm:$0xff]
    %v2317 = vld [vmem:[#allocation10 + $0x20] sm:$0xff]
    %v2318 = vld [vmem:[#allocation10 + $0x28] sm:$0xff]
    %v2319 = vld [vmem:[#allocation10 + $0x30] sm:$0xff]
    %v2320 = vld [vmem:[#allocation10 + $0x38] sm:$0xff]
    %v2321 = vld [vmem:[#allocation10 + $0x40] sm:$0xff]
    %v2322 = vld [vmem:[#allocation10 + $0x48] sm:$0xff]
    %v2323 = vld [vmem:[#allocation10 + $0x50] sm:$0xff]
    %v2324 = vld [vmem:[#allocation10 + $0x58] sm:$0xff]
    %v2325 = vld [vmem:[#allocation10 + $0x60] sm:$0xff]
    %v2326 = vld [vmem:[#allocation10 + $0x68] sm:$0xff]
    %v2327 = vld [vmem:[#allocation10 + $0x70] sm:$0xff]
    %v2328 = vld [vmem:[#allocation10 + $0x78] sm:$0xff]
    %v2329 = vld [vmem:[#allocation10 + $0x80] sm:$0xff]
    %v2330 = vld [vmem:[#allocation10 + $0x88] sm:$0xff]
    %v2331 = vld [vmem:[#allocation10 + $0x90] sm:$0xff]
    %v2332 = vld [vmem:[#allocation10 + $0x98] sm:$0xff]
    %v2333 = vld [vmem:[#allocation10 + $0xa0] sm:$0xff]
    %v2334 = vld [vmem:[#allocation10 + $0xa8] sm:$0xff]
    %v2335 = vld [vmem:[#allocation10 + $0xb0] sm:$0xff]
    %v2336 = vld [vmem:[#allocation10 + $0xb8] sm:$0xff]
    %v2337 = vld [vmem:[#allocation10 + $0xc0] sm:$0xff]
    %v2338 = vld [vmem:[#allocation10 + $0xc8] sm:$0xff]
    %v2339 = vld [vmem:[#allocation10 + $0xd0] sm:$0xff]
    %v2340 = vld [vmem:[#allocation10 + $0xd8] sm:$0xff]
    %v2341 = vld [vmem:[#allocation10 + $0xe0] sm:$0xff]
    %v2342 = vld [vmem:[#allocation10 + $0xe8] sm:$0xff]
    %v2343 = vld [vmem:[#allocation10 + $0xf0] sm:$0xff]
    %v2344 = vld [vmem:[#allocation10 + $0xf8] sm:$0xff]
    %v2345 = vld [vmem:[#allocation10 + $0x100] sm:$0xff]
    %v2346 = vld [vmem:[#allocation10 + $0x108] sm:$0xff]
    %v2347 = vld [vmem:[#allocation10 + $0x110] sm:$0xff]
    %v2348 = vld [vmem:[#allocation10 + $0x118] sm:$0xff]
    %v2349 = vld [vmem:[#allocation10 + $0x120] sm:$0xff]
    %v2350 = vld [vmem:[#allocation10 + $0x128] sm:$0xff]
    %v2351 = vld [vmem:[#allocation10 + $0x130] sm:$0xff]
    %v2352 = vld [vmem:[#allocation10 + $0x138] sm:$0xff]
    %v2353 = vld [vmem:[#allocation10 + $0x140] sm:$0xff]
    %v2354 = vld [vmem:[#allocation10 + $0x148] sm:$0xff]
    %v2355 = vld [vmem:[#allocation10 + $0x150] sm:$0xff]
    %v2356 = vld [vmem:[#allocation10 + $0x158] sm:$0xff]
    %v2357 = vld [vmem:[#allocation10 + $0x160] sm:$0xff]
    %v2358 = vld [vmem:[#allocation10 + $0x168] sm:$0xff]
    %v2359 = vld [vmem:[#allocation10 + $0x170] sm:$0xff]
    %v2360 = vld [vmem:[#allocation10 + $0x178] sm:$0xff]
    %v2361 = vld [vmem:[#allocation10 + $0x180] sm:$0xff]
    %v2362 = vld [vmem:[#allocation10 + $0x188] sm:$0xff]
    %v2363 = vld [vmem:[#allocation10 + $0x190] sm:$0xff]
    %v2364 = vld [vmem:[#allocation10 + $0x198] sm:$0xff]
    %v2365 = vld [vmem:[#allocation10 + $0x1a0] sm:$0xff]
    %v2366 = vld [vmem:[#allocation10 + $0x1a8] sm:$0xff]
    %v2367 = vld [vmem:[#allocation10 + $0x1b0] sm:$0xff]
    %v2368 = vld [vmem:[#allocation10 + $0x1b8] sm:$0xff]
    %v2369 = vld [vmem:[#allocation10 + $0x1c0] sm:$0xff]
    %v2370 = vld [vmem:[#allocation10 + $0x1c8] sm:$0xff]
    %v2371 = vld [vmem:[#allocation10 + $0x1d0] sm:$0xff]
    %v2372 = vld [vmem:[#allocation10 + $0x1d8] sm:$0xff]
    %v2373 = vld [vmem:[#allocation10 + $0x1e0] sm:$0xff]
    %v2374 = vld [vmem:[#allocation10 + $0x1e8] sm:$0xff]
    %v2375 = vld [vmem:[#allocation10 + $0x1f0] sm:$0xff]
    %v2376 = vld [vmem:[#allocation10 + $0x1f8] sm:$0xff]
    %v2377 = vld [vmem:[%s7] sm:$0xf]
    %v2379 = vlaneseq
    %v2380 = vshrl.u32 %v2379, 7
    %v2381 = vsub.s32 0, %v2380
    %v2382 = vrot.slane %v2377, %v2381
    %v2383 = vlaneseq
    %v2384 = vshrl.u32 %v2383, 7
    %v2385 = vsub.s32 1, %v2384
    %v2386 = vrot.slane %v2377, %v2385
    %v2387 = vlaneseq
    %v2388 = vshrl.u32 %v2387, 7
    %v2389 = vsub.s32 2, %v2388
    %v2390 = vrot.slane %v2377, %v2389
    %v2391 = vlaneseq
    %v2392 = vshrl.u32 %v2391, 7
    %v2393 = vsub.s32 3, %v2392
    %v2394 = vrot.slane %v2377, %v2393
    %2399 = vmatprep.subr.mxu0 %v2314
    %2400 = vmatpush1.msra.mxu0 %v2313
    %2401 = vmatprep.subr.mxu0 %v2318
    %2402 = vmatpush1.msra.mxu0 %v2317
    %2403 = vmatprep.subr.mxu0 %v2322
    %2404 = vmatpush1.msra.mxu0 %v2321
    %2405 = vmatprep.subr.mxu0 %v2326
    %2406 = vmatpush1.msra.mxu0 %v2325
    %2407 = vmatprep.subr.mxu0 %v2330
    %2408 = vmatpush1.msra.mxu0 %v2329
    %2409 = vmatprep.subr.mxu0 %v2334
    %2410 = vmatpush1.msra.mxu0 %v2333
    %2411 = vmatprep.subr.mxu0 %v2338
    %2412 = vmatpush1.msra.mxu0 %v2337
    %2413 = vmatprep.subr.mxu0 %v2342
    %2414 = vmatpush1.msra.mxu0 %v2341
    %2415 = vmatprep.subr.mxu0 %v2346
    %2416 = vmatpush1.msra.mxu0 %v2345
    %2417 = vmatprep.subr.mxu0 %v2350
    %2418 = vmatpush1.msra.mxu0 %v2349
    %2419 = vmatprep.subr.mxu0 %v2354
    %2420 = vmatpush1.msra.mxu0 %v2353
    %2421 = vmatprep.subr.mxu0 %v2358
    %2422 = vmatpush1.msra.mxu0 %v2357
    %2423 = vmatprep.subr.mxu0 %v2362
    %2424 = vmatpush1.msra.mxu0 %v2361
    %2425 = vmatprep.subr.mxu0 %v2366
    %2426 = vmatpush1.msra.mxu0 %v2365
    %2427 = vmatprep.subr.mxu0 %v2370
    %2428 = vmatpush1.msra.mxu0 %v2369
    %2429 = vmatprep.subr.mxu0 %v2374
    %2430 = vmatpush1.msra.mxu0 %v2373
    %2431 = vmatprep.subr.mxu0 0.0
    %2432 = vmatpush1.msra.mxu0 0.0
    %2433 = vmatprep.subr.mxu0 0.0
    %2434 = vmatpush1.msra.mxu0 0.0
    %2435 = vmatprep.subr.mxu0 0.0
    %2436 = vmatpush1.msra.mxu0 0.0
    %2437 = vmatprep.subr.mxu0 0.0
    %2438 = vmatpush1.msra.mxu0 0.0
    %2439 = vmatprep.subr.mxu0 0.0
    %2440 = vmatpush1.msra.mxu0 0.0
    %2441 = vmatprep.subr.mxu0 0.0
    %2442 = vmatpush1.msra.mxu0 0.0
    %2443 = vmatprep.subr.mxu0 0.0
    %2444 = vmatpush1.msra.mxu0 0.0
    %2445 = vmatprep.subr.mxu0 0.0
    %2446 = vmatpush1.msra.mxu0 0.0
    %2447 = vmatprep.subr.mxu0 0.0
    %2448 = vmatpush1.msra.mxu0 0.0
    %2449 = vmatprep.subr.mxu0 0.0
    %2450 = vmatpush1.msra.mxu0 0.0
    %2451 = vmatprep.subr.mxu0 0.0
    %2452 = vmatpush1.msra.mxu0 0.0
    %2453 = vmatprep.subr.mxu0 0.0
    %2454 = vmatpush1.msra.mxu0 0.0
    %2455 = vmatprep.subr.mxu0 0.0
    %2456 = vmatpush1.msra.mxu0 0.0
    %2457 = vmatprep.subr.mxu0 0.0
    %2458 = vmatpush1.msra.mxu0 0.0
    %2459 = vmatprep.subr.mxu0 0.0
    %2460 = vmatpush1.msra.mxu0 0.0
    %2461 = vmatprep.subr.mxu0 0.0
    %2462 = vmatpush1.msra.mxu0 0.0
    %2463 = vmatprep.mubr.f32.mxu0 0.0
    %2464 = vmatmul.mubr.f32.gmra.mrb[0].mxu0 %v2312
    %v2465 = vpop.f32.mrb[0].mxu0
    %v2466 = vadd.f32 %v2382, %v2465
    %v2467 = vpop.f32.mrb[0].mxu0
    %v2468 = vadd.f32 %v2386, %v2467
    %2469 = vdwg.mxu0
    %2470 = vmatprep.subr.mxu0 %v2316
    %2471 = vmatpush1.msra.mxu0 %v2315
    %2472 = vmatprep.subr.mxu0 %v2320
    %2473 = vmatpush1.msra.mxu0 %v2319
    %2474 = vmatprep.subr.mxu0 %v2324
    %2475 = vmatpush1.msra.mxu0 %v2323
    %2476 = vmatprep.subr.mxu0 %v2328
    %2477 = vmatpush1.msra.mxu0 %v2327
    %2478 = vmatprep.subr.mxu0 %v2332
    %2479 = vmatpush1.msra.mxu0 %v2331
    %2480 = vmatprep.subr.mxu0 %v2336
    %2481 = vmatpush1.msra.mxu0 %v2335
    %2482 = vmatprep.subr.mxu0 %v2340
    %2483 = vmatpush1.msra.mxu0 %v2339
    %2484 = vmatprep.subr.mxu0 %v2344
    %2485 = vmatpush1.msra.mxu0 %v2343
    %2486 = vmatprep.subr.mxu0 %v2348
    %2487 = vmatpush1.msra.mxu0 %v2347
    %2488 = vmatprep.subr.mxu0 %v2352
    %2489 = vmatpush1.msra.mxu0 %v2351
    %2490 = vmatprep.subr.mxu0 %v2356
    %2491 = vmatpush1.msra.mxu0 %v2355
    %2492 = vmatprep.subr.mxu0 %v2360
    %2493 = vmatpush1.msra.mxu0 %v2359
    %2494 = vmatprep.subr.mxu0 %v2364
    %2495 = vmatpush1.msra.mxu0 %v2363
    %2496 = vmatprep.subr.mxu0 %v2368
    %2497 = vmatpush1.msra.mxu0 %v2367
    %2498 = vmatprep.subr.mxu0 %v2372
    %2499 = vmatpush1.msra.mxu0 %v2371
    %2500 = vmatprep.subr.mxu0 %v2376
    %2501 = vmatpush1.msra.mxu0 %v2375
    %2502 = vmatprep.subr.mxu0 0.0
    %2503 = vmatpush1.msra.mxu0 0.0
    %2504 = vmatprep.subr.mxu0 0.0
    %2505 = vmatpush1.msra.mxu0 0.0
    %2506 = vmatprep.subr.mxu0 0.0
    %2507 = vmatpush1.msra.mxu0 0.0
    %2508 = vmatprep.subr.mxu0 0.0
    %2509 = vmatpush1.msra.mxu0 0.0
    %2510 = vmatprep.subr.mxu0 0.0
    %2511 = vmatpush1.msra.mxu0 0.0
    %2512 = vmatprep.subr.mxu0 0.0
    %2513 = vmatpush1.msra.mxu0 0.0
    %2514 = vmatprep.subr.mxu0 0.0
    %2515 = vmatpush1.msra.mxu0 0.0
    %2516 = vmatprep.subr.mxu0 0.0
    %2517 = vmatpush1.msra.mxu0 0.0
    %2518 = vmatprep.subr.mxu0 0.0
    %2519 = vmatpush1.msra.mxu0 0.0
    %2520 = vmatprep.subr.mxu0 0.0
    %2521 = vmatpush1.msra.mxu0 0.0
    %2522 = vmatprep.subr.mxu0 0.0
    %2523 = vmatpush1.msra.mxu0 0.0
    %2524 = vmatprep.subr.mxu0 0.0
    %2525 = vmatpush1.msra.mxu0 0.0
    %2526 = vmatprep.subr.mxu0 0.0
    %2527 = vmatpush1.msra.mxu0 0.0
    %2528 = vmatprep.subr.mxu0 0.0
    %2529 = vmatpush1.msra.mxu0 0.0
    %2530 = vmatprep.subr.mxu0 0.0
    %2531 = vmatpush1.msra.mxu0 0.0
    %2532 = vmatprep.subr.mxu0 0.0
    %2533 = vmatpush1.msra.mxu0 0.0
    %2534 = vmatprep.mubr.f32.mxu0 0.0
    %2535 = vmatmul.mubr.f32.gmra.mrb[0].mxu0 %v2312
    %v2536 = vpop.f32.mrb[0].mxu0
    %v2537 = vadd.f32 %v2390, %v2536
    %v2538 = vpop.f32.mrb[0].mxu0
    %v2539 = vadd.f32 %v2394, %v2538
    %2540 = vdwg.mxu0
    %v2541 = vmax.f32 %v2466, 0.0
    %v2542 = vmax.f32 %v2468, 0.0
    %v2543 = vmax.f32 %v2537, 0.0
    %v2544 = vmax.f32 %v2539, 0.0
    %v2545 = vpack.c.bf16 %v2541, %v2541
    %v2546 = vpack.c.bf16 %v2542, %v2542
    %v2547 = vpack.c.bf16 %v2543, %v2543
    %v2548 = vpack.c.bf16 %v2544, %v2544
    %v2549 = vld [vmem:[#allocation11] sm:$0xff]
    %v2550 = vld [vmem:[#allocation11 + $0x8] sm:$0xff]
    %v2551 = vld [vmem:[#allocation11 + $0x10] sm:$0xff]
    %v2552 = vld [vmem:[#allocation11 + $0x18] sm:$0xff]
    %v2553 = vld [vmem:[#allocation11 + $0x20] sm:$0xff]
    %v2554 = vld [vmem:[#allocation11 + $0x28] sm:$0xff]
    %v2555 = vld [vmem:[#allocation11 + $0x30] sm:$0xff]
    %v2556 = vld [vmem:[#allocation11 + $0x38] sm:$0xff]
    %v2557 = vld [vmem:[#allocation11 + $0x40] sm:$0xff]
    %v2558 = vld [vmem:[#allocation11 + $0x48] sm:$0xff]
    %v2559 = vld [vmem:[#allocation11 + $0x50] sm:$0xff]
    %v2560 = vld [vmem:[#allocation11 + $0x58] sm:$0xff]
    %v2561 = vld [vmem:[#allocation11 + $0x60] sm:$0xff]
    %v2562 = vld [vmem:[#allocation11 + $0x68] sm:$0xff]
    %v2563 = vld [vmem:[#allocation11 + $0x70] sm:$0xff]
    %v2564 = vld [vmem:[#allocation11 + $0x78] sm:$0xff]
    %v2565 = vld [vmem:[#allocation11 + $0x80] sm:$0xff]
    %v2566 = vld [vmem:[#allocation11 + $0x88] sm:$0xff]
    %v2567 = vld [vmem:[#allocation11 + $0x90] sm:$0xff]
    %v2568 = vld [vmem:[#allocation11 + $0x98] sm:$0xff]
    %v2569 = vld [vmem:[#allocation11 + $0xa0] sm:$0xff]
    %v2570 = vld [vmem:[#allocation11 + $0xa8] sm:$0xff]
    %v2571 = vld [vmem:[#allocation11 + $0xb0] sm:$0xff]
    %v2572 = vld [vmem:[#allocation11 + $0xb8] sm:$0xff]
    %v2573 = vld [vmem:[#allocation11 + $0xc0] sm:$0xff]
    %v2574 = vld [vmem:[#allocation11 + $0xc8] sm:$0xff]
    %v2575 = vld [vmem:[#allocation11 + $0xd0] sm:$0xff]
    %v2576 = vld [vmem:[#allocation11 + $0xd8] sm:$0xff]
    %v2577 = vld [vmem:[#allocation11 + $0xe0] sm:$0xff]
    %v2578 = vld [vmem:[#allocation11 + $0xe8] sm:$0xff]
    %v2579 = vld [vmem:[#allocation11 + $0xf0] sm:$0xff]
    %v2580 = vld [vmem:[#allocation11 + $0xf8] sm:$0xff]
    %v2581 = vld [vmem:[#allocation11 + $0x100] sm:$0xff]
    %v2582 = vld [vmem:[#allocation11 + $0x108] sm:$0xff]
    %v2583 = vld [vmem:[#allocation11 + $0x110] sm:$0xff]
    %v2584 = vld [vmem:[#allocation11 + $0x118] sm:$0xff]
    %v2585 = vld [vmem:[#allocation11 + $0x120] sm:$0xff]
    %v2586 = vld [vmem:[#allocation11 + $0x128] sm:$0xff]
    %v2587 = vld [vmem:[#allocation11 + $0x130] sm:$0xff]
    %v2588 = vld [vmem:[#allocation11 + $0x138] sm:$0xff]
    %v2589 = vld [vmem:[#allocation11 + $0x140] sm:$0xff]
    %v2590 = vld [vmem:[#allocation11 + $0x148] sm:$0xff]
    %v2591 = vld [vmem:[#allocation11 + $0x150] sm:$0xff]
    %v2592 = vld [vmem:[#allocation11 + $0x158] sm:$0xff]
    %v2593 = vld [vmem:[#allocation11 + $0x160] sm:$0xff]
    %v2594 = vld [vmem:[#allocation11 + $0x168] sm:$0xff]
    %v2595 = vld [vmem:[#allocation11 + $0x170] sm:$0xff]
    %v2596 = vld [vmem:[#allocation11 + $0x178] sm:$0xff]
    %v2597 = vld [vmem:[#allocation11 + $0x180] sm:$0xff]
    %v2598 = vld [vmem:[#allocation11 + $0x188] sm:$0xff]
    %v2599 = vld [vmem:[#allocation11 + $0x190] sm:$0xff]
    %v2600 = vld [vmem:[#allocation11 + $0x198] sm:$0xff]
    %v2601 = vld [vmem:[#allocation11 + $0x1a0] sm:$0xff]
    %v2602 = vld [vmem:[#allocation11 + $0x1a8] sm:$0xff]
    %v2603 = vld [vmem:[#allocation11 + $0x1b0] sm:$0xff]
    %v2604 = vld [vmem:[#allocation11 + $0x1b8] sm:$0xff]
    %v2605 = vld [vmem:[#allocation11 + $0x1c0] sm:$0xff]
    %v2606 = vld [vmem:[#allocation11 + $0x1c8] sm:$0xff]
    %v2607 = vld [vmem:[#allocation11 + $0x1d0] sm:$0xff]
    %v2608 = vld [vmem:[#allocation11 + $0x1d8] sm:$0xff]
    %v2609 = vld [vmem:[#allocation11 + $0x1e0] sm:$0xff]
    %v2610 = vld [vmem:[#allocation11 + $0x1e8] sm:$0xff]
    %v2611 = vld [vmem:[#allocation11 + $0x1f0] sm:$0xff]
    %v2612 = vld [vmem:[#allocation11 + $0x1f8] sm:$0xff]
    %v2613 = vld [vmem:[#allocation11 + $0x200] sm:$0xff]
    %v2614 = vld [vmem:[#allocation11 + $0x208] sm:$0xff]
    %v2615 = vld [vmem:[#allocation11 + $0x210] sm:$0xff]
    %v2616 = vld [vmem:[#allocation11 + $0x218] sm:$0xff]
    %v2617 = vld [vmem:[#allocation11 + $0x220] sm:$0xff]
    %v2618 = vld [vmem:[#allocation11 + $0x228] sm:$0xff]
    %v2619 = vld [vmem:[#allocation11 + $0x230] sm:$0xff]
    %v2620 = vld [vmem:[#allocation11 + $0x238] sm:$0xff]
    %v2621 = vld [vmem:[#allocation11 + $0x240] sm:$0xff]
    %v2622 = vld [vmem:[#allocation11 + $0x248] sm:$0xff]
    %v2623 = vld [vmem:[#allocation11 + $0x250] sm:$0xff]
    %v2624 = vld [vmem:[#allocation11 + $0x258] sm:$0xff]
    %v2625 = vld [vmem:[#allocation11 + $0x260] sm:$0xff]
    %v2626 = vld [vmem:[#allocation11 + $0x268] sm:$0xff]
    %v2627 = vld [vmem:[#allocation11 + $0x270] sm:$0xff]
    %v2628 = vld [vmem:[#allocation11 + $0x278] sm:$0xff]
    %v2629 = vld [vmem:[#allocation11 + $0x280] sm:$0xff]
    %v2630 = vld [vmem:[#allocation11 + $0x288] sm:$0xff]
    %v2631 = vld [vmem:[#allocation11 + $0x290] sm:$0xff]
    %v2632 = vld [vmem:[#allocation11 + $0x298] sm:$0xff]
    %v2633 = vld [vmem:[#allocation11 + $0x2a0] sm:$0xff]
    %v2634 = vld [vmem:[#allocation11 + $0x2a8] sm:$0xff]
    %v2635 = vld [vmem:[#allocation11 + $0x2b0] sm:$0xff]
    %v2636 = vld [vmem:[#allocation11 + $0x2b8] sm:$0xff]
    %v2637 = vld [vmem:[#allocation11 + $0x2c0] sm:$0xff]
    %v2638 = vld [vmem:[#allocation11 + $0x2c8] sm:$0xff]
    %v2639 = vld [vmem:[#allocation11 + $0x2d0] sm:$0xff]
    %v2640 = vld [vmem:[#allocation11 + $0x2d8] sm:$0xff]
    %v2641 = vld [vmem:[#allocation11 + $0x2e0] sm:$0xff]
    %v2642 = vld [vmem:[#allocation11 + $0x2e8] sm:$0xff]
    %v2643 = vld [vmem:[#allocation11 + $0x2f0] sm:$0xff]
    %v2644 = vld [vmem:[#allocation11 + $0x2f8] sm:$0xff]
    %v2645 = vld [vmem:[#allocation11 + $0x300] sm:$0xff]
    %v2646 = vld [vmem:[#allocation11 + $0x308] sm:$0xff]
    %v2647 = vld [vmem:[#allocation11 + $0x310] sm:$0xff]
    %v2648 = vld [vmem:[#allocation11 + $0x318] sm:$0xff]
    %v2649 = vld [vmem:[#allocation11 + $0x320] sm:$0xff]
    %v2650 = vld [vmem:[#allocation11 + $0x328] sm:$0xff]
    %v2651 = vld [vmem:[#allocation11 + $0x330] sm:$0xff]
    %v2652 = vld [vmem:[#allocation11 + $0x338] sm:$0xff]
    %v2653 = vld [vmem:[#allocation11 + $0x340] sm:$0xff]
    %v2654 = vld [vmem:[#allocation11 + $0x348] sm:$0xff]
    %v2655 = vld [vmem:[#allocation11 + $0x350] sm:$0xff]
    %v2656 = vld [vmem:[#allocation11 + $0x358] sm:$0xff]
    %v2657 = vld [vmem:[#allocation11 + $0x360] sm:$0xff]
    %v2658 = vld [vmem:[#allocation11 + $0x368] sm:$0xff]
    %v2659 = vld [vmem:[#allocation11 + $0x370] sm:$0xff]
    %v2660 = vld [vmem:[#allocation11 + $0x378] sm:$0xff]
    %v2661 = vld [vmem:[#allocation11 + $0x380] sm:$0xff]
    %v2662 = vld [vmem:[#allocation11 + $0x388] sm:$0xff]
    %v2663 = vld [vmem:[#allocation11 + $0x390] sm:$0xff]
    %v2664 = vld [vmem:[#allocation11 + $0x398] sm:$0xff]
    %v2665 = vld [vmem:[#allocation11 + $0x3a0] sm:$0xff]
    %v2666 = vld [vmem:[#allocation11 + $0x3a8] sm:$0xff]
    %v2667 = vld [vmem:[#allocation11 + $0x3b0] sm:$0xff]
    %v2668 = vld [vmem:[#allocation11 + $0x3b8] sm:$0xff]
    %v2669 = vld [vmem:[#allocation11 + $0x3c0] sm:$0xff]
    %v2670 = vld [vmem:[#allocation11 + $0x3c8] sm:$0xff]
    %v2671 = vld [vmem:[#allocation11 + $0x3d0] sm:$0xff]
    %v2672 = vld [vmem:[#allocation11 + $0x3d8] sm:$0xff]
    %v2673 = vld [vmem:[#allocation11 + $0x3e0] sm:$0xff]
    %v2674 = vld [vmem:[#allocation11 + $0x3e8] sm:$0xff]
    %v2675 = vld [vmem:[#allocation11 + $0x3f0] sm:$0xff]
    %v2676 = vld [vmem:[#allocation11 + $0x3f8] sm:$0xff]
    %v2677 = vld [vmem:[#allocation11 + $0x400] sm:$0xff]
    %v2678 = vld [vmem:[#allocation11 + $0x408] sm:$0xff]
    %v2679 = vld [vmem:[#allocation11 + $0x410] sm:$0xff]
    %v2680 = vld [vmem:[#allocation11 + $0x418] sm:$0xff]
    %v2681 = vld [vmem:[#allocation11 + $0x420] sm:$0xff]
    %v2682 = vld [vmem:[#allocation11 + $0x428] sm:$0xff]
    %v2683 = vld [vmem:[#allocation11 + $0x430] sm:$0xff]
    %v2684 = vld [vmem:[#allocation11 + $0x438] sm:$0xff]
    %v2685 = vld [vmem:[#allocation11 + $0x440] sm:$0xff]
    %v2686 = vld [vmem:[#allocation11 + $0x448] sm:$0xff]
    %v2687 = vld [vmem:[#allocation11 + $0x450] sm:$0xff]
    %v2688 = vld [vmem:[#allocation11 + $0x458] sm:$0xff]
    %v2689 = vld [vmem:[#allocation11 + $0x460] sm:$0xff]
    %v2690 = vld [vmem:[#allocation11 + $0x468] sm:$0xff]
    %v2691 = vld [vmem:[#allocation11 + $0x470] sm:$0xff]
    %v2692 = vld [vmem:[#allocation11 + $0x478] sm:$0xff]
    %v2693 = vld [vmem:[#allocation11 + $0x480] sm:$0xff]
    %v2694 = vld [vmem:[#allocation11 + $0x488] sm:$0xff]
    %v2695 = vld [vmem:[#allocation11 + $0x490] sm:$0xff]
    %v2696 = vld [vmem:[#allocation11 + $0x498] sm:$0xff]
    %v2697 = vld [vmem:[#allocation11 + $0x4a0] sm:$0xff]
    %v2698 = vld [vmem:[#allocation11 + $0x4a8] sm:$0xff]
    %v2699 = vld [vmem:[#allocation11 + $0x4b0] sm:$0xff]
    %v2700 = vld [vmem:[#allocation11 + $0x4b8] sm:$0xff]
    %v2701 = vld [vmem:[#allocation11 + $0x4c0] sm:$0xff]
    %v2702 = vld [vmem:[#allocation11 + $0x4c8] sm:$0xff]
    %v2703 = vld [vmem:[#allocation11 + $0x4d0] sm:$0xff]
    %v2704 = vld [vmem:[#allocation11 + $0x4d8] sm:$0xff]
    %v2705 = vld [vmem:[#allocation11 + $0x4e0] sm:$0xff]
    %v2706 = vld [vmem:[#allocation11 + $0x4e8] sm:$0xff]
    %v2707 = vld [vmem:[#allocation11 + $0x4f0] sm:$0xff]
    %v2708 = vld [vmem:[#allocation11 + $0x4f8] sm:$0xff]
    %v2709 = vld [vmem:[#allocation11 + $0x500] sm:$0xff]
    %v2710 = vld [vmem:[#allocation11 + $0x508] sm:$0xff]
    %v2711 = vld [vmem:[#allocation11 + $0x510] sm:$0xff]
    %v2712 = vld [vmem:[#allocation11 + $0x518] sm:$0xff]
    %v2713 = vld [vmem:[#allocation11 + $0x520] sm:$0xff]
    %v2714 = vld [vmem:[#allocation11 + $0x528] sm:$0xff]
    %v2715 = vld [vmem:[#allocation11 + $0x530] sm:$0xff]
    %v2716 = vld [vmem:[#allocation11 + $0x538] sm:$0xff]
    %v2717 = vld [vmem:[#allocation11 + $0x540] sm:$0xff]
    %v2718 = vld [vmem:[#allocation11 + $0x548] sm:$0xff]
    %v2719 = vld [vmem:[#allocation11 + $0x550] sm:$0xff]
    %v2720 = vld [vmem:[#allocation11 + $0x558] sm:$0xff]
    %v2721 = vld [vmem:[#allocation11 + $0x560] sm:$0xff]
    %v2722 = vld [vmem:[#allocation11 + $0x568] sm:$0xff]
    %v2723 = vld [vmem:[#allocation11 + $0x570] sm:$0xff]
    %v2724 = vld [vmem:[#allocation11 + $0x578] sm:$0xff]
    %v2725 = vld [vmem:[#allocation11 + $0x580] sm:$0xff]
    %v2726 = vld [vmem:[#allocation11 + $0x588] sm:$0xff]
    %v2727 = vld [vmem:[#allocation11 + $0x590] sm:$0xff]
    %v2728 = vld [vmem:[#allocation11 + $0x598] sm:$0xff]
    %v2729 = vld [vmem:[#allocation11 + $0x5a0] sm:$0xff]
    %v2730 = vld [vmem:[#allocation11 + $0x5a8] sm:$0xff]
    %v2731 = vld [vmem:[#allocation11 + $0x5b0] sm:$0xff]
    %v2732 = vld [vmem:[#allocation11 + $0x5b8] sm:$0xff]
    %v2733 = vld [vmem:[#allocation11 + $0x5c0] sm:$0xff]
    %v2734 = vld [vmem:[#allocation11 + $0x5c8] sm:$0xff]
    %v2735 = vld [vmem:[#allocation11 + $0x5d0] sm:$0xff]
    %v2736 = vld [vmem:[#allocation11 + $0x5d8] sm:$0xff]
    %v2737 = vld [vmem:[#allocation11 + $0x5e0] sm:$0xff]
    %v2738 = vld [vmem:[#allocation11 + $0x5e8] sm:$0xff]
    %v2739 = vld [vmem:[#allocation11 + $0x5f0] sm:$0xff]
    %v2740 = vld [vmem:[#allocation11 + $0x5f8] sm:$0xff]
    %v2741 = vld [vmem:[#allocation11 + $0x600] sm:$0xff]
    %v2742 = vld [vmem:[#allocation11 + $0x608] sm:$0xff]
    %v2743 = vld [vmem:[#allocation11 + $0x610] sm:$0xff]
    %v2744 = vld [vmem:[#allocation11 + $0x618] sm:$0xff]
    %v2745 = vld [vmem:[#allocation11 + $0x620] sm:$0xff]
    %v2746 = vld [vmem:[#allocation11 + $0x628] sm:$0xff]
    %v2747 = vld [vmem:[#allocation11 + $0x630] sm:$0xff]
    %v2748 = vld [vmem:[#allocation11 + $0x638] sm:$0xff]
    %v2749 = vld [vmem:[#allocation11 + $0x640] sm:$0xff]
    %v2750 = vld [vmem:[#allocation11 + $0x648] sm:$0xff]
    %v2751 = vld [vmem:[#allocation11 + $0x650] sm:$0xff]
    %v2752 = vld [vmem:[#allocation11 + $0x658] sm:$0xff]
    %v2753 = vld [vmem:[#allocation11 + $0x660] sm:$0xff]
    %v2754 = vld [vmem:[#allocation11 + $0x668] sm:$0xff]
    %v2755 = vld [vmem:[#allocation11 + $0x670] sm:$0xff]
    %v2756 = vld [vmem:[#allocation11 + $0x678] sm:$0xff]
    %v2757 = vld [vmem:[#allocation11 + $0x680] sm:$0xff]
    %v2758 = vld [vmem:[#allocation11 + $0x688] sm:$0xff]
    %v2759 = vld [vmem:[#allocation11 + $0x690] sm:$0xff]
    %v2760 = vld [vmem:[#allocation11 + $0x698] sm:$0xff]
    %v2761 = vld [vmem:[#allocation11 + $0x6a0] sm:$0xff]
    %v2762 = vld [vmem:[#allocation11 + $0x6a8] sm:$0xff]
    %v2763 = vld [vmem:[#allocation11 + $0x6b0] sm:$0xff]
    %v2764 = vld [vmem:[#allocation11 + $0x6b8] sm:$0xff]
    %v2765 = vld [vmem:[#allocation11 + $0x6c0] sm:$0xff]
    %v2766 = vld [vmem:[#allocation11 + $0x6c8] sm:$0xff]
    %v2767 = vld [vmem:[#allocation11 + $0x6d0] sm:$0xff]
    %v2768 = vld [vmem:[#allocation11 + $0x6d8] sm:$0xff]
    %v2769 = vld [vmem:[#allocation11 + $0x6e0] sm:$0xff]
    %v2770 = vld [vmem:[#allocation11 + $0x6e8] sm:$0xff]
    %v2771 = vld [vmem:[#allocation11 + $0x6f0] sm:$0xff]
    %v2772 = vld [vmem:[#allocation11 + $0x6f8] sm:$0xff]
    %v2773 = vld [vmem:[#allocation11 + $0x700] sm:$0xff]
    %v2774 = vld [vmem:[#allocation11 + $0x708] sm:$0xff]
    %v2775 = vld [vmem:[#allocation11 + $0x710] sm:$0xff]
    %v2776 = vld [vmem:[#allocation11 + $0x718] sm:$0xff]
    %v2777 = vld [vmem:[#allocation11 + $0x720] sm:$0xff]
    %v2778 = vld [vmem:[#allocation11 + $0x728] sm:$0xff]
    %v2779 = vld [vmem:[#allocation11 + $0x730] sm:$0xff]
    %v2780 = vld [vmem:[#allocation11 + $0x738] sm:$0xff]
    %v2781 = vld [vmem:[#allocation11 + $0x740] sm:$0xff]
    %v2782 = vld [vmem:[#allocation11 + $0x748] sm:$0xff]
    %v2783 = vld [vmem:[#allocation11 + $0x750] sm:$0xff]
    %v2784 = vld [vmem:[#allocation11 + $0x758] sm:$0xff]
    %v2785 = vld [vmem:[#allocation11 + $0x760] sm:$0xff]
    %v2786 = vld [vmem:[#allocation11 + $0x768] sm:$0xff]
    %v2787 = vld [vmem:[#allocation11 + $0x770] sm:$0xff]
    %v2788 = vld [vmem:[#allocation11 + $0x778] sm:$0xff]
    %v2789 = vld [vmem:[#allocation11 + $0x780] sm:$0xff]
    %v2790 = vld [vmem:[#allocation11 + $0x788] sm:$0xff]
    %v2791 = vld [vmem:[#allocation11 + $0x790] sm:$0xff]
    %v2792 = vld [vmem:[#allocation11 + $0x798] sm:$0xff]
    %v2793 = vld [vmem:[#allocation11 + $0x7a0] sm:$0xff]
    %v2794 = vld [vmem:[#allocation11 + $0x7a8] sm:$0xff]
    %v2795 = vld [vmem:[#allocation11 + $0x7b0] sm:$0xff]
    %v2796 = vld [vmem:[#allocation11 + $0x7b8] sm:$0xff]
    %v2797 = vld [vmem:[#allocation11 + $0x7c0] sm:$0xff]
    %v2798 = vld [vmem:[#allocation11 + $0x7c8] sm:$0xff]
    %v2799 = vld [vmem:[#allocation11 + $0x7d0] sm:$0xff]
    %v2800 = vld [vmem:[#allocation11 + $0x7d8] sm:$0xff]
    %v2801 = vld [vmem:[#allocation11 + $0x7e0] sm:$0xff]
    %v2802 = vld [vmem:[#allocation11 + $0x7e8] sm:$0xff]
    %v2803 = vld [vmem:[#allocation11 + $0x7f0] sm:$0xff]
    %v2804 = vld [vmem:[#allocation11 + $0x7f8] sm:$0xff]
    %v2805 = vld [vmem:[%s9] sm:$0xff]
    %v2807 = vlaneseq
    %v2808 = vshrl.u32 %v2807, 7
    %v2809 = vsub.s32 0, %v2808
    %v2810 = vrot.slane %v2805, %v2809
    %v2811 = vlaneseq
    %v2812 = vshrl.u32 %v2811, 7
    %v2813 = vsub.s32 1, %v2812
    %v2814 = vrot.slane %v2805, %v2813
    %v2815 = vlaneseq
    %v2816 = vshrl.u32 %v2815, 7
    %v2817 = vsub.s32 2, %v2816
    %v2818 = vrot.slane %v2805, %v2817
    %v2819 = vlaneseq
    %v2820 = vshrl.u32 %v2819, 7
    %v2821 = vsub.s32 3, %v2820
    %v2822 = vrot.slane %v2805, %v2821
    %v2823 = vlaneseq
    %v2824 = vshrl.u32 %v2823, 7
    %v2825 = vsub.s32 4, %v2824
    %v2826 = vrot.slane %v2805, %v2825
    %v2827 = vlaneseq
    %v2828 = vshrl.u32 %v2827, 7
    %v2829 = vsub.s32 5, %v2828
    %v2830 = vrot.slane %v2805, %v2829
    %v2831 = vlaneseq
    %v2832 = vshrl.u32 %v2831, 7
    %v2833 = vsub.s32 6, %v2832
    %v2834 = vrot.slane %v2805, %v2833
    %v2835 = vlaneseq
    %v2836 = vshrl.u32 %v2835, 7
    %v2837 = vsub.s32 7, %v2836
    %v2838 = vrot.slane %v2805, %v2837
    %v3103 = vunpack.c.l.b16 %v2549
    %v3104 = vunpack.c.h.b16 %v2549
    %v3105 = vunpack.c.l.b16 %v2550
    %v3106 = vunpack.c.h.b16 %v2550
    %v3107 = vunpack.c.l.b16 %v2551
    %v3108 = vunpack.c.h.b16 %v2551
    %v3109 = vunpack.c.l.b16 %v2552
    %v3110 = vunpack.c.h.b16 %v2552
    %v3111 = vunpack.c.l.b16 %v2553
    %v3112 = vunpack.c.h.b16 %v2553
    %v3113 = vunpack.c.l.b16 %v2554
    %v3114 = vunpack.c.h.b16 %v2554
    %v3115 = vunpack.c.l.b16 %v2555
    %v3116 = vunpack.c.h.b16 %v2555
    %v3117 = vunpack.c.l.b16 %v2556
    %v3118 = vunpack.c.h.b16 %v2556
    %v3119 = vunpack.c.l.b16 %v2557
    %v3120 = vunpack.c.h.b16 %v2557
    %v3121 = vunpack.c.l.b16 %v2558
    %v3122 = vunpack.c.h.b16 %v2558
    %v3123 = vunpack.c.l.b16 %v2559
    %v3124 = vunpack.c.h.b16 %v2559
    %v3125 = vunpack.c.l.b16 %v2560
    %v3126 = vunpack.c.h.b16 %v2560
    %v3127 = vunpack.c.l.b16 %v2561
    %v3128 = vunpack.c.h.b16 %v2561
    %v3129 = vunpack.c.l.b16 %v2562
    %v3130 = vunpack.c.h.b16 %v2562
    %v3131 = vunpack.c.l.b16 %v2563
    %v3132 = vunpack.c.h.b16 %v2563
    %v3133 = vunpack.c.l.b16 %v2564
    %v3134 = vunpack.c.h.b16 %v2564
    %v3135 = vunpack.c.l.b16 %v2565
    %v3136 = vunpack.c.h.b16 %v2565
    %v3137 = vunpack.c.l.b16 %v2566
    %v3138 = vunpack.c.h.b16 %v2566
    %v3139 = vunpack.c.l.b16 %v2567
    %v3140 = vunpack.c.h.b16 %v2567
    %v3141 = vunpack.c.l.b16 %v2568
    %v3142 = vunpack.c.h.b16 %v2568
    %v3143 = vunpack.c.l.b16 %v2569
    %v3144 = vunpack.c.h.b16 %v2569
    %v3145 = vunpack.c.l.b16 %v2570
    %v3146 = vunpack.c.h.b16 %v2570
    %v3147 = vunpack.c.l.b16 %v2571
    %v3148 = vunpack.c.h.b16 %v2571
    %v3149 = vunpack.c.l.b16 %v2572
    %v3150 = vunpack.c.h.b16 %v2572
    %v3151 = vunpack.c.l.b16 %v2573
    %v3152 = vunpack.c.h.b16 %v2573
    %v3153 = vunpack.c.l.b16 %v2574
    %v3154 = vunpack.c.h.b16 %v2574
    %v3155 = vunpack.c.l.b16 %v2575
    %v3156 = vunpack.c.h.b16 %v2575
    %v3157 = vunpack.c.l.b16 %v2576
    %v3158 = vunpack.c.h.b16 %v2576
    %v3159 = vunpack.c.l.b16 %v2577
    %v3160 = vunpack.c.h.b16 %v2577
    %v3161 = vunpack.c.l.b16 %v2578
    %v3162 = vunpack.c.h.b16 %v2578
    %v3163 = vunpack.c.l.b16 %v2579
    %v3164 = vunpack.c.h.b16 %v2579
    %v3165 = vunpack.c.l.b16 %v2580
    %v3166 = vunpack.c.h.b16 %v2580
    %v3167 = vunpack.c.l.b16 %v2581
    %v3168 = vunpack.c.h.b16 %v2581
    %v3169 = vunpack.c.l.b16 %v2582
    %v3170 = vunpack.c.h.b16 %v2582
    %v3171 = vunpack.c.l.b16 %v2583
    %v3172 = vunpack.c.h.b16 %v2583
    %v3173 = vunpack.c.l.b16 %v2584
    %v3174 = vunpack.c.h.b16 %v2584
    %v3175 = vunpack.c.l.b16 %v2585
    %v3176 = vunpack.c.h.b16 %v2585
    %v3177 = vunpack.c.l.b16 %v2586
    %v3178 = vunpack.c.h.b16 %v2586
    %v3179 = vunpack.c.l.b16 %v2587
    %v3180 = vunpack.c.h.b16 %v2587
    %v3181 = vunpack.c.l.b16 %v2588
    %v3182 = vunpack.c.h.b16 %v2588
    %v3183 = vunpack.c.l.b16 %v2589
    %v3184 = vunpack.c.h.b16 %v2589
    %v3185 = vunpack.c.l.b16 %v2590
    %v3186 = vunpack.c.h.b16 %v2590
    %v3187 = vunpack.c.l.b16 %v2591
    %v3188 = vunpack.c.h.b16 %v2591
    %v3189 = vunpack.c.l.b16 %v2592
    %v3190 = vunpack.c.h.b16 %v2592
    %v3191 = vunpack.c.l.b16 %v2593
    %v3192 = vunpack.c.h.b16 %v2593
    %v3193 = vunpack.c.l.b16 %v2594
    %v3194 = vunpack.c.h.b16 %v2594
    %v3195 = vunpack.c.l.b16 %v2595
    %v3196 = vunpack.c.h.b16 %v2595
    %v3197 = vunpack.c.l.b16 %v2596
    %v3198 = vunpack.c.h.b16 %v2596
    %v3199 = vunpack.c.l.b16 %v2597
    %v3200 = vunpack.c.h.b16 %v2597
    %v3201 = vunpack.c.l.b16 %v2598
    %v3202 = vunpack.c.h.b16 %v2598
    %v3203 = vunpack.c.l.b16 %v2599
    %v3204 = vunpack.c.h.b16 %v2599
    %v3205 = vunpack.c.l.b16 %v2600
    %v3206 = vunpack.c.h.b16 %v2600
    %v3207 = vunpack.c.l.b16 %v2601
    %v3208 = vunpack.c.h.b16 %v2601
    %v3209 = vunpack.c.l.b16 %v2602
    %v3210 = vunpack.c.h.b16 %v2602
    %v3211 = vunpack.c.l.b16 %v2603
    %v3212 = vunpack.c.h.b16 %v2603
    %v3213 = vunpack.c.l.b16 %v2604
    %v3214 = vunpack.c.h.b16 %v2604
    %v3215 = vunpack.c.l.b16 %v2605
    %v3216 = vunpack.c.h.b16 %v2605
    %v3217 = vunpack.c.l.b16 %v2606
    %v3218 = vunpack.c.h.b16 %v2606
    %v3219 = vunpack.c.l.b16 %v2607
    %v3220 = vunpack.c.h.b16 %v2607
    %v3221 = vunpack.c.l.b16 %v2608
    %v3222 = vunpack.c.h.b16 %v2608
    %v3223 = vunpack.c.l.b16 %v2609
    %v3224 = vunpack.c.h.b16 %v2609
    %v3225 = vunpack.c.l.b16 %v2610
    %v3226 = vunpack.c.h.b16 %v2610
    %v3227 = vunpack.c.l.b16 %v2611
    %v3228 = vunpack.c.h.b16 %v2611
    %v3229 = vunpack.c.l.b16 %v2612
    %v3230 = vunpack.c.h.b16 %v2612
    %v3231 = vunpack.c.l.b16 %v2613
    %v3232 = vunpack.c.h.b16 %v2613
    %v3233 = vunpack.c.l.b16 %v2614
    %v3234 = vunpack.c.h.b16 %v2614
    %v3235 = vunpack.c.l.b16 %v2615
    %v3236 = vunpack.c.h.b16 %v2615
    %v3237 = vunpack.c.l.b16 %v2616
    %v3238 = vunpack.c.h.b16 %v2616
    %v3239 = vunpack.c.l.b16 %v2617
    %v3240 = vunpack.c.h.b16 %v2617
    %v3241 = vunpack.c.l.b16 %v2618
    %v3242 = vunpack.c.h.b16 %v2618
    %v3243 = vunpack.c.l.b16 %v2619
    %v3244 = vunpack.c.h.b16 %v2619
    %v3245 = vunpack.c.l.b16 %v2620
    %v3246 = vunpack.c.h.b16 %v2620
    %v3247 = vunpack.c.l.b16 %v2621
    %v3248 = vunpack.c.h.b16 %v2621
    %v3249 = vunpack.c.l.b16 %v2622
    %v3250 = vunpack.c.h.b16 %v2622
    %v3251 = vunpack.c.l.b16 %v2623
    %v3252 = vunpack.c.h.b16 %v2623
    %v3253 = vunpack.c.l.b16 %v2624
    %v3254 = vunpack.c.h.b16 %v2624
    %v3255 = vunpack.c.l.b16 %v2625
    %v3256 = vunpack.c.h.b16 %v2625
    %v3257 = vunpack.c.l.b16 %v2626
    %v3258 = vunpack.c.h.b16 %v2626
    %v3259 = vunpack.c.l.b16 %v2627
    %v3260 = vunpack.c.h.b16 %v2627
    %v3261 = vunpack.c.l.b16 %v2628
    %v3262 = vunpack.c.h.b16 %v2628
    %v3263 = vunpack.c.l.b16 %v2629
    %v3264 = vunpack.c.h.b16 %v2629
    %v3265 = vunpack.c.l.b16 %v2630
    %v3266 = vunpack.c.h.b16 %v2630
    %v3267 = vunpack.c.l.b16 %v2631
    %v3268 = vunpack.c.h.b16 %v2631
    %v3269 = vunpack.c.l.b16 %v2632
    %v3270 = vunpack.c.h.b16 %v2632
    %v3271 = vunpack.c.l.b16 %v2633
    %v3272 = vunpack.c.h.b16 %v2633
    %v3273 = vunpack.c.l.b16 %v2634
    %v3274 = vunpack.c.h.b16 %v2634
    %v3275 = vunpack.c.l.b16 %v2635
    %v3276 = vunpack.c.h.b16 %v2635
    %v3277 = vunpack.c.l.b16 %v2636
    %v3278 = vunpack.c.h.b16 %v2636
    %v3279 = vunpack.c.l.b16 %v2637
    %v3280 = vunpack.c.h.b16 %v2637
    %v3281 = vunpack.c.l.b16 %v2638
    %v3282 = vunpack.c.h.b16 %v2638
    %v3283 = vunpack.c.l.b16 %v2639
    %v3284 = vunpack.c.h.b16 %v2639
    %v3285 = vunpack.c.l.b16 %v2640
    %v3286 = vunpack.c.h.b16 %v2640
    %v3287 = vunpack.c.l.b16 %v2641
    %v3288 = vunpack.c.h.b16 %v2641
    %v3289 = vunpack.c.l.b16 %v2642
    %v3290 = vunpack.c.h.b16 %v2642
    %v3291 = vunpack.c.l.b16 %v2643
    %v3292 = vunpack.c.h.b16 %v2643
    %v3293 = vunpack.c.l.b16 %v2644
    %v3294 = vunpack.c.h.b16 %v2644
    %v3295 = vunpack.c.l.b16 %v2645
    %v3296 = vunpack.c.h.b16 %v2645
    %v3297 = vunpack.c.l.b16 %v2646
    %v3298 = vunpack.c.h.b16 %v2646
    %v3299 = vunpack.c.l.b16 %v2647
    %v3300 = vunpack.c.h.b16 %v2647
    %v3301 = vunpack.c.l.b16 %v2648
    %v3302 = vunpack.c.h.b16 %v2648
    %v3303 = vunpack.c.l.b16 %v2649
    %v3304 = vunpack.c.h.b16 %v2649
    %v3305 = vunpack.c.l.b16 %v2650
    %v3306 = vunpack.c.h.b16 %v2650
    %v3307 = vunpack.c.l.b16 %v2651
    %v3308 = vunpack.c.h.b16 %v2651
    %v3309 = vunpack.c.l.b16 %v2652
    %v3310 = vunpack.c.h.b16 %v2652
    %v3311 = vunpack.c.l.b16 %v2653
    %v3312 = vunpack.c.h.b16 %v2653
    %v3313 = vunpack.c.l.b16 %v2654
    %v3314 = vunpack.c.h.b16 %v2654
    %v3315 = vunpack.c.l.b16 %v2655
    %v3316 = vunpack.c.h.b16 %v2655
    %v3317 = vunpack.c.l.b16 %v2656
    %v3318 = vunpack.c.h.b16 %v2656
    %v3319 = vunpack.c.l.b16 %v2657
    %v3320 = vunpack.c.h.b16 %v2657
    %v3321 = vunpack.c.l.b16 %v2658
    %v3322 = vunpack.c.h.b16 %v2658
    %v3323 = vunpack.c.l.b16 %v2659
    %v3324 = vunpack.c.h.b16 %v2659
    %v3325 = vunpack.c.l.b16 %v2660
    %v3326 = vunpack.c.h.b16 %v2660
    %v3327 = vunpack.c.l.b16 %v2661
    %v3328 = vunpack.c.h.b16 %v2661
    %v3329 = vunpack.c.l.b16 %v2662
    %v3330 = vunpack.c.h.b16 %v2662
    %v3331 = vunpack.c.l.b16 %v2663
    %v3332 = vunpack.c.h.b16 %v2663
    %v3333 = vunpack.c.l.b16 %v2664
    %v3334 = vunpack.c.h.b16 %v2664
    %v3335 = vunpack.c.l.b16 %v2665
    %v3336 = vunpack.c.h.b16 %v2665
    %v3337 = vunpack.c.l.b16 %v2666
    %v3338 = vunpack.c.h.b16 %v2666
    %v3339 = vunpack.c.l.b16 %v2667
    %v3340 = vunpack.c.h.b16 %v2667
    %v3341 = vunpack.c.l.b16 %v2668
    %v3342 = vunpack.c.h.b16 %v2668
    %v3343 = vunpack.c.l.b16 %v2669
    %v3344 = vunpack.c.h.b16 %v2669
    %v3345 = vunpack.c.l.b16 %v2670
    %v3346 = vunpack.c.h.b16 %v2670
    %v3347 = vunpack.c.l.b16 %v2671
    %v3348 = vunpack.c.h.b16 %v2671
    %v3349 = vunpack.c.l.b16 %v2672
    %v3350 = vunpack.c.h.b16 %v2672
    %v3351 = vunpack.c.l.b16 %v2673
    %v3352 = vunpack.c.h.b16 %v2673
    %v3353 = vunpack.c.l.b16 %v2674
    %v3354 = vunpack.c.h.b16 %v2674
    %v3355 = vunpack.c.l.b16 %v2675
    %v3356 = vunpack.c.h.b16 %v2675
    %v3357 = vunpack.c.l.b16 %v2676
    %v3358 = vunpack.c.h.b16 %v2676
    %v3359 = vunpack.c.l.b16 %v2677
    %v3360 = vunpack.c.h.b16 %v2677
    %v3361 = vunpack.c.l.b16 %v2678
    %v3362 = vunpack.c.h.b16 %v2678
    %v3363 = vunpack.c.l.b16 %v2679
    %v3364 = vunpack.c.h.b16 %v2679
    %v3365 = vunpack.c.l.b16 %v2680
    %v3366 = vunpack.c.h.b16 %v2680
    %v3367 = vunpack.c.l.b16 %v2681
    %v3368 = vunpack.c.h.b16 %v2681
    %v3369 = vunpack.c.l.b16 %v2682
    %v3370 = vunpack.c.h.b16 %v2682
    %v3371 = vunpack.c.l.b16 %v2683
    %v3372 = vunpack.c.h.b16 %v2683
    %v3373 = vunpack.c.l.b16 %v2684
    %v3374 = vunpack.c.h.b16 %v2684
    %v3375 = vunpack.c.l.b16 %v2685
    %v3376 = vunpack.c.h.b16 %v2685
    %v3377 = vunpack.c.l.b16 %v2686
    %v3378 = vunpack.c.h.b16 %v2686
    %v3379 = vunpack.c.l.b16 %v2687
    %v3380 = vunpack.c.h.b16 %v2687
    %v3381 = vunpack.c.l.b16 %v2688
    %v3382 = vunpack.c.h.b16 %v2688
    %v3383 = vunpack.c.l.b16 %v2689
    %v3384 = vunpack.c.h.b16 %v2689
    %v3385 = vunpack.c.l.b16 %v2690
    %v3386 = vunpack.c.h.b16 %v2690
    %v3387 = vunpack.c.l.b16 %v2691
    %v3388 = vunpack.c.h.b16 %v2691
    %v3389 = vunpack.c.l.b16 %v2692
    %v3390 = vunpack.c.h.b16 %v2692
    %v3391 = vunpack.c.l.b16 %v2693
    %v3392 = vunpack.c.h.b16 %v2693
    %v3393 = vunpack.c.l.b16 %v2694
    %v3394 = vunpack.c.h.b16 %v2694
    %v3395 = vunpack.c.l.b16 %v2695
    %v3396 = vunpack.c.h.b16 %v2695
    %v3397 = vunpack.c.l.b16 %v2696
    %v3398 = vunpack.c.h.b16 %v2696
    %v3399 = vunpack.c.l.b16 %v2697
    %v3400 = vunpack.c.h.b16 %v2697
    %v3401 = vunpack.c.l.b16 %v2698
    %v3402 = vunpack.c.h.b16 %v2698
    %v3403 = vunpack.c.l.b16 %v2699
    %v3404 = vunpack.c.h.b16 %v2699
    %v3405 = vunpack.c.l.b16 %v2700
    %v3406 = vunpack.c.h.b16 %v2700
    %v3407 = vunpack.c.l.b16 %v2701
    %v3408 = vunpack.c.h.b16 %v2701
    %v3409 = vunpack.c.l.b16 %v2702
    %v3410 = vunpack.c.h.b16 %v2702
    %v3411 = vunpack.c.l.b16 %v2703
    %v3412 = vunpack.c.h.b16 %v2703
    %v3413 = vunpack.c.l.b16 %v2704
    %v3414 = vunpack.c.h.b16 %v2704
    %v3415 = vunpack.c.l.b16 %v2705
    %v3416 = vunpack.c.h.b16 %v2705
    %v3417 = vunpack.c.l.b16 %v2706
    %v3418 = vunpack.c.h.b16 %v2706
    %v3419 = vunpack.c.l.b16 %v2707
    %v3420 = vunpack.c.h.b16 %v2707
    %v3421 = vunpack.c.l.b16 %v2708
    %v3422 = vunpack.c.h.b16 %v2708
    %v3423 = vunpack.c.l.b16 %v2709
    %v3424 = vunpack.c.h.b16 %v2709
    %v3425 = vunpack.c.l.b16 %v2710
    %v3426 = vunpack.c.h.b16 %v2710
    %v3427 = vunpack.c.l.b16 %v2711
    %v3428 = vunpack.c.h.b16 %v2711
    %v3429 = vunpack.c.l.b16 %v2712
    %v3430 = vunpack.c.h.b16 %v2712
    %v3431 = vunpack.c.l.b16 %v2713
    %v3432 = vunpack.c.h.b16 %v2713
    %v3433 = vunpack.c.l.b16 %v2714
    %v3434 = vunpack.c.h.b16 %v2714
    %v3435 = vunpack.c.l.b16 %v2715
    %v3436 = vunpack.c.h.b16 %v2715
    %v3437 = vunpack.c.l.b16 %v2716
    %v3438 = vunpack.c.h.b16 %v2716
    %v3439 = vunpack.c.l.b16 %v2717
    %v3440 = vunpack.c.h.b16 %v2717
    %v3441 = vunpack.c.l.b16 %v2718
    %v3442 = vunpack.c.h.b16 %v2718
    %v3443 = vunpack.c.l.b16 %v2719
    %v3444 = vunpack.c.h.b16 %v2719
    %v3445 = vunpack.c.l.b16 %v2720
    %v3446 = vunpack.c.h.b16 %v2720
    %v3447 = vunpack.c.l.b16 %v2721
    %v3448 = vunpack.c.h.b16 %v2721
    %v3449 = vunpack.c.l.b16 %v2722
    %v3450 = vunpack.c.h.b16 %v2722
    %v3451 = vunpack.c.l.b16 %v2723
    %v3452 = vunpack.c.h.b16 %v2723
    %v3453 = vunpack.c.l.b16 %v2724
    %v3454 = vunpack.c.h.b16 %v2724
    %v3455 = vunpack.c.l.b16 %v2725
    %v3456 = vunpack.c.h.b16 %v2725
    %v3457 = vunpack.c.l.b16 %v2726
    %v3458 = vunpack.c.h.b16 %v2726
    %v3459 = vunpack.c.l.b16 %v2727
    %v3460 = vunpack.c.h.b16 %v2727
    %v3461 = vunpack.c.l.b16 %v2728
    %v3462 = vunpack.c.h.b16 %v2728
    %v3463 = vunpack.c.l.b16 %v2729
    %v3464 = vunpack.c.h.b16 %v2729
    %v3465 = vunpack.c.l.b16 %v2730
    %v3466 = vunpack.c.h.b16 %v2730
    %v3467 = vunpack.c.l.b16 %v2731
    %v3468 = vunpack.c.h.b16 %v2731
    %v3469 = vunpack.c.l.b16 %v2732
    %v3470 = vunpack.c.h.b16 %v2732
    %v3471 = vunpack.c.l.b16 %v2733
    %v3472 = vunpack.c.h.b16 %v2733
    %v3473 = vunpack.c.l.b16 %v2734
    %v3474 = vunpack.c.h.b16 %v2734
    %v3475 = vunpack.c.l.b16 %v2735
    %v3476 = vunpack.c.h.b16 %v2735
    %v3477 = vunpack.c.l.b16 %v2736
    %v3478 = vunpack.c.h.b16 %v2736
    %v3479 = vunpack.c.l.b16 %v2737
    %v3480 = vunpack.c.h.b16 %v2737
    %v3481 = vunpack.c.l.b16 %v2738
    %v3482 = vunpack.c.h.b16 %v2738
    %v3483 = vunpack.c.l.b16 %v2739
    %v3484 = vunpack.c.h.b16 %v2739
    %v3485 = vunpack.c.l.b16 %v2740
    %v3486 = vunpack.c.h.b16 %v2740
    %v3487 = vunpack.c.l.b16 %v2741
    %v3488 = vunpack.c.h.b16 %v2741
    %v3489 = vunpack.c.l.b16 %v2742
    %v3490 = vunpack.c.h.b16 %v2742
    %v3491 = vunpack.c.l.b16 %v2743
    %v3492 = vunpack.c.h.b16 %v2743
    %v3493 = vunpack.c.l.b16 %v2744
    %v3494 = vunpack.c.h.b16 %v2744
    %v3495 = vunpack.c.l.b16 %v2745
    %v3496 = vunpack.c.h.b16 %v2745
    %v3497 = vunpack.c.l.b16 %v2746
    %v3498 = vunpack.c.h.b16 %v2746
    %v3499 = vunpack.c.l.b16 %v2747
    %v3500 = vunpack.c.h.b16 %v2747
    %v3501 = vunpack.c.l.b16 %v2748
    %v3502 = vunpack.c.h.b16 %v2748
    %v3503 = vunpack.c.l.b16 %v2749
    %v3504 = vunpack.c.h.b16 %v2749
    %v3505 = vunpack.c.l.b16 %v2750
    %v3506 = vunpack.c.h.b16 %v2750
    %v3507 = vunpack.c.l.b16 %v2751
    %v3508 = vunpack.c.h.b16 %v2751
    %v3509 = vunpack.c.l.b16 %v2752
    %v3510 = vunpack.c.h.b16 %v2752
    %v3511 = vunpack.c.l.b16 %v2753
    %v3512 = vunpack.c.h.b16 %v2753
    %v3513 = vunpack.c.l.b16 %v2754
    %v3514 = vunpack.c.h.b16 %v2754
    %v3515 = vunpack.c.l.b16 %v2755
    %v3516 = vunpack.c.h.b16 %v2755
    %v3517 = vunpack.c.l.b16 %v2756
    %v3518 = vunpack.c.h.b16 %v2756
    %v3519 = vunpack.c.l.b16 %v2757
    %v3520 = vunpack.c.h.b16 %v2757
    %v3521 = vunpack.c.l.b16 %v2758
    %v3522 = vunpack.c.h.b16 %v2758
    %v3523 = vunpack.c.l.b16 %v2759
    %v3524 = vunpack.c.h.b16 %v2759
    %v3525 = vunpack.c.l.b16 %v2760
    %v3526 = vunpack.c.h.b16 %v2760
    %v3527 = vunpack.c.l.b16 %v2761
    %v3528 = vunpack.c.h.b16 %v2761
    %v3529 = vunpack.c.l.b16 %v2762
    %v3530 = vunpack.c.h.b16 %v2762
    %v3531 = vunpack.c.l.b16 %v2763
    %v3532 = vunpack.c.h.b16 %v2763
    %v3533 = vunpack.c.l.b16 %v2764
    %v3534 = vunpack.c.h.b16 %v2764
    %v3535 = vunpack.c.l.b16 %v2765
    %v3536 = vunpack.c.h.b16 %v2765
    %v3537 = vunpack.c.l.b16 %v2766
    %v3538 = vunpack.c.h.b16 %v2766
    %v3539 = vunpack.c.l.b16 %v2767
    %v3540 = vunpack.c.h.b16 %v2767
    %v3541 = vunpack.c.l.b16 %v2768
    %v3542 = vunpack.c.h.b16 %v2768
    %v3543 = vunpack.c.l.b16 %v2769
    %v3544 = vunpack.c.h.b16 %v2769
    %v3545 = vunpack.c.l.b16 %v2770
    %v3546 = vunpack.c.h.b16 %v2770
    %v3547 = vunpack.c.l.b16 %v2771
    %v3548 = vunpack.c.h.b16 %v2771
    %v3549 = vunpack.c.l.b16 %v2772
    %v3550 = vunpack.c.h.b16 %v2772
    %v3551 = vunpack.c.l.b16 %v2773
    %v3552 = vunpack.c.h.b16 %v2773
    %v3553 = vunpack.c.l.b16 %v2774
    %v3554 = vunpack.c.h.b16 %v2774
    %v3555 = vunpack.c.l.b16 %v2775
    %v3556 = vunpack.c.h.b16 %v2775
    %v3557 = vunpack.c.l.b16 %v2776
    %v3558 = vunpack.c.h.b16 %v2776
    %v3559 = vunpack.c.l.b16 %v2777
    %v3560 = vunpack.c.h.b16 %v2777
    %v3561 = vunpack.c.l.b16 %v2778
    %v3562 = vunpack.c.h.b16 %v2778
    %v3563 = vunpack.c.l.b16 %v2779
    %v3564 = vunpack.c.h.b16 %v2779
    %v3565 = vunpack.c.l.b16 %v2780
    %v3566 = vunpack.c.h.b16 %v2780
    %v3567 = vunpack.c.l.b16 %v2781
    %v3568 = vunpack.c.h.b16 %v2781
    %v3569 = vunpack.c.l.b16 %v2782
    %v3570 = vunpack.c.h.b16 %v2782
    %v3571 = vunpack.c.l.b16 %v2783
    %v3572 = vunpack.c.h.b16 %v2783
    %v3573 = vunpack.c.l.b16 %v2784
    %v3574 = vunpack.c.h.b16 %v2784
    %v3575 = vunpack.c.l.b16 %v2785
    %v3576 = vunpack.c.h.b16 %v2785
    %v3577 = vunpack.c.l.b16 %v2786
    %v3578 = vunpack.c.h.b16 %v2786
    %v3579 = vunpack.c.l.b16 %v2787
    %v3580 = vunpack.c.h.b16 %v2787
    %v3581 = vunpack.c.l.b16 %v2788
    %v3582 = vunpack.c.h.b16 %v2788
    %v3583 = vunpack.c.l.b16 %v2789
    %v3584 = vunpack.c.h.b16 %v2789
    %v3585 = vunpack.c.l.b16 %v2790
    %v3586 = vunpack.c.h.b16 %v2790
    %v3587 = vunpack.c.l.b16 %v2791
    %v3588 = vunpack.c.h.b16 %v2791
    %v3589 = vunpack.c.l.b16 %v2792
    %v3590 = vunpack.c.h.b16 %v2792
    %v3591 = vunpack.c.l.b16 %v2793
    %v3592 = vunpack.c.h.b16 %v2793
    %v3593 = vunpack.c.l.b16 %v2794
    %v3594 = vunpack.c.h.b16 %v2794
    %v3595 = vunpack.c.l.b16 %v2795
    %v3596 = vunpack.c.h.b16 %v2795
    %v3597 = vunpack.c.l.b16 %v2796
    %v3598 = vunpack.c.h.b16 %v2796
    %v3599 = vunpack.c.l.b16 %v2797
    %v3600 = vunpack.c.h.b16 %v2797
    %v3601 = vunpack.c.l.b16 %v2798
    %v3602 = vunpack.c.h.b16 %v2798
    %v3603 = vunpack.c.l.b16 %v2799
    %v3604 = vunpack.c.h.b16 %v2799
    %v3605 = vunpack.c.l.b16 %v2800
    %v3606 = vunpack.c.h.b16 %v2800
    %v3607 = vunpack.c.l.b16 %v2801
    %v3608 = vunpack.c.h.b16 %v2801
    %v3609 = vunpack.c.l.b16 %v2802
    %v3610 = vunpack.c.h.b16 %v2802
    %v3611 = vunpack.c.l.b16 %v2803
    %v3612 = vunpack.c.h.b16 %v2803
    %v3613 = vunpack.c.l.b16 %v2804
    %v3614 = vunpack.c.h.b16 %v2804
    %v3615 = vpack.c.b16 %v3111, %v3103
    %v3616 = vpack.c.b16 %v3112, %v3104
    %v3617 = vpack.c.b16 %v3113, %v3105
    %v3618 = vpack.c.b16 %v3114, %v3106
    %v3619 = vpack.c.b16 %v3115, %v3107
    %v3620 = vpack.c.b16 %v3116, %v3108
    %v3621 = vpack.c.b16 %v3117, %v3109
    %v3622 = vpack.c.b16 %v3118, %v3110
    %v3623 = vpack.c.b16 %v3127, %v3119
    %v3624 = vpack.c.b16 %v3128, %v3120
    %v3625 = vpack.c.b16 %v3129, %v3121
    %v3626 = vpack.c.b16 %v3130, %v3122
    %v3627 = vpack.c.b16 %v3131, %v3123
    %v3628 = vpack.c.b16 %v3132, %v3124
    %v3629 = vpack.c.b16 %v3133, %v3125
    %v3630 = vpack.c.b16 %v3134, %v3126
    %v3631 = vpack.c.b16 %v3143, %v3135
    %v3632 = vpack.c.b16 %v3144, %v3136
    %v3633 = vpack.c.b16 %v3145, %v3137
    %v3634 = vpack.c.b16 %v3146, %v3138
    %v3635 = vpack.c.b16 %v3147, %v3139
    %v3636 = vpack.c.b16 %v3148, %v3140
    %v3637 = vpack.c.b16 %v3149, %v3141
    %v3638 = vpack.c.b16 %v3150, %v3142
    %v3639 = vpack.c.b16 %v3159, %v3151
    %v3640 = vpack.c.b16 %v3160, %v3152
    %v3641 = vpack.c.b16 %v3161, %v3153
    %v3642 = vpack.c.b16 %v3162, %v3154
    %v3643 = vpack.c.b16 %v3163, %v3155
    %v3644 = vpack.c.b16 %v3164, %v3156
    %v3645 = vpack.c.b16 %v3165, %v3157
    %v3646 = vpack.c.b16 %v3166, %v3158
    %v3647 = vpack.c.b16 %v3175, %v3167
    %v3648 = vpack.c.b16 %v3176, %v3168
    %v3649 = vpack.c.b16 %v3177, %v3169
    %v3650 = vpack.c.b16 %v3178, %v3170
    %v3651 = vpack.c.b16 %v3179, %v3171
    %v3652 = vpack.c.b16 %v3180, %v3172
    %v3653 = vpack.c.b16 %v3181, %v3173
    %v3654 = vpack.c.b16 %v3182, %v3174
    %v3655 = vpack.c.b16 %v3191, %v3183
    %v3656 = vpack.c.b16 %v3192, %v3184
    %v3657 = vpack.c.b16 %v3193, %v3185
    %v3658 = vpack.c.b16 %v3194, %v3186
    %v3659 = vpack.c.b16 %v3195, %v3187
    %v3660 = vpack.c.b16 %v3196, %v3188
    %v3661 = vpack.c.b16 %v3197, %v3189
    %v3662 = vpack.c.b16 %v3198, %v3190
    %v3663 = vpack.c.b16 %v3207, %v3199
    %v3664 = vpack.c.b16 %v3208, %v3200
    %v3665 = vpack.c.b16 %v3209, %v3201
    %v3666 = vpack.c.b16 %v3210, %v3202
    %v3667 = vpack.c.b16 %v3211, %v3203
    %v3668 = vpack.c.b16 %v3212, %v3204
    %v3669 = vpack.c.b16 %v3213, %v3205
    %v3670 = vpack.c.b16 %v3214, %v3206
    %v3671 = vpack.c.b16 %v3223, %v3215
    %v3672 = vpack.c.b16 %v3224, %v3216
    %v3673 = vpack.c.b16 %v3225, %v3217
    %v3674 = vpack.c.b16 %v3226, %v3218
    %v3675 = vpack.c.b16 %v3227, %v3219
    %v3676 = vpack.c.b16 %v3228, %v3220
    %v3677 = vpack.c.b16 %v3229, %v3221
    %v3678 = vpack.c.b16 %v3230, %v3222
    %v3679 = vpack.c.b16 %v3239, %v3231
    %v3680 = vpack.c.b16 %v3240, %v3232
    %v3681 = vpack.c.b16 %v3241, %v3233
    %v3682 = vpack.c.b16 %v3242, %v3234
    %v3683 = vpack.c.b16 %v3243, %v3235
    %v3684 = vpack.c.b16 %v3244, %v3236
    %v3685 = vpack.c.b16 %v3245, %v3237
    %v3686 = vpack.c.b16 %v3246, %v3238
    %v3687 = vpack.c.b16 %v3255, %v3247
    %v3688 = vpack.c.b16 %v3256, %v3248
    %v3689 = vpack.c.b16 %v3257, %v3249
    %v3690 = vpack.c.b16 %v3258, %v3250
    %v3691 = vpack.c.b16 %v3259, %v3251
    %v3692 = vpack.c.b16 %v3260, %v3252
    %v3693 = vpack.c.b16 %v3261, %v3253
    %v3694 = vpack.c.b16 %v3262, %v3254
    %v3695 = vpack.c.b16 %v3271, %v3263
    %v3696 = vpack.c.b16 %v3272, %v3264
    %v3697 = vpack.c.b16 %v3273, %v3265
    %v3698 = vpack.c.b16 %v3274, %v3266
    %v3699 = vpack.c.b16 %v3275, %v3267
    %v3700 = vpack.c.b16 %v3276, %v3268
    %v3701 = vpack.c.b16 %v3277, %v3269
    %v3702 = vpack.c.b16 %v3278, %v3270
    %v3703 = vpack.c.b16 %v3287, %v3279
    %v3704 = vpack.c.b16 %v3288, %v3280
    %v3705 = vpack.c.b16 %v3289, %v3281
    %v3706 = vpack.c.b16 %v3290, %v3282
    %v3707 = vpack.c.b16 %v3291, %v3283
    %v3708 = vpack.c.b16 %v3292, %v3284
    %v3709 = vpack.c.b16 %v3293, %v3285
    %v3710 = vpack.c.b16 %v3294, %v3286
    %v3711 = vpack.c.b16 %v3303, %v3295
    %v3712 = vpack.c.b16 %v3304, %v3296
    %v3713 = vpack.c.b16 %v3305, %v3297
    %v3714 = vpack.c.b16 %v3306, %v3298
    %v3715 = vpack.c.b16 %v3307, %v3299
    %v3716 = vpack.c.b16 %v3308, %v3300
    %v3717 = vpack.c.b16 %v3309, %v3301
    %v3718 = vpack.c.b16 %v3310, %v3302
    %v3719 = vpack.c.b16 %v3319, %v3311
    %v3720 = vpack.c.b16 %v3320, %v3312
    %v3721 = vpack.c.b16 %v3321, %v3313
    %v3722 = vpack.c.b16 %v3322, %v3314
    %v3723 = vpack.c.b16 %v3323, %v3315
    %v3724 = vpack.c.b16 %v3324, %v3316
    %v3725 = vpack.c.b16 %v3325, %v3317
    %v3726 = vpack.c.b16 %v3326, %v3318
    %v3727 = vpack.c.b16 %v3335, %v3327
    %v3728 = vpack.c.b16 %v3336, %v3328
    %v3729 = vpack.c.b16 %v3337, %v3329
    %v3730 = vpack.c.b16 %v3338, %v3330
    %v3731 = vpack.c.b16 %v3339, %v3331
    %v3732 = vpack.c.b16 %v3340, %v3332
    %v3733 = vpack.c.b16 %v3341, %v3333
    %v3734 = vpack.c.b16 %v3342, %v3334
    %v3735 = vpack.c.b16 %v3351, %v3343
    %v3736 = vpack.c.b16 %v3352, %v3344
    %v3737 = vpack.c.b16 %v3353, %v3345
    %v3738 = vpack.c.b16 %v3354, %v3346
    %v3739 = vpack.c.b16 %v3355, %v3347
    %v3740 = vpack.c.b16 %v3356, %v3348
    %v3741 = vpack.c.b16 %v3357, %v3349
    %v3742 = vpack.c.b16 %v3358, %v3350
    %v3743 = vpack.c.b16 %v3367, %v3359
    %v3744 = vpack.c.b16 %v3368, %v3360
    %v3745 = vpack.c.b16 %v3369, %v3361
    %v3746 = vpack.c.b16 %v3370, %v3362
    %v3747 = vpack.c.b16 %v3371, %v3363
    %v3748 = vpack.c.b16 %v3372, %v3364
    %v3749 = vpack.c.b16 %v3373, %v3365
    %v3750 = vpack.c.b16 %v3374, %v3366
    %v3751 = vpack.c.b16 %v3383, %v3375
    %v3752 = vpack.c.b16 %v3384, %v3376
    %v3753 = vpack.c.b16 %v3385, %v3377
    %v3754 = vpack.c.b16 %v3386, %v3378
    %v3755 = vpack.c.b16 %v3387, %v3379
    %v3756 = vpack.c.b16 %v3388, %v3380
    %v3757 = vpack.c.b16 %v3389, %v3381
    %v3758 = vpack.c.b16 %v3390, %v3382
    %v3759 = vpack.c.b16 %v3399, %v3391
    %v3760 = vpack.c.b16 %v3400, %v3392
    %v3761 = vpack.c.b16 %v3401, %v3393
    %v3762 = vpack.c.b16 %v3402, %v3394
    %v3763 = vpack.c.b16 %v3403, %v3395
    %v3764 = vpack.c.b16 %v3404, %v3396
    %v3765 = vpack.c.b16 %v3405, %v3397
    %v3766 = vpack.c.b16 %v3406, %v3398
    %v3767 = vpack.c.b16 %v3415, %v3407
    %v3768 = vpack.c.b16 %v3416, %v3408
    %v3769 = vpack.c.b16 %v3417, %v3409
    %v3770 = vpack.c.b16 %v3418, %v3410
    %v3771 = vpack.c.b16 %v3419, %v3411
    %v3772 = vpack.c.b16 %v3420, %v3412
    %v3773 = vpack.c.b16 %v3421, %v3413
    %v3774 = vpack.c.b16 %v3422, %v3414
    %v3775 = vpack.c.b16 %v3431, %v3423
    %v3776 = vpack.c.b16 %v3432, %v3424
    %v3777 = vpack.c.b16 %v3433, %v3425
    %v3778 = vpack.c.b16 %v3434, %v3426
    %v3779 = vpack.c.b16 %v3435, %v3427
    %v3780 = vpack.c.b16 %v3436, %v3428
    %v3781 = vpack.c.b16 %v3437, %v3429
    %v3782 = vpack.c.b16 %v3438, %v3430
    %v3783 = vpack.c.b16 %v3447, %v3439
    %v3784 = vpack.c.b16 %v3448, %v3440
    %v3785 = vpack.c.b16 %v3449, %v3441
    %v3786 = vpack.c.b16 %v3450, %v3442
    %v3787 = vpack.c.b16 %v3451, %v3443
    %v3788 = vpack.c.b16 %v3452, %v3444
    %v3789 = vpack.c.b16 %v3453, %v3445
    %v3790 = vpack.c.b16 %v3454, %v3446
    %v3791 = vpack.c.b16 %v3463, %v3455
    %v3792 = vpack.c.b16 %v3464, %v3456
    %v3793 = vpack.c.b16 %v3465, %v3457
    %v3794 = vpack.c.b16 %v3466, %v3458
    %v3795 = vpack.c.b16 %v3467, %v3459
    %v3796 = vpack.c.b16 %v3468, %v3460
    %v3797 = vpack.c.b16 %v3469, %v3461
    %v3798 = vpack.c.b16 %v3470, %v3462
    %v3799 = vpack.c.b16 %v3479, %v3471
    %v3800 = vpack.c.b16 %v3480, %v3472
    %v3801 = vpack.c.b16 %v3481, %v3473
    %v3802 = vpack.c.b16 %v3482, %v3474
    %v3803 = vpack.c.b16 %v3483, %v3475
    %v3804 = vpack.c.b16 %v3484, %v3476
    %v3805 = vpack.c.b16 %v3485, %v3477
    %v3806 = vpack.c.b16 %v3486, %v3478
    %v3807 = vpack.c.b16 %v3495, %v3487
    %v3808 = vpack.c.b16 %v3496, %v3488
    %v3809 = vpack.c.b16 %v3497, %v3489
    %v3810 = vpack.c.b16 %v3498, %v3490
    %v3811 = vpack.c.b16 %v3499, %v3491
    %v3812 = vpack.c.b16 %v3500, %v3492
    %v3813 = vpack.c.b16 %v3501, %v3493
    %v3814 = vpack.c.b16 %v3502, %v3494
    %v3815 = vpack.c.b16 %v3511, %v3503
    %v3816 = vpack.c.b16 %v3512, %v3504
    %v3817 = vpack.c.b16 %v3513, %v3505
    %v3818 = vpack.c.b16 %v3514, %v3506
    %v3819 = vpack.c.b16 %v3515, %v3507
    %v3820 = vpack.c.b16 %v3516, %v3508
    %v3821 = vpack.c.b16 %v3517, %v3509
    %v3822 = vpack.c.b16 %v3518, %v3510
    %v3823 = vpack.c.b16 %v3527, %v3519
    %v3824 = vpack.c.b16 %v3528, %v3520
    %v3825 = vpack.c.b16 %v3529, %v3521
    %v3826 = vpack.c.b16 %v3530, %v3522
    %v3827 = vpack.c.b16 %v3531, %v3523
    %v3828 = vpack.c.b16 %v3532, %v3524
    %v3829 = vpack.c.b16 %v3533, %v3525
    %v3830 = vpack.c.b16 %v3534, %v3526
    %v3831 = vpack.c.b16 %v3543, %v3535
    %v3832 = vpack.c.b16 %v3544, %v3536
    %v3833 = vpack.c.b16 %v3545, %v3537
    %v3834 = vpack.c.b16 %v3546, %v3538
    %v3835 = vpack.c.b16 %v3547, %v3539
    %v3836 = vpack.c.b16 %v3548, %v3540
    %v3837 = vpack.c.b16 %v3549, %v3541
    %v3838 = vpack.c.b16 %v3550, %v3542
    %v3839 = vpack.c.b16 %v3559, %v3551
    %v3840 = vpack.c.b16 %v3560, %v3552
    %v3841 = vpack.c.b16 %v3561, %v3553
    %v3842 = vpack.c.b16 %v3562, %v3554
    %v3843 = vpack.c.b16 %v3563, %v3555
    %v3844 = vpack.c.b16 %v3564, %v3556
    %v3845 = vpack.c.b16 %v3565, %v3557
    %v3846 = vpack.c.b16 %v3566, %v3558
    %v3847 = vpack.c.b16 %v3575, %v3567
    %v3848 = vpack.c.b16 %v3576, %v3568
    %v3849 = vpack.c.b16 %v3577, %v3569
    %v3850 = vpack.c.b16 %v3578, %v3570
    %v3851 = vpack.c.b16 %v3579, %v3571
    %v3852 = vpack.c.b16 %v3580, %v3572
    %v3853 = vpack.c.b16 %v3581, %v3573
    %v3854 = vpack.c.b16 %v3582, %v3574
    %v3855 = vpack.c.b16 %v3591, %v3583
    %v3856 = vpack.c.b16 %v3592, %v3584
    %v3857 = vpack.c.b16 %v3593, %v3585
    %v3858 = vpack.c.b16 %v3594, %v3586
    %v3859 = vpack.c.b16 %v3595, %v3587
    %v3860 = vpack.c.b16 %v3596, %v3588
    %v3861 = vpack.c.b16 %v3597, %v3589
    %v3862 = vpack.c.b16 %v3598, %v3590
    %v3863 = vpack.c.b16 %v3607, %v3599
    %v3864 = vpack.c.b16 %v3608, %v3600
    %v3865 = vpack.c.b16 %v3609, %v3601
    %v3866 = vpack.c.b16 %v3610, %v3602
    %v3867 = vpack.c.b16 %v3611, %v3603
    %v3868 = vpack.c.b16 %v3612, %v3604
    %v3869 = vpack.c.b16 %v3613, %v3605
    %v3870 = vpack.c.b16 %v3614, %v3606
    %4127 = vmatprep.subr.bf16.mxu0 %v3616
    %4128 = vmatpush1.bf16.msra.mxu0 %v3615
    %4129 = vmatprep.subr.bf16.mxu0 %v3624
    %4130 = vmatpush1.bf16.msra.mxu0 %v3623
    %4131 = vmatprep.subr.bf16.mxu0 %v3632
    %4132 = vmatpush1.bf16.msra.mxu0 %v3631
    %4133 = vmatprep.subr.bf16.mxu0 %v3640
    %4134 = vmatpush1.bf16.msra.mxu0 %v3639
    %4135 = vmatprep.subr.bf16.mxu0 %v3648
    %4136 = vmatpush1.bf16.msra.mxu0 %v3647
    %4137 = vmatprep.subr.bf16.mxu0 %v3656
    %4138 = vmatpush1.bf16.msra.mxu0 %v3655
    %4139 = vmatprep.subr.bf16.mxu0 %v3664
    %4140 = vmatpush1.bf16.msra.mxu0 %v3663
    %4141 = vmatprep.subr.bf16.mxu0 %v3672
    %4142 = vmatpush1.bf16.msra.mxu0 %v3671
    %4143 = vmatprep.subr.bf16.mxu0 %v3680
    %4144 = vmatpush1.bf16.msra.mxu0 %v3679
    %4145 = vmatprep.subr.bf16.mxu0 %v3688
    %4146 = vmatpush1.bf16.msra.mxu0 %v3687
    %4147 = vmatprep.subr.bf16.mxu0 %v3696
    %4148 = vmatpush1.bf16.msra.mxu0 %v3695
    %4149 = vmatprep.subr.bf16.mxu0 %v3704
    %4150 = vmatpush1.bf16.msra.mxu0 %v3703
    %4151 = vmatprep.subr.bf16.mxu0 %v3712
    %4152 = vmatpush1.bf16.msra.mxu0 %v3711
    %4153 = vmatprep.subr.bf16.mxu0 %v3720
    %4154 = vmatpush1.bf16.msra.mxu0 %v3719
    %4155 = vmatprep.subr.bf16.mxu0 %v3728
    %4156 = vmatpush1.bf16.msra.mxu0 %v3727
    %4157 = vmatprep.subr.bf16.mxu0 %v3736
    %4158 = vmatpush1.bf16.msra.mxu0 %v3735
    %4159 = vmatprep.mubr.bf16.mxu0 %v2546
    %4160 = vmatmul.mubr.bf16.gmra.mrb[0].mxu0 %v2545
    %v4161 = vpop.f32.mrb[0].mxu0
    %v4162 = vadd.f32 %v2810, %v4161
    %v4163 = vpop.f32.mrb[0].mxu0
    %v4164 = vadd.f32 %v2814, %v4163
    %v4165 = vpop.f32.mrb[0].mxu0
    %v4166 = vpop.f32.mrb[0].mxu0
    %4167 = vdwg.mxu0
    %4168 = vmatprep.subr.bf16.mxu0 %v3744
    %4169 = vmatpush1.bf16.msra.mxu0 %v3743
    %4170 = vmatprep.subr.bf16.mxu0 %v3752
    %4171 = vmatpush1.bf16.msra.mxu0 %v3751
    %4172 = vmatprep.subr.bf16.mxu0 %v3760
    %4173 = vmatpush1.bf16.msra.mxu0 %v3759
    %4174 = vmatprep.subr.bf16.mxu0 %v3768
    %4175 = vmatpush1.bf16.msra.mxu0 %v3767
    %4176 = vmatprep.subr.bf16.mxu0 %v3776
    %4177 = vmatpush1.bf16.msra.mxu0 %v3775
    %4178 = vmatprep.subr.bf16.mxu0 %v3784
    %4179 = vmatpush1.bf16.msra.mxu0 %v3783
    %4180 = vmatprep.subr.bf16.mxu0 %v3792
    %4181 = vmatpush1.bf16.msra.mxu0 %v3791
    %4182 = vmatprep.subr.bf16.mxu0 %v3800
    %4183 = vmatpush1.bf16.msra.mxu0 %v3799
    %4184 = vmatprep.subr.bf16.mxu0 %v3808
    %4185 = vmatpush1.bf16.msra.mxu0 %v3807
    %4186 = vmatprep.subr.bf16.mxu0 %v3816
    %4187 = vmatpush1.bf16.msra.mxu0 %v3815
    %4188 = vmatprep.subr.bf16.mxu0 %v3824
    %4189 = vmatpush1.bf16.msra.mxu0 %v3823
    %4190 = vmatprep.subr.bf16.mxu0 %v3832
    %4191 = vmatpush1.bf16.msra.mxu0 %v3831
    %4192 = vmatprep.subr.bf16.mxu0 %v3840
    %4193 = vmatpush1.bf16.msra.mxu0 %v3839
    %4194 = vmatprep.subr.bf16.mxu0 %v3848
    %4195 = vmatpush1.bf16.msra.mxu0 %v3847
    %4196 = vmatprep.subr.bf16.mxu0 %v3856
    %4197 = vmatpush1.bf16.msra.mxu0 %v3855
    %4198 = vmatprep.subr.bf16.mxu0 %v3864
    %4199 = vmatpush1.bf16.msra.mxu0 %v3863
    %4200 = vmatprep.mubr.bf16.mxu0 %v2548
    %4201 = vmatmul.mubr.bf16.gmra.mrb[0].mxu0 %v2547
    %v4202 = vpop.f32.mrb[0].mxu0
    %v4203 = vadd.f32 %v4162, %v4202
    %v4204 = vpop.f32.mrb[0].mxu0
    %v4205 = vadd.f32 %v4164, %v4204
    %v4206 = vpop.f32.mrb[0].mxu0
    %v4207 = vpop.f32.mrb[0].mxu0
    %4208 = vdwg.mxu0
    %4209 = vmatprep.subr.bf16.mxu0 %v3618
    %4210 = vmatpush1.bf16.msra.mxu0 %v3617
    %4211 = vmatprep.subr.bf16.mxu0 %v3626
    %4212 = vmatpush1.bf16.msra.mxu0 %v3625
    %4213 = vmatprep.subr.bf16.mxu0 %v3634
    %4214 = vmatpush1.bf16.msra.mxu0 %v3633
    %4215 = vmatprep.subr.bf16.mxu0 %v3642
    %4216 = vmatpush1.bf16.msra.mxu0 %v3641
    %4217 = vmatprep.subr.bf16.mxu0 %v3650
    %4218 = vmatpush1.bf16.msra.mxu0 %v3649
    %4219 = vmatprep.subr.bf16.mxu0 %v3658
    %4220 = vmatpush1.bf16.msra.mxu0 %v3657
    %4221 = vmatprep.subr.bf16.mxu0 %v3666
    %4222 = vmatpush1.bf16.msra.mxu0 %v3665
    %4223 = vmatprep.subr.bf16.mxu0 %v3674
    %4224 = vmatpush1.bf16.msra.mxu0 %v3673
    %4225 = vmatprep.subr.bf16.mxu0 %v3682
    %4226 = vmatpush1.bf16.msra.mxu0 %v3681
    %4227 = vmatprep.subr.bf16.mxu0 %v3690
    %4228 = vmatpush1.bf16.msra.mxu0 %v3689
    %4229 = vmatprep.subr.bf16.mxu0 %v3698
    %4230 = vmatpush1.bf16.msra.mxu0 %v3697
    %4231 = vmatprep.subr.bf16.mxu0 %v3706
    %4232 = vmatpush1.bf16.msra.mxu0 %v3705
    %4233 = vmatprep.subr.bf16.mxu0 %v3714
    %4234 = vmatpush1.bf16.msra.mxu0 %v3713
    %4235 = vmatprep.subr.bf16.mxu0 %v3722
    %4236 = vmatpush1.bf16.msra.mxu0 %v3721
    %4237 = vmatprep.subr.bf16.mxu0 %v3730
    %4238 = vmatpush1.bf16.msra.mxu0 %v3729
    %4239 = vmatprep.subr.bf16.mxu0 %v3738
    %4240 = vmatpush1.bf16.msra.mxu0 %v3737
    %4241 = vmatprep.mubr.bf16.mxu0 %v2546
    %4242 = vmatmul.mubr.bf16.gmra.mrb[0].mxu0 %v2545
    %v4243 = vpop.f32.mrb[0].mxu0
    %v4244 = vadd.f32 %v2818, %v4243
    %v4245 = vpop.f32.mrb[0].mxu0
    %v4246 = vadd.f32 %v2822, %v4245
    %v4247 = vpop.f32.mrb[0].mxu0
    %v4248 = vpop.f32.mrb[0].mxu0
    %4249 = vdwg.mxu0
    %4250 = vmatprep.subr.bf16.mxu0 %v3746
    %4251 = vmatpush1.bf16.msra.mxu0 %v3745
    %4252 = vmatprep.subr.bf16.mxu0 %v3754
    %4253 = vmatpush1.bf16.msra.mxu0 %v3753
    %4254 = vmatprep.subr.bf16.mxu0 %v3762
    %4255 = vmatpush1.bf16.msra.mxu0 %v3761
    %4256 = vmatprep.subr.bf16.mxu0 %v3770
    %4257 = vmatpush1.bf16.msra.mxu0 %v3769
    %4258 = vmatprep.subr.bf16.mxu0 %v3778
    %4259 = vmatpush1.bf16.msra.mxu0 %v3777
    %4260 = vmatprep.subr.bf16.mxu0 %v3786
    %4261 = vmatpush1.bf16.msra.mxu0 %v3785
    %4262 = vmatprep.subr.bf16.mxu0 %v3794
    %4263 = vmatpush1.bf16.msra.mxu0 %v3793
    %4264 = vmatprep.subr.bf16.mxu0 %v3802
    %4265 = vmatpush1.bf16.msra.mxu0 %v3801
    %4266 = vmatprep.subr.bf16.mxu0 %v3810
    %4267 = vmatpush1.bf16.msra.mxu0 %v3809
    %4268 = vmatprep.subr.bf16.mxu0 %v3818
    %4269 = vmatpush1.bf16.msra.mxu0 %v3817
    %4270 = vmatprep.subr.bf16.mxu0 %v3826
    %4271 = vmatpush1.bf16.msra.mxu0 %v3825
    %4272 = vmatprep.subr.bf16.mxu0 %v3834
    %4273 = vmatpush1.bf16.msra.mxu0 %v3833
    %4274 = vmatprep.subr.bf16.mxu0 %v3842
    %4275 = vmatpush1.bf16.msra.mxu0 %v3841
    %4276 = vmatprep.subr.bf16.mxu0 %v3850
    %4277 = vmatpush1.bf16.msra.mxu0 %v3849
    %4278 = vmatprep.subr.bf16.mxu0 %v3858
    %4279 = vmatpush1.bf16.msra.mxu0 %v3857
    %4280 = vmatprep.subr.bf16.mxu0 %v3866
    %4281 = vmatpush1.bf16.msra.mxu0 %v3865
    %4282 = vmatprep.mubr.bf16.mxu0 %v2548
    %4283 = vmatmul.mubr.bf16.gmra.mrb[0].mxu0 %v2547
    %v4284 = vpop.f32.mrb[0].mxu0
    %v4285 = vadd.f32 %v4244, %v4284
    %v4286 = vpop.f32.mrb[0].mxu0
    %v4287 = vadd.f32 %v4246, %v4286
    %v4288 = vpop.f32.mrb[0].mxu0
    %v4289 = vpop.f32.mrb[0].mxu0
    %4290 = vdwg.mxu0
    %4291 = vmatprep.subr.bf16.mxu0 %v3620
    %4292 = vmatpush1.bf16.msra.mxu0 %v3619
    %4293 = vmatprep.subr.bf16.mxu0 %v3628
    %4294 = vmatpush1.bf16.msra.mxu0 %v3627
    %4295 = vmatprep.subr.bf16.mxu0 %v3636
    %4296 = vmatpush1.bf16.msra.mxu0 %v3635
    %4297 = vmatprep.subr.bf16.mxu0 %v3644
    %4298 = vmatpush1.bf16.msra.mxu0 %v3643
    %4299 = vmatprep.subr.bf16.mxu0 %v3652
    %4300 = vmatpush1.bf16.msra.mxu0 %v3651
    %4301 = vmatprep.subr.bf16.mxu0 %v3660
    %4302 = vmatpush1.bf16.msra.mxu0 %v3659
    %4303 = vmatprep.subr.bf16.mxu0 %v3668
    %4304 = vmatpush1.bf16.msra.mxu0 %v3667
    %4305 = vmatprep.subr.bf16.mxu0 %v3676
    %4306 = vmatpush1.bf16.msra.mxu0 %v3675
    %4307 = vmatprep.subr.bf16.mxu0 %v3684
    %4308 = vmatpush1.bf16.msra.mxu0 %v3683
    %4309 = vmatprep.subr.bf16.mxu0 %v3692
    %4310 = vmatpush1.bf16.msra.mxu0 %v3691
    %4311 = vmatprep.subr.bf16.mxu0 %v3700
    %4312 = vmatpush1.bf16.msra.mxu0 %v3699
    %4313 = vmatprep.subr.bf16.mxu0 %v3708
    %4314 = vmatpush1.bf16.msra.mxu0 %v3707
    %4315 = vmatprep.subr.bf16.mxu0 %v3716
    %4316 = vmatpush1.bf16.msra.mxu0 %v3715
    %4317 = vmatprep.subr.bf16.mxu0 %v3724
    %4318 = vmatpush1.bf16.msra.mxu0 %v3723
    %4319 = vmatprep.subr.bf16.mxu0 %v3732
    %4320 = vmatpush1.bf16.msra.mxu0 %v3731
    %4321 = vmatprep.subr.bf16.mxu0 %v3740
    %4322 = vmatpush1.bf16.msra.mxu0 %v3739
    %4323 = vmatprep.mubr.bf16.mxu0 %v2546
    %4324 = vmatmul.mubr.bf16.gmra.mrb[0].mxu0 %v2545
    %v4325 = vpop.f32.mrb[0].mxu0
    %v4326 = vadd.f32 %v2826, %v4325
    %v4327 = vpop.f32.mrb[0].mxu0
    %v4328 = vadd.f32 %v2830, %v4327
    %v4329 = vpop.f32.mrb[0].mxu0
    %v4330 = vpop.f32.mrb[0].mxu0
    %4331 = vdwg.mxu0
    %4332 = vmatprep.subr.bf16.mxu0 %v3748
    %4333 = vmatpush1.bf16.msra.mxu0 %v3747
    %4334 = vmatprep.subr.bf16.mxu0 %v3756
    %4335 = vmatpush1.bf16.msra.mxu0 %v3755
    %4336 = vmatprep.subr.bf16.mxu0 %v3764
    %4337 = vmatpush1.bf16.msra.mxu0 %v3763
    %4338 = vmatprep.subr.bf16.mxu0 %v3772
    %4339 = vmatpush1.bf16.msra.mxu0 %v3771
    %4340 = vmatprep.subr.bf16.mxu0 %v3780
    %4341 = vmatpush1.bf16.msra.mxu0 %v3779
    %4342 = vmatprep.subr.bf16.mxu0 %v3788
    %4343 = vmatpush1.bf16.msra.mxu0 %v3787
    %4344 = vmatprep.subr.bf16.mxu0 %v3796
    %4345 = vmatpush1.bf16.msra.mxu0 %v3795
    %4346 = vmatprep.subr.bf16.mxu0 %v3804
    %4347 = vmatpush1.bf16.msra.mxu0 %v3803
    %4348 = vmatprep.subr.bf16.mxu0 %v3812
    %4349 = vmatpush1.bf16.msra.mxu0 %v3811
    %4350 = vmatprep.subr.bf16.mxu0 %v3820
    %4351 = vmatpush1.bf16.msra.mxu0 %v3819
    %4352 = vmatprep.subr.bf16.mxu0 %v3828
    %4353 = vmatpush1.bf16.msra.mxu0 %v3827
    %4354 = vmatprep.subr.bf16.mxu0 %v3836
    %4355 = vmatpush1.bf16.msra.mxu0 %v3835
    %4356 = vmatprep.subr.bf16.mxu0 %v3844
    %4357 = vmatpush1.bf16.msra.mxu0 %v3843
    %4358 = vmatprep.subr.bf16.mxu0 %v3852
    %4359 = vmatpush1.bf16.msra.mxu0 %v3851
    %4360 = vmatprep.subr.bf16.mxu0 %v3860
    %4361 = vmatpush1.bf16.msra.mxu0 %v3859
    %4362 = vmatprep.subr.bf16.mxu0 %v3868
    %4363 = vmatpush1.bf16.msra.mxu0 %v3867
    %4364 = vmatprep.mubr.bf16.mxu0 %v2548
    %4365 = vmatmul.mubr.bf16.gmra.mrb[0].mxu0 %v2547
    %v4366 = vpop.f32.mrb[0].mxu0
    %v4367 = vadd.f32 %v4326, %v4366
    %v4368 = vpop.f32.mrb[0].mxu0
    %v4369 = vadd.f32 %v4328, %v4368
    %v4370 = vpop.f32.mrb[0].mxu0
    %v4371 = vpop.f32.mrb[0].mxu0
    %4372 = vdwg.mxu0
    %4373 = vmatprep.subr.bf16.mxu0 %v3622
    %4374 = vmatpush1.bf16.msra.mxu0 %v3621
    %4375 = vmatprep.subr.bf16.mxu0 %v3630
    %4376 = vmatpush1.bf16.msra.mxu0 %v3629
    %4377 = vmatprep.subr.bf16.mxu0 %v3638
    %4378 = vmatpush1.bf16.msra.mxu0 %v3637
    %4379 = vmatprep.subr.bf16.mxu0 %v3646
    %4380 = vmatpush1.bf16.msra.mxu0 %v3645
    %4381 = vmatprep.subr.bf16.mxu0 %v3654
    %4382 = vmatpush1.bf16.msra.mxu0 %v3653
    %4383 = vmatprep.subr.bf16.mxu0 %v3662
    %4384 = vmatpush1.bf16.msra.mxu0 %v3661
    %4385 = vmatprep.subr.bf16.mxu0 %v3670
    %4386 = vmatpush1.bf16.msra.mxu0 %v3669
    %4387 = vmatprep.subr.bf16.mxu0 %v3678
    %4388 = vmatpush1.bf16.msra.mxu0 %v3677
    %4389 = vmatprep.subr.bf16.mxu0 %v3686
    %4390 = vmatpush1.bf16.msra.mxu0 %v3685
    %4391 = vmatprep.subr.bf16.mxu0 %v3694
    %4392 = vmatpush1.bf16.msra.mxu0 %v3693
    %4393 = vmatprep.subr.bf16.mxu0 %v3702
    %4394 = vmatpush1.bf16.msra.mxu0 %v3701
    %4395 = vmatprep.subr.bf16.mxu0 %v3710
    %4396 = vmatpush1.bf16.msra.mxu0 %v3709
    %4397 = vmatprep.subr.bf16.mxu0 %v3718
    %4398 = vmatpush1.bf16.msra.mxu0 %v3717
    %4399 = vmatprep.subr.bf16.mxu0 %v3726
    %4400 = vmatpush1.bf16.msra.mxu0 %v3725
    %4401 = vmatprep.subr.bf16.mxu0 %v3734
    %4402 = vmatpush1.bf16.msra.mxu0 %v3733
    %4403 = vmatprep.subr.bf16.mxu0 %v3742
    %4404 = vmatpush1.bf16.msra.mxu0 %v3741
    %4405 = vmatprep.mubr.bf16.mxu0 %v2546
    %4406 = vmatmul.mubr.bf16.gmra.mrb[0].mxu0 %v2545
    %v4407 = vpop.f32.mrb[0].mxu0
    %v4408 = vadd.f32 %v2834, %v4407
    %v4409 = vpop.f32.mrb[0].mxu0
    %v4410 = vadd.f32 %v2838, %v4409
    %v4411 = vpop.f32.mrb[0].mxu0
    %v4412 = vpop.f32.mrb[0].mxu0
    %4413 = vdwg.mxu0
    %4414 = vmatprep.subr.bf16.mxu0 %v3750
    %4415 = vmatpush1.bf16.msra.mxu0 %v3749
    %4416 = vmatprep.subr.bf16.mxu0 %v3758
    %4417 = vmatpush1.bf16.msra.mxu0 %v3757
    %4418 = vmatprep.subr.bf16.mxu0 %v3766
    %4419 = vmatpush1.bf16.msra.mxu0 %v3765
    %4420 = vmatprep.subr.bf16.mxu0 %v3774
    %4421 = vmatpush1.bf16.msra.mxu0 %v3773
    %4422 = vmatprep.subr.bf16.mxu0 %v3782
    %4423 = vmatpush1.bf16.msra.mxu0 %v3781
    %4424 = vmatprep.subr.bf16.mxu0 %v3790
    %4425 = vmatpush1.bf16.msra.mxu0 %v3789
    %4426 = vmatprep.subr.bf16.mxu0 %v3798
    %4427 = vmatpush1.bf16.msra.mxu0 %v3797
    %4428 = vmatprep.subr.bf16.mxu0 %v3806
    %4429 = vmatpush1.bf16.msra.mxu0 %v3805
    %4430 = vmatprep.subr.bf16.mxu0 %v3814
    %4431 = vmatpush1.bf16.msra.mxu0 %v3813
    %4432 = vmatprep.subr.bf16.mxu0 %v3822
    %4433 = vmatpush1.bf16.msra.mxu0 %v3821
    %4434 = vmatprep.subr.bf16.mxu0 %v3830
    %4435 = vmatpush1.bf16.msra.mxu0 %v3829
    %4436 = vmatprep.subr.bf16.mxu0 %v3838
    %4437 = vmatpush1.bf16.msra.mxu0 %v3837
    %4438 = vmatprep.subr.bf16.mxu0 %v3846
    %4439 = vmatpush1.bf16.msra.mxu0 %v3845
    %4440 = vmatprep.subr.bf16.mxu0 %v3854
    %4441 = vmatpush1.bf16.msra.mxu0 %v3853
    %4442 = vmatprep.subr.bf16.mxu0 %v3862
    %4443 = vmatpush1.bf16.msra.mxu0 %v3861
    %4444 = vmatprep.subr.bf16.mxu0 %v3870
    %4445 = vmatpush1.bf16.msra.mxu0 %v3869
    %4446 = vmatprep.mubr.bf16.mxu0 %v2548
    %4447 = vmatmul.mubr.bf16.gmra.mrb[0].mxu0 %v2547
    %v4448 = vpop.f32.mrb[0].mxu0
    %v4449 = vadd.f32 %v4408, %v4448
    %v4450 = vpop.f32.mrb[0].mxu0
    %v4451 = vadd.f32 %v4410, %v4450
    %v4452 = vpop.f32.mrb[0].mxu0
    %v4453 = vpop.f32.mrb[0].mxu0
    %4454 = vdwg.mxu0
    %v4455 = vsub.f32 0.0, %v4203
    %v4456 = vsub.f32 0.0, %v4205
    %v4457 = vsub.f32 0.0, %v4285
    %v4458 = vsub.f32 0.0, %v4287
    %v4459 = vsub.f32 0.0, %v4367
    %v4460 = vsub.f32 0.0, %v4369
    %v4461 = vsub.f32 0.0, %v4449
    %v4462 = vsub.f32 0.0, %v4451
    %v4463 = vmul.f32 %v4455, 1.442695
    %v4464 = vpow.pop %v4463
    %v4465 = vmul.f32 %v4456, 1.442695
    %v4466 = vpow.pop %v4465
    %v4467 = vmul.f32 %v4457, 1.442695
    %v4468 = vpow.pop %v4467
    %v4469 = vmul.f32 %v4458, 1.442695
    %v4470 = vpow.pop %v4469
    %v4471 = vmul.f32 %v4459, 1.442695
    %v4472 = vpow.pop %v4471
    %v4473 = vmul.f32 %v4460, 1.442695
    %v4474 = vpow.pop %v4473
    %v4475 = vmul.f32 %v4461, 1.442695
    %v4476 = vpow.pop %v4475
    %v4477 = vmul.f32 %v4462, 1.442695
    %v4478 = vpow.pop %v4477
    %v4479 = vadd.f32 %v4464, 1.0
    %v4480 = vadd.f32 %v4466, 1.0
    %v4481 = vadd.f32 %v4468, 1.0
    %v4482 = vadd.f32 %v4470, 1.0
    %v4483 = vadd.f32 %v4472, 1.0
    %v4484 = vadd.f32 %v4474, 1.0
    %v4485 = vadd.f32 %v4476, 1.0
    %v4486 = vadd.f32 %v4478, 1.0
    %v4487 = vrcp.pop %v4479
    %v4488 = vrcp.pop %v4480
    %v4489 = vrcp.pop %v4481
    %v4490 = vrcp.pop %v4482
    %v4491 = vrcp.pop %v4483
    %v4492 = vrcp.pop %v4484
    %v4493 = vrcp.pop %v4485
    %v4494 = vrcp.pop %v4486
    %4495 = vst [vmem:[#allocation13] sm:$0xff] %v4487
    %4496 = vst [vmem:[#allocation13 + $0x8] sm:$0xff] %v4488
    %4497 = vst [vmem:[#allocation13 + $0x10] sm:$0xff] %v4489
    %4498 = vst [vmem:[#allocation13 + $0x18] sm:$0xff] %v4490
    %4499 = vst [vmem:[#allocation13 + $0x20] sm:$0xff] %v4491
    %4500 = vst [vmem:[#allocation13 + $0x28] sm:$0xff] %v4492
    %4501 = vst [vmem:[#allocation13 + $0x30] sm:$0xff] %v4493
    %4502 = vst [vmem:[#allocation13 + $0x38] sm:$0xff] %v4494
    // Predicated region
    $region66: #{tpu_custom_call.1} parent=1 // pred_check
      _
    $region67: #{tpu_custom_call.1} parent=1 // pred_check_branch
      %4504 = sbr.rel (0) target = $region69
    $region68: #{tpu_custom_call.1} parent=1 // pred_region
      %s4506 = ssub.s32 1024, 1024
      %4507 = vsyncadd [#allocation4], %s4506
      %s4509 = sshll.u32 [#allocation13], 4
      %s4510 = int_to_ptr.vmem [resolvable:$true] %s4509
      %4512 = dma.vmem_to_hbm [thread:$0]  %s4510, 1024, %s10, [#allocation4]
    $region69: #{tpu_custom_call.1} parent=1 // pred_fallthru
      _
    // Predicated region
    $region70: #{tpu_custom_call.1} parent=1 // pred_check
      _
    $region71: #{tpu_custom_call.1} parent=1 // pred_check_branch
      %4514 = sbr.rel (0) target = $region73
    $region72: #{tpu_custom_call.1} parent=1 // pred_region
      %s4516 = ssub.s32 256, 256
      %4517 = vsyncadd [#allocation15], %s4516
      %s4519 = sshll.u32 [#allocation14], 4
      %s4520 = int_to_ptr.vmem [resolvable:$true] %s4519
      %4522 = dma.vmem_to_hbm [thread:$0]  %s4520, 256, %s11, [#allocation15]
    $region73: #{tpu_custom_call.1} parent=1 // pred_fallthru
      _
    // Predicated region
    $region74: #{tpu_custom_call.1} parent=1 // pred_check
      _
    $region75: #{tpu_custom_call.1} parent=1 // pred_check_branch
      %4524 = sbr.rel (0) target = $region77
    $region76: #{tpu_custom_call.1} parent=1 // pred_region
      %4525 = dma.done [#allocation4], 1024
    $region77: #{tpu_custom_call.1} parent=1 // pred_fallthru
      _
    // Predicated region
    $region78: #{tpu_custom_call.1} parent=1 // pred_check
      _
    $region79: #{tpu_custom_call.1} parent=1 // pred_check_branch
      %4527 = sbr.rel (0) target = $region81
    $region80: #{tpu_custom_call.1} parent=1 // pred_region
      %4528 = dma.done [#allocation15], 256
    $region81: #{tpu_custom_call.1} parent=1 // pred_fallthru
      _
    %4529 = vsyncpa [#allocation3], 1
    %4530 = vsyncpa [#allocation6], 1
    %4531 = vsyncpa [#allocation9], 1
    %4532 = vsyncpa [#allocation12], 1
    %4533 = vsyncpa [#allocation4], 1
    %4534 = vsyncpa [#allocation15], 1

</llo_original>
